<compile_context>
chip_gen: v6e
topology: v6e:2x2x1
jax: 0.10.0
libtpu: 0.0.40
codegen_flags: <defaults>
</compile_context>

<pallas_src>
import jax
import jax.numpy as jnp
from jax.experimental import pallas as pl
from jax.experimental.pallas import tpu as pltpu

EPS = 1e-5
LANE = 128
# Set to jnp.bfloat16 to run MXU matmuls with bf16 operands (f32 accumulate).
# Default f32 keeps parity with the PyTorch reference forward.
MATMUL_DTYPE = jnp.float32


# ----------------------------- in-kernel math --------------------------------

def _mm(a, b):
    return jnp.dot(a.astype(MATMUL_DTYPE), b.astype(MATMUL_DTYPE),
                   preferred_element_type=jnp.float32)


def _bn_silu(x, gamma, beta):
    """Training-mode BatchNorm1d (one-pass batch stats, biased var) + SiLU."""
    inv_n = 1.0 / x.shape[0]
    s1 = jnp.sum(x, axis=0, keepdims=True)
    s2 = jnp.sum(x * x, axis=0, keepdims=True)
    mean = s1 * inv_n
    var = jnp.maximum(s2 * inv_n - mean * mean, 0.0)
    xn = (x - mean) * jax.lax.rsqrt(var + EPS)
    xn = xn * gamma + beta
    return xn * jax.nn.sigmoid(xn)  # SiLU


def _vector_quantize(z, emb, e2):
    """Nearest-neighbour codebook lookup. ||z||^2 dropped (argmin-invariant);
    ||e||^2 (e2, shape (1,K)) is precomputed outside the kernel."""
    n = z.shape[0]
    k = emb.shape[0]
    ze = jax.lax.dot_general(z.astype(MATMUL_DTYPE), emb.astype(MATMUL_DTYPE),
                             (((1,), (1,)), ((), ())),
                             preferred_element_type=jnp.float32)      # (n, K)
    dist = e2 - 2.0 * ze
    dmin = jnp.min(dist, axis=1, keepdims=True)
    iota = jax.lax.broadcasted_iota(jnp.int32, (n, k), 1)
    cand = jnp.where(dist == dmin, iota, k)          # first-occurrence tie-break
    idx = jnp.min(cand, axis=1, keepdims=True)
    onehot = (iota == idx).astype(MATMUL_DTYPE)
    return jnp.dot(onehot, emb.astype(MATMUL_DTYPE),
                   preferred_element_type=jnp.float32)                # (n, d)


# --------------------------- fused Pallas kernel ------------------------------

def _make_kernel(program):
    """program: trace-time op list; every mat/vec is a static (offset,size) into
    the packed blobs, so all slicing below is static (zero runtime cost)."""

    def kernel(domain_ref, mat_ref, vec_ref, out_ref):

        def mat(m):
            off, r, c = m
            return mat_ref[off:off + r, 0:c]

        def vec(m):
            row, c = m
            return vec_ref[row:row + 1, 0:c]

        x = domain_ref[...]
        for op in program:
            kind = op[0]
            if kind == "linear_b":                     # Linear with bias
                _, wm, bm = op
                x = _mm(x, mat(wm)) + vec(bm)
            elif kind == "resblock":
                _, g1m, be1m, w1m, g2m, be2m, has_sc, w2m, b2m = op
                h = _bn_silu(x, vec(g1m), vec(be1m))
                h = _mm(h, mat(w1m))                   # b1 dropped (BN next: exact)
                h = _bn_silu(h, vec(g2m), vec(be2m))
                if has_sc:
                    # x@Ws + h@W2 fused into one MXU pass
                    x = _mm(jnp.concatenate([h, x], axis=1), mat(w2m)) + vec(b2m)
                else:
                    x = x + _mm(h, mat(w2m)) + vec(b2m)
            elif kind == "head":                       # BN -> SiLU -> Linear
                _, gm, bem, wm, bm = op
                x = _mm(_bn_silu(x, vec(gm), vec(bem)), mat(wm)) + vec(bm)
            elif kind == "vq":
                _, em, e2m = op
                x = _vector_quantize(x, mat(em), vec(e2m))
            else:
                raise ValueError(f"unknown op {kind}")
        out_ref[...] = x

    return kernel


# ------------------------------ operand packing -------------------------------

def _round_up(x, m):
    return (x + m - 1) // m * m


class _Packer:
    def __init__(self):
        self._mats = []        # (array, padded_rows)
        self._mat_rows = 0
        self._vecs = []        # (1, C) arrays
        self._max_cols = 1

    def add_mat(self, w):
        r, c = w.shape
        off = self._mat_rows
        pr = _round_up(r, 8)
        self._mats.append((w, pr))
        self._mat_rows += pr
        self._max_cols = max(self._max_cols, c)
        return (off, r, c)

    def add_vec(self, v):
        v = jnp.reshape(v, (1, -1))
        row = len(self._vecs)
        self._vecs.append(v)
        self._max_cols = max(self._max_cols, v.shape[1])
        return (row, v.shape[1])

    def finalize(self):
        ncols = _round_up(self._max_cols, LANE)
        mats = []
        for w, pr in self._mats:
            r, c = w.shape
            buf = jnp.zeros((pr, ncols), jnp.float32)
            mats.append(buf.at[:r, :c].set(w.astype(jnp.float32)))
        mat_blob = (jnp.concatenate(mats, axis=0) if mats
                    else jnp.zeros((8, ncols), jnp.float32))
        vecs = []
        for v in self._vecs:
            buf = jnp.zeros((1, ncols), jnp.float32)
            vecs.append(buf.at[:, :v.shape[1]].set(v.astype(jnp.float32)))
        vec_blob = (jnp.concatenate(vecs, axis=0) if vecs
                    else jnp.zeros((1, ncols), jnp.float32))
        return mat_blob, vec_blob


def pack_vqvae_params(params):
    """Flatten params into (program, mat_blob, vec_blob, out_channels).
    Done once at setup time, not per forward call."""
    pk = _Packer()
    program = []

    def add_linear_b(wb):
        w, b = wb
        program.append(("linear_b", pk.add_mat(w), pk.add_vec(b)))

    def add_resblock(rb):
        has_sc = "ws" in rb
        if has_sc:
            w2 = jnp.concatenate([rb["w2"], rb["ws"]], axis=0)   # (Cout+Cin, Cout)
            b2 = rb["b2"] + rb["bs"]
        else:
            w2, b2 = rb["w2"], rb["b2"]
        program.append(("resblock",
                        pk.add_vec(rb["g1"]), pk.add_vec(rb["be1"]),
                        pk.add_mat(rb["w1"]),
                        pk.add_vec(rb["g2"]), pk.add_vec(rb["be2"]),
                        has_sc, pk.add_mat(w2), pk.add_vec(b2)))

    def add_head(head):
        g, be, w, b = head
        program.append(("head", pk.add_vec(g), pk.add_vec(be),
                        pk.add_mat(w), pk.add_vec(b)))

    # Encoder
    add_linear_b(params["enc"]["lin_in"])
    for rb in params["enc"]["blocks"]:
        add_resblock(rb)
    add_head(params["enc"]["norm_out"])
    # Codebook: store embedding + precomputed row norms ||e||^2
    emb = params["codebook"]
    e2 = jnp.sum(emb * emb, axis=1, keepdims=True).T                 # (1, K)
    program.append(("vq", pk.add_mat(emb), pk.add_vec(e2)))
    # Decoder
    add_linear_b(params["dec"]["lin_in"])
    for rb in params["dec"]["blocks"]:
        add_resblock(rb)
    add_head(params["dec"]["norm_out"])

    mat_blob, vec_blob = pk.finalize()
    out_channels = params["dec"]["norm_out"][2].shape[1]
    return program, mat_blob, vec_blob, out_channels


def vqvae_forward(domain, packed):
    """Single fused pallas_call for the whole VQVAE forward pass (3 operands)."""
    program, mat_blob, vec_blob, out_channels = packed
    n = domain.shape[0]
    kernel = _make_kernel(program)
    vmem = pl.BlockSpec(memory_space=pltpu.MemorySpace.VMEM)
    return pl.pallas_call(
        kernel,
        out_shape=jax.ShapeDtypeStruct((n, out_channels), jnp.float32),
        in_specs=[vmem, vmem, vmem],
        out_specs=vmem,
    )(domain.astype(jnp.float32), mat_blob, vec_blob)


# --------------------------- parameter construction --------------------------

def _init_linear(key, cin, cout):
    kw, kb = jax.random.split(key)
    bound = 1.0 / (cin ** 0.5)
    w = jax.random.uniform(kw, (cin, cout), jnp.float32, -bound, bound)
    b = jax.random.uniform(kb, (1, cout), jnp.float32, -bound, bound)
    return w, b


def _init_resblock(key, cin, cout):
    k1, k2, k3 = jax.random.split(key, 3)
    p = {
        "g1": jnp.ones((1, cin), jnp.float32),
        "be1": jnp.zeros((1, cin), jnp.float32),
        "g2": jnp.ones((1, cout), jnp.float32),
        "be2": jnp.zeros((1, cout), jnp.float32),
    }
    p["w1"], _b1_unused = _init_linear(k1, cin, cout)   # b1 cancels under BN
    p["w2"], p["b2"] = _init_linear(k2, cout, cout)
    if cin != cout:
        p["ws"], p["bs"] = _init_linear(k3, cin, cout)
    return p


def init_vqvae_params(key, in_channels, n_channels, z_channels, code_size,
                      out_channels=None, layer_res_blocks_num=2):
    if out_channels is None:
        out_channels = in_channels
    keys = iter(jax.random.split(key, 64))
    params = {}

    # ---- Encoder ----
    enc = {"lin_in": _init_linear(next(keys), in_channels, n_channels[0])}
    blocks = []
    for i in range(len(n_channels) - 1):
        block_in, block_out = n_channels[i], n_channels[i + 1]
        for _ in range(layer_res_blocks_num):
            blocks.append(_init_resblock(next(keys), block_in, block_out))
            block_in = block_out
    enc["blocks"] = blocks
    w, b = _init_linear(next(keys), n_channels[-1], z_channels)
    enc["norm_out"] = (jnp.ones((1, n_channels[-1]), jnp.float32),
                       jnp.zeros((1, n_channels[-1]), jnp.float32), w, b)
    params["enc"] = enc

    # ---- Codebook (nn.Embedding(code_size, z_channels)) ----
    params["codebook"] = jax.random.uniform(
        next(keys), (code_size, z_channels), jnp.float32,
        -1.0 / code_size, 1.0 / code_size)

    # ---- Decoder ----
    dec = {"lin_in": _init_linear(next(keys), z_channels, n_channels[-1])}
    blocks = []
    for i in reversed(range(len(n_channels) - 1)):
        block_in, block_out = n_channels[i + 1], n_channels[i]
        for _ in range(layer_res_blocks_num + 1):
            blocks.append(_init_resblock(next(keys), block_in, block_out))
            block_in = block_out
    dec["blocks"] = blocks
    w, b = _init_linear(next(keys), n_channels[0], out_channels)
    dec["norm_out"] = (jnp.ones((1, n_channels[0]), jnp.float32),
                       jnp.zeros((1, n_channels[0]), jnp.float32), w, b)
    params["dec"] = dec
    return params


# ------------------------------------ main ------------------------------------

if __name__ == "__main__":
    key = jax.random.PRNGKey(0)
    kp, kd = jax.random.split(key)

    N = 64                 # number of nodes (the BatchNorm1d batch dimension)
    in_channels = 16
    n_channels = [32, 64]
    z_channels = 8
    code_size = 32

    params = init_vqvae_params(kp, in_channels, n_channels, z_channels, code_size)
    packed = pack_vqvae_params(params)     # one-time operand packing
    domain = jax.random.normal(kd, (N, in_channels), jnp.float32)

    recon = vqvae_forward(domain, packed)
    recon = jax.block_until_ready(recon)
    assert recon.shape == (N, in_channels) and recon.dtype == jnp.float32
    assert bool(jnp.all(jnp.isfinite(recon)))
    print("KERNEL_OK")
</pallas_src>

<mosaic_0001>
module attributes {stable_mosaic.version = 11 : i64} {
  func.func @kernel(%arg0: memref<64x16xf32, #tpu.memory_space<vmem>>, %arg1: memref<696x128xf32, #tpu.memory_space<vmem>>, %arg2: memref<34x128xf32, #tpu.memory_space<vmem>>, %arg3: memref<64x16xf32, #tpu.memory_space<vmem>>) attributes {dimension_semantics = [], scalar_prefetch = 0 : i64, scratch_operands = 0 : i64, tpu.core_type = #tpu.core_type<tc>} {
    %c0 = arith.constant 0 : index
    %c0_0 = arith.constant 0 : index
    %0 = vector.load %arg0[%c0, %c0_0] : memref<64x16xf32, #tpu.memory_space<vmem>>, vector<64x16xf32>
    %c0_1 = arith.constant 0 : index
    %c0_2 = arith.constant 0 : index
    %1 = vector.load %arg1[%c0_1, %c0_2] : memref<696x128xf32, #tpu.memory_space<vmem>>, vector<16x32xf32>
    %cst = arith.constant dense<0.000000e+00> : vector<64x32xf32>
    %2 = tpu.matmul %0, %1, %cst {dimension_numbers = #tpu.dot_dimension_numbers<[1], [0], [0], [1], [0, 0, 1, 1], [], []>} : vector<64x16xf32>, vector<16x32xf32>, vector<64x32xf32> -> vector<64x32xf32>
    %c0_3 = arith.constant 0 : index
    %c0_4 = arith.constant 0 : index
    %3 = vector.load %arg2[%c0_3, %c0_4] : memref<34x128xf32, #tpu.memory_space<vmem>>, vector<1x32xf32>
    %4 = vector.broadcast %3 : vector<1x32xf32> to vector<64x32xf32>
    %5 = arith.addf %2, %4 : vector<64x32xf32>
    %c1 = arith.constant 1 : index
    %c0_5 = arith.constant 0 : index
    %6 = vector.load %arg2[%c1, %c0_5] : memref<34x128xf32, #tpu.memory_space<vmem>>, vector<1x32xf32>
    %c2 = arith.constant 2 : index
    %c0_6 = arith.constant 0 : index
    %7 = vector.load %arg2[%c2, %c0_6] : memref<34x128xf32, #tpu.memory_space<vmem>>, vector<1x32xf32>
    %cst_7 = arith.constant dense<0.000000e+00> : vector<32xf32>
    %8 = vector.multi_reduction <add>, %5, %cst_7 [0] : vector<64x32xf32> to vector<32xf32>
    %9 = vector.shape_cast %8 : vector<32xf32> to vector<1x32xf32>
    %10 = arith.mulf %5, %5 : vector<64x32xf32>
    %cst_8 = arith.constant dense<0.000000e+00> : vector<32xf32>
    %11 = vector.multi_reduction <add>, %10, %cst_8 [0] : vector<64x32xf32> to vector<32xf32>
    %12 = vector.shape_cast %11 : vector<32xf32> to vector<1x32xf32>
    %cst_9 = arith.constant 1.562500e-02 : f32
    %13 = vector.broadcast %cst_9 : f32 to vector<1x32xf32>
    %14 = arith.mulf %9, %13 : vector<1x32xf32>
    %cst_10 = arith.constant 1.562500e-02 : f32
    %15 = vector.broadcast %cst_10 : f32 to vector<1x32xf32>
    %16 = arith.mulf %12, %15 : vector<1x32xf32>
    %17 = arith.mulf %14, %14 : vector<1x32xf32>
    %18 = arith.subf %16, %17 : vector<1x32xf32>
    %cst_11 = arith.constant 0.000000e+00 : f32
    %19 = vector.broadcast %cst_11 : f32 to vector<1x32xf32>
    %20 = arith.maximumf %18, %19 : vector<1x32xf32>
    %21 = vector.broadcast %14 : vector<1x32xf32> to vector<64x32xf32>
    %22 = arith.subf %5, %21 : vector<64x32xf32>
    %cst_12 = arith.constant 9.99999974E-6 : f32
    %23 = vector.broadcast %cst_12 : f32 to vector<1x32xf32>
    %24 = arith.addf %20, %23 : vector<1x32xf32>
    %25 = math.rsqrt %24 : vector<1x32xf32>
    %26 = vector.broadcast %25 : vector<1x32xf32> to vector<64x32xf32>
    %27 = arith.mulf %22, %26 : vector<64x32xf32>
    %28 = vector.broadcast %6 : vector<1x32xf32> to vector<64x32xf32>
    %29 = arith.mulf %27, %28 : vector<64x32xf32>
    %30 = vector.broadcast %7 : vector<1x32xf32> to vector<64x32xf32>
    %31 = arith.addf %29, %30 : vector<64x32xf32>
    %32 = arith.negf %31 : vector<64x32xf32>
    %33 = math.exp %32 : vector<64x32xf32>
    %cst_13 = arith.constant 1.000000e+00 : f32
    %34 = vector.broadcast %cst_13 : f32 to vector<64x32xf32>
    %35 = arith.addf %34, %33 : vector<64x32xf32>
    %36 = arith.divf %34, %35 : vector<64x32xf32>
    %37 = arith.mulf %31, %36 : vector<64x32xf32>
    %c16 = arith.constant 16 : index
    %c0_14 = arith.constant 0 : index
    %38 = vector.load %arg1[%c16, %c0_14] : memref<696x128xf32, #tpu.memory_space<vmem>>, vector<32x64xf32>
    %cst_15 = arith.constant dense<0.000000e+00> : vector<64x64xf32>
    %39 = tpu.matmul %37, %38, %cst_15 {dimension_numbers = #tpu.dot_dimension_numbers<[1], [0], [0], [1], [0, 0, 1, 1], [], []>} : vector<64x32xf32>, vector<32x64xf32>, vector<64x64xf32> -> vector<64x64xf32>
    %c3 = arith.constant 3 : index
    %c0_16 = arith.constant 0 : index
    %40 = vector.load %arg2[%c3, %c0_16] : memref<34x128xf32, #tpu.memory_space<vmem>>, vector<1x64xf32>
    %c4 = arith.constant 4 : index
    %c0_17 = arith.constant 0 : index
    %41 = vector.load %arg2[%c4, %c0_17] : memref<34x128xf32, #tpu.memory_space<vmem>>, vector<1x64xf32>
    %cst_18 = arith.constant dense<0.000000e+00> : vector<64xf32>
    %42 = vector.multi_reduction <add>, %39, %cst_18 [0] : vector<64x64xf32> to vector<64xf32>
    %43 = vector.shape_cast %42 : vector<64xf32> to vector<1x64xf32>
    %44 = arith.mulf %39, %39 : vector<64x64xf32>
    %cst_19 = arith.constant dense<0.000000e+00> : vector<64xf32>
    %45 = vector.multi_reduction <add>, %44, %cst_19 [0] : vector<64x64xf32> to vector<64xf32>
    %46 = vector.shape_cast %45 : vector<64xf32> to vector<1x64xf32>
    %cst_20 = arith.constant 1.562500e-02 : f32
    %47 = vector.broadcast %cst_20 : f32 to vector<1x64xf32>
    %48 = arith.mulf %43, %47 : vector<1x64xf32>
    %cst_21 = arith.constant 1.562500e-02 : f32
    %49 = vector.broadcast %cst_21 : f32 to vector<1x64xf32>
    %50 = arith.mulf %46, %49 : vector<1x64xf32>
    %51 = arith.mulf %48, %48 : vector<1x64xf32>
    %52 = arith.subf %50, %51 : vector<1x64xf32>
    %cst_22 = arith.constant 0.000000e+00 : f32
    %53 = vector.broadcast %cst_22 : f32 to vector<1x64xf32>
    %54 = arith.maximumf %52, %53 : vector<1x64xf32>
    %55 = vector.broadcast %48 : vector<1x64xf32> to vector<64x64xf32>
    %56 = arith.subf %39, %55 : vector<64x64xf32>
    %cst_23 = arith.constant 9.99999974E-6 : f32
    %57 = vector.broadcast %cst_23 : f32 to vector<1x64xf32>
    %58 = arith.addf %54, %57 : vector<1x64xf32>
    %59 = math.rsqrt %58 : vector<1x64xf32>
    %60 = vector.broadcast %59 : vector<1x64xf32> to vector<64x64xf32>
    %61 = arith.mulf %56, %60 : vector<64x64xf32>
    %62 = vector.broadcast %40 : vector<1x64xf32> to vector<64x64xf32>
    %63 = arith.mulf %61, %62 : vector<64x64xf32>
    %64 = vector.broadcast %41 : vector<1x64xf32> to vector<64x64xf32>
    %65 = arith.addf %63, %64 : vector<64x64xf32>
    %66 = arith.negf %65 : vector<64x64xf32>
    %67 = math.exp %66 : vector<64x64xf32>
    %cst_24 = arith.constant 1.000000e+00 : f32
    %68 = vector.broadcast %cst_24 : f32 to vector<64x64xf32>
    %69 = arith.addf %68, %67 : vector<64x64xf32>
    %70 = arith.divf %68, %69 : vector<64x64xf32>
    %71 = arith.mulf %65, %70 : vector<64x64xf32>
    %72 = tpu.concatenate %71, %5 in 1 : vector<64x64xf32>, vector<64x32xf32> -> vector<64x96xf32>
    %c48 = arith.constant 48 : index
    %c0_25 = arith.constant 0 : index
    %73 = vector.load %arg1[%c48, %c0_25] : memref<696x128xf32, #tpu.memory_space<vmem>>, vector<96x64xf32>
    %cst_26 = arith.constant dense<0.000000e+00> : vector<64x64xf32>
    %74 = tpu.matmul %72, %73, %cst_26 {dimension_numbers = #tpu.dot_dimension_numbers<[1], [0], [0], [1], [0, 0, 1, 1], [], []>} : vector<64x96xf32>, vector<96x64xf32>, vector<64x64xf32> -> vector<64x64xf32>
    %c5 = arith.constant 5 : index
    %c0_27 = arith.constant 0 : index
    %75 = vector.load %arg2[%c5, %c0_27] : memref<34x128xf32, #tpu.memory_space<vmem>>, vector<1x64xf32>
    %76 = vector.broadcast %75 : vector<1x64xf32> to vector<64x64xf32>
    %77 = arith.addf %74, %76 : vector<64x64xf32>
    %c6 = arith.constant 6 : index
    %c0_28 = arith.constant 0 : index
    %78 = vector.load %arg2[%c6, %c0_28] : memref<34x128xf32, #tpu.memory_space<vmem>>, vector<1x64xf32>
    %c7 = arith.constant 7 : index
    %c0_29 = arith.constant 0 : index
    %79 = vector.load %arg2[%c7, %c0_29] : memref<34x128xf32, #tpu.memory_space<vmem>>, vector<1x64xf32>
    %cst_30 = arith.constant dense<0.000000e+00> : vector<64xf32>
    %80 = vector.multi_reduction <add>, %77, %cst_30 [0] : vector<64x64xf32> to vector<64xf32>
    %81 = vector.shape_cast %80 : vector<64xf32> to vector<1x64xf32>
    %82 = arith.mulf %77, %77 : vector<64x64xf32>
    %cst_31 = arith.constant dense<0.000000e+00> : vector<64xf32>
    %83 = vector.multi_reduction <add>, %82, %cst_31 [0] : vector<64x64xf32> to vector<64xf32>
    %84 = vector.shape_cast %83 : vector<64xf32> to vector<1x64xf32>
    %cst_32 = arith.constant 1.562500e-02 : f32
    %85 = vector.broadcast %cst_32 : f32 to vector<1x64xf32>
    %86 = arith.mulf %81, %85 : vector<1x64xf32>
    %cst_33 = arith.constant 1.562500e-02 : f32
    %87 = vector.broadcast %cst_33 : f32 to vector<1x64xf32>
    %88 = arith.mulf %84, %87 : vector<1x64xf32>
    %89 = arith.mulf %86, %86 : vector<1x64xf32>
    %90 = arith.subf %88, %89 : vector<1x64xf32>
    %cst_34 = arith.constant 0.000000e+00 : f32
    %91 = vector.broadcast %cst_34 : f32 to vector<1x64xf32>
    %92 = arith.maximumf %90, %91 : vector<1x64xf32>
    %93 = vector.broadcast %86 : vector<1x64xf32> to vector<64x64xf32>
    %94 = arith.subf %77, %93 : vector<64x64xf32>
    %cst_35 = arith.constant 9.99999974E-6 : f32
    %95 = vector.broadcast %cst_35 : f32 to vector<1x64xf32>
    %96 = arith.addf %92, %95 : vector<1x64xf32>
    %97 = math.rsqrt %96 : vector<1x64xf32>
    %98 = vector.broadcast %97 : vector<1x64xf32> to vector<64x64xf32>
    %99 = arith.mulf %94, %98 : vector<64x64xf32>
    %100 = vector.broadcast %78 : vector<1x64xf32> to vector<64x64xf32>
    %101 = arith.mulf %99, %100 : vector<64x64xf32>
    %102 = vector.broadcast %79 : vector<1x64xf32> to vector<64x64xf32>
    %103 = arith.addf %101, %102 : vector<64x64xf32>
    %104 = arith.negf %103 : vector<64x64xf32>
    %105 = math.exp %104 : vector<64x64xf32>
    %cst_36 = arith.constant 1.000000e+00 : f32
    %106 = vector.broadcast %cst_36 : f32 to vector<64x64xf32>
    %107 = arith.addf %106, %105 : vector<64x64xf32>
    %108 = arith.divf %106, %107 : vector<64x64xf32>
    %109 = arith.mulf %103, %108 : vector<64x64xf32>
    %c144 = arith.constant 144 : index
    %c0_37 = arith.constant 0 : index
    %110 = vector.load %arg1[%c144, %c0_37] : memref<696x128xf32, #tpu.memory_space<vmem>>, vector<64x64xf32>
    %cst_38 = arith.constant dense<0.000000e+00> : vector<64x64xf32>
    %111 = tpu.matmul %109, %110, %cst_38 {dimension_numbers = #tpu.dot_dimension_numbers<[1], [0], [0], [1], [0, 0, 1, 1], [], []>} : vector<64x64xf32>, vector<64x64xf32>, vector<64x64xf32> -> vector<64x64xf32>
    %c8 = arith.constant 8 : index
    %c0_39 = arith.constant 0 : index
    %112 = vector.load %arg2[%c8, %c0_39] : memref<34x128xf32, #tpu.memory_space<vmem>>, vector<1x64xf32>
    %c9 = arith.constant 9 : index
    %c0_40 = arith.constant 0 : index
    %113 = vector.load %arg2[%c9, %c0_40] : memref<34x128xf32, #tpu.memory_space<vmem>>, vector<1x64xf32>
    %cst_41 = arith.constant dense<0.000000e+00> : vector<64xf32>
    %114 = vector.multi_reduction <add>, %111, %cst_41 [0] : vector<64x64xf32> to vector<64xf32>
    %115 = vector.shape_cast %114 : vector<64xf32> to vector<1x64xf32>
    %116 = arith.mulf %111, %111 : vector<64x64xf32>
    %cst_42 = arith.constant dense<0.000000e+00> : vector<64xf32>
    %117 = vector.multi_reduction <add>, %116, %cst_42 [0] : vector<64x64xf32> to vector<64xf32>
    %118 = vector.shape_cast %117 : vector<64xf32> to vector<1x64xf32>
    %cst_43 = arith.constant 1.562500e-02 : f32
    %119 = vector.broadcast %cst_43 : f32 to vector<1x64xf32>
    %120 = arith.mulf %115, %119 : vector<1x64xf32>
    %cst_44 = arith.constant 1.562500e-02 : f32
    %121 = vector.broadcast %cst_44 : f32 to vector<1x64xf32>
    %122 = arith.mulf %118, %121 : vector<1x64xf32>
    %123 = arith.mulf %120, %120 : vector<1x64xf32>
    %124 = arith.subf %122, %123 : vector<1x64xf32>
    %cst_45 = arith.constant 0.000000e+00 : f32
    %125 = vector.broadcast %cst_45 : f32 to vector<1x64xf32>
    %126 = arith.maximumf %124, %125 : vector<1x64xf32>
    %127 = vector.broadcast %120 : vector<1x64xf32> to vector<64x64xf32>
    %128 = arith.subf %111, %127 : vector<64x64xf32>
    %cst_46 = arith.constant 9.99999974E-6 : f32
    %129 = vector.broadcast %cst_46 : f32 to vector<1x64xf32>
    %130 = arith.addf %126, %129 : vector<1x64xf32>
    %131 = math.rsqrt %130 : vector<1x64xf32>
    %132 = vector.broadcast %131 : vector<1x64xf32> to vector<64x64xf32>
    %133 = arith.mulf %128, %132 : vector<64x64xf32>
    %134 = vector.broadcast %112 : vector<1x64xf32> to vector<64x64xf32>
    %135 = arith.mulf %133, %134 : vector<64x64xf32>
    %136 = vector.broadcast %113 : vector<1x64xf32> to vector<64x64xf32>
    %137 = arith.addf %135, %136 : vector<64x64xf32>
    %138 = arith.negf %137 : vector<64x64xf32>
    %139 = math.exp %138 : vector<64x64xf32>
    %cst_47 = arith.constant 1.000000e+00 : f32
    %140 = vector.broadcast %cst_47 : f32 to vector<64x64xf32>
    %141 = arith.addf %140, %139 : vector<64x64xf32>
    %142 = arith.divf %140, %141 : vector<64x64xf32>
    %143 = arith.mulf %137, %142 : vector<64x64xf32>
    %c208 = arith.constant 208 : index
    %c0_48 = arith.constant 0 : index
    %144 = vector.load %arg1[%c208, %c0_48] : memref<696x128xf32, #tpu.memory_space<vmem>>, vector<64x64xf32>
    %cst_49 = arith.constant dense<0.000000e+00> : vector<64x64xf32>
    %145 = tpu.matmul %143, %144, %cst_49 {dimension_numbers = #tpu.dot_dimension_numbers<[1], [0], [0], [1], [0, 0, 1, 1], [], []>} : vector<64x64xf32>, vector<64x64xf32>, vector<64x64xf32> -> vector<64x64xf32>
    %146 = arith.addf %77, %145 : vector<64x64xf32>
    %c10 = arith.constant 10 : index
    %c0_50 = arith.constant 0 : index
    %147 = vector.load %arg2[%c10, %c0_50] : memref<34x128xf32, #tpu.memory_space<vmem>>, vector<1x64xf32>
    %148 = vector.broadcast %147 : vector<1x64xf32> to vector<64x64xf32>
    %149 = arith.addf %146, %148 : vector<64x64xf32>
    %c11 = arith.constant 11 : index
    %c0_51 = arith.constant 0 : index
    %150 = vector.load %arg2[%c11, %c0_51] : memref<34x128xf32, #tpu.memory_space<vmem>>, vector<1x64xf32>
    %c12 = arith.constant 12 : index
    %c0_52 = arith.constant 0 : index
    %151 = vector.load %arg2[%c12, %c0_52] : memref<34x128xf32, #tpu.memory_space<vmem>>, vector<1x64xf32>
    %cst_53 = arith.constant dense<0.000000e+00> : vector<64xf32>
    %152 = vector.multi_reduction <add>, %149, %cst_53 [0] : vector<64x64xf32> to vector<64xf32>
    %153 = vector.shape_cast %152 : vector<64xf32> to vector<1x64xf32>
    %154 = arith.mulf %149, %149 : vector<64x64xf32>
    %cst_54 = arith.constant dense<0.000000e+00> : vector<64xf32>
    %155 = vector.multi_reduction <add>, %154, %cst_54 [0] : vector<64x64xf32> to vector<64xf32>
    %156 = vector.shape_cast %155 : vector<64xf32> to vector<1x64xf32>
    %cst_55 = arith.constant 1.562500e-02 : f32
    %157 = vector.broadcast %cst_55 : f32 to vector<1x64xf32>
    %158 = arith.mulf %153, %157 : vector<1x64xf32>
    %cst_56 = arith.constant 1.562500e-02 : f32
    %159 = vector.broadcast %cst_56 : f32 to vector<1x64xf32>
    %160 = arith.mulf %156, %159 : vector<1x64xf32>
    %161 = arith.mulf %158, %158 : vector<1x64xf32>
    %162 = arith.subf %160, %161 : vector<1x64xf32>
    %cst_57 = arith.constant 0.000000e+00 : f32
    %163 = vector.broadcast %cst_57 : f32 to vector<1x64xf32>
    %164 = arith.maximumf %162, %163 : vector<1x64xf32>
    %165 = vector.broadcast %158 : vector<1x64xf32> to vector<64x64xf32>
    %166 = arith.subf %149, %165 : vector<64x64xf32>
    %cst_58 = arith.constant 9.99999974E-6 : f32
    %167 = vector.broadcast %cst_58 : f32 to vector<1x64xf32>
    %168 = arith.addf %164, %167 : vector<1x64xf32>
    %169 = math.rsqrt %168 : vector<1x64xf32>
    %170 = vector.broadcast %169 : vector<1x64xf32> to vector<64x64xf32>
    %171 = arith.mulf %166, %170 : vector<64x64xf32>
    %172 = vector.broadcast %150 : vector<1x64xf32> to vector<64x64xf32>
    %173 = arith.mulf %171, %172 : vector<64x64xf32>
    %174 = vector.broadcast %151 : vector<1x64xf32> to vector<64x64xf32>
    %175 = arith.addf %173, %174 : vector<64x64xf32>
    %176 = arith.negf %175 : vector<64x64xf32>
    %177 = math.exp %176 : vector<64x64xf32>
    %cst_59 = arith.constant 1.000000e+00 : f32
    %178 = vector.broadcast %cst_59 : f32 to vector<64x64xf32>
    %179 = arith.addf %178, %177 : vector<64x64xf32>
    %180 = arith.divf %178, %179 : vector<64x64xf32>
    %181 = arith.mulf %175, %180 : vector<64x64xf32>
    %c272 = arith.constant 272 : index
    %c0_60 = arith.constant 0 : index
    %182 = vector.load %arg1[%c272, %c0_60] : memref<696x128xf32, #tpu.memory_space<vmem>>, vector<64x8xf32>
    %cst_61 = arith.constant dense<0.000000e+00> : vector<64x8xf32>
    %183 = tpu.matmul %181, %182, %cst_61 {dimension_numbers = #tpu.dot_dimension_numbers<[1], [0], [0], [1], [0, 0, 1, 1], [], []>} : vector<64x64xf32>, vector<64x8xf32>, vector<64x8xf32> -> vector<64x8xf32>
    %c13 = arith.constant 13 : index
    %c0_62 = arith.constant 0 : index
    %184 = vector.load %arg2[%c13, %c0_62] : memref<34x128xf32, #tpu.memory_space<vmem>>, vector<1x8xf32>
    %185 = vector.broadcast %184 : vector<1x8xf32> to vector<64x8xf32>
    %186 = arith.addf %183, %185 : vector<64x8xf32>
    %c336 = arith.constant 336 : index
    %c0_63 = arith.constant 0 : index
    %187 = vector.load %arg1[%c336, %c0_63] : memref<696x128xf32, #tpu.memory_space<vmem>>, vector<32x8xf32>
    %c14 = arith.constant 14 : index
    %c0_64 = arith.constant 0 : index
    %188 = vector.load %arg2[%c14, %c0_64] : memref<34x128xf32, #tpu.memory_space<vmem>>, vector<1x32xf32>
    %cst_65 = arith.constant dense<0.000000e+00> : vector<64x32xf32>
    %189 = tpu.matmul %186, %187, %cst_65 {dimension_numbers = #tpu.dot_dimension_numbers<[1], [1], [0], [0], [0, 0, 1, 0], [], []>} : vector<64x8xf32>, vector<32x8xf32>, vector<64x32xf32> -> vector<64x32xf32>
    %cst_66 = arith.constant 2.000000e+00 : f32
    %190 = vector.broadcast %cst_66 : f32 to vector<64x32xf32>
    %191 = arith.mulf %190, %189 : vector<64x32xf32>
    %192 = vector.broadcast %188 : vector<1x32xf32> to vector<64x32xf32>
    %193 = arith.subf %192, %191 : vector<64x32xf32>
    %cst_67 = arith.constant dense<0x7F800000> : vector<64xf32>
    %194 = vector.multi_reduction <minimumf>, %193, %cst_67 [1] : vector<64x32xf32> to vector<64xf32>
    %195 = vector.shape_cast %194 : vector<64xf32> to vector<64x1xf32>
    %196 = tpu.iota {dimensions = array<i32: 1>} : vector<64x32xi32>
    %197 = vector.broadcast %195 : vector<64x1xf32> to vector<64x32xf32>
    %198 = arith.cmpf oeq, %193, %197 : vector<64x32xf32>
    %c32_i32 = arith.constant 32 : i32
    %199 = vector.broadcast %c32_i32 : i32 to vector<64x32xi32>
    %200 = arith.select %198, %196, %199 : vector<64x32xi1>, vector<64x32xi32>
    %cst_68 = arith.constant dense<2147483647> : vector<64xi32>
    %201 = vector.multi_reduction <minsi>, %200, %cst_68 [1] : vector<64x32xi32> to vector<64xi32>
    %202 = vector.shape_cast %201 : vector<64xi32> to vector<64x1xi32>
    %203 = vector.broadcast %202 : vector<64x1xi32> to vector<64x32xi32>
    %204 = arith.cmpi eq, %196, %203 : vector<64x32xi32>
    %205 = arith.extui %204 : vector<64x32xi1> to vector<64x32xi32>
    %206 = arith.sitofp %205 : vector<64x32xi32> to vector<64x32xf32>
    %cst_69 = arith.constant dense<0.000000e+00> : vector<64x8xf32>
    %207 = tpu.matmul %206, %187, %cst_69 {dimension_numbers = #tpu.dot_dimension_numbers<[1], [0], [0], [1], [0, 0, 1, 1], [], []>} : vector<64x32xf32>, vector<32x8xf32>, vector<64x8xf32> -> vector<64x8xf32>
    %c368 = arith.constant 368 : index
    %c0_70 = arith.constant 0 : index
    %208 = vector.load %arg1[%c368, %c0_70] : memref<696x128xf32, #tpu.memory_space<vmem>>, vector<8x64xf32>
    %cst_71 = arith.constant dense<0.000000e+00> : vector<64x64xf32>
    %209 = tpu.matmul %207, %208, %cst_71 {dimension_numbers = #tpu.dot_dimension_numbers<[1], [0], [0], [1], [0, 0, 1, 1], [], []>} : vector<64x8xf32>, vector<8x64xf32>, vector<64x64xf32> -> vector<64x64xf32>
    %c15 = arith.constant 15 : index
    %c0_72 = arith.constant 0 : index
    %210 = vector.load %arg2[%c15, %c0_72] : memref<34x128xf32, #tpu.memory_space<vmem>>, vector<1x64xf32>
    %211 = vector.broadcast %210 : vector<1x64xf32> to vector<64x64xf32>
    %212 = arith.addf %209, %211 : vector<64x64xf32>
    %c16_73 = arith.constant 16 : index
    %c0_74 = arith.constant 0 : index
    %213 = vector.load %arg2[%c16_73, %c0_74] : memref<34x128xf32, #tpu.memory_space<vmem>>, vector<1x64xf32>
    %c17 = arith.constant 17 : index
    %c0_75 = arith.constant 0 : index
    %214 = vector.load %arg2[%c17, %c0_75] : memref<34x128xf32, #tpu.memory_space<vmem>>, vector<1x64xf32>
    %cst_76 = arith.constant dense<0.000000e+00> : vector<64xf32>
    %215 = vector.multi_reduction <add>, %212, %cst_76 [0] : vector<64x64xf32> to vector<64xf32>
    %216 = vector.shape_cast %215 : vector<64xf32> to vector<1x64xf32>
    %217 = arith.mulf %212, %212 : vector<64x64xf32>
    %cst_77 = arith.constant dense<0.000000e+00> : vector<64xf32>
    %218 = vector.multi_reduction <add>, %217, %cst_77 [0] : vector<64x64xf32> to vector<64xf32>
    %219 = vector.shape_cast %218 : vector<64xf32> to vector<1x64xf32>
    %cst_78 = arith.constant 1.562500e-02 : f32
    %220 = vector.broadcast %cst_78 : f32 to vector<1x64xf32>
    %221 = arith.mulf %216, %220 : vector<1x64xf32>
    %cst_79 = arith.constant 1.562500e-02 : f32
    %222 = vector.broadcast %cst_79 : f32 to vector<1x64xf32>
    %223 = arith.mulf %219, %222 : vector<1x64xf32>
    %224 = arith.mulf %221, %221 : vector<1x64xf32>
    %225 = arith.subf %223, %224 : vector<1x64xf32>
    %cst_80 = arith.constant 0.000000e+00 : f32
    %226 = vector.broadcast %cst_80 : f32 to vector<1x64xf32>
    %227 = arith.maximumf %225, %226 : vector<1x64xf32>
    %228 = vector.broadcast %221 : vector<1x64xf32> to vector<64x64xf32>
    %229 = arith.subf %212, %228 : vector<64x64xf32>
    %cst_81 = arith.constant 9.99999974E-6 : f32
    %230 = vector.broadcast %cst_81 : f32 to vector<1x64xf32>
    %231 = arith.addf %227, %230 : vector<1x64xf32>
    %232 = math.rsqrt %231 : vector<1x64xf32>
    %233 = vector.broadcast %232 : vector<1x64xf32> to vector<64x64xf32>
    %234 = arith.mulf %229, %233 : vector<64x64xf32>
    %235 = vector.broadcast %213 : vector<1x64xf32> to vector<64x64xf32>
    %236 = arith.mulf %234, %235 : vector<64x64xf32>
    %237 = vector.broadcast %214 : vector<1x64xf32> to vector<64x64xf32>
    %238 = arith.addf %236, %237 : vector<64x64xf32>
    %239 = arith.negf %238 : vector<64x64xf32>
    %240 = math.exp %239 : vector<64x64xf32>
    %cst_82 = arith.constant 1.000000e+00 : f32
    %241 = vector.broadcast %cst_82 : f32 to vector<64x64xf32>
    %242 = arith.addf %241, %240 : vector<64x64xf32>
    %243 = arith.divf %241, %242 : vector<64x64xf32>
    %244 = arith.mulf %238, %243 : vector<64x64xf32>
    %c376 = arith.constant 376 : index
    %c0_83 = arith.constant 0 : index
    %245 = vector.load %arg1[%c376, %c0_83] : memref<696x128xf32, #tpu.memory_space<vmem>>, vector<64x32xf32>
    %cst_84 = arith.constant dense<0.000000e+00> : vector<64x32xf32>
    %246 = tpu.matmul %244, %245, %cst_84 {dimension_numbers = #tpu.dot_dimension_numbers<[1], [0], [0], [1], [0, 0, 1, 1], [], []>} : vector<64x64xf32>, vector<64x32xf32>, vector<64x32xf32> -> vector<64x32xf32>
    %c18 = arith.constant 18 : index
    %c0_85 = arith.constant 0 : index
    %247 = vector.load %arg2[%c18, %c0_85] : memref<34x128xf32, #tpu.memory_space<vmem>>, vector<1x32xf32>
    %c19 = arith.constant 19 : index
    %c0_86 = arith.constant 0 : index
    %248 = vector.load %arg2[%c19, %c0_86] : memref<34x128xf32, #tpu.memory_space<vmem>>, vector<1x32xf32>
    %cst_87 = arith.constant dense<0.000000e+00> : vector<32xf32>
    %249 = vector.multi_reduction <add>, %246, %cst_87 [0] : vector<64x32xf32> to vector<32xf32>
    %250 = vector.shape_cast %249 : vector<32xf32> to vector<1x32xf32>
    %251 = arith.mulf %246, %246 : vector<64x32xf32>
    %cst_88 = arith.constant dense<0.000000e+00> : vector<32xf32>
    %252 = vector.multi_reduction <add>, %251, %cst_88 [0] : vector<64x32xf32> to vector<32xf32>
    %253 = vector.shape_cast %252 : vector<32xf32> to vector<1x32xf32>
    %cst_89 = arith.constant 1.562500e-02 : f32
    %254 = vector.broadcast %cst_89 : f32 to vector<1x32xf32>
    %255 = arith.mulf %250, %254 : vector<1x32xf32>
    %cst_90 = arith.constant 1.562500e-02 : f32
    %256 = vector.broadcast %cst_90 : f32 to vector<1x32xf32>
    %257 = arith.mulf %253, %256 : vector<1x32xf32>
    %258 = arith.mulf %255, %255 : vector<1x32xf32>
    %259 = arith.subf %257, %258 : vector<1x32xf32>
    %cst_91 = arith.constant 0.000000e+00 : f32
    %260 = vector.broadcast %cst_91 : f32 to vector<1x32xf32>
    %261 = arith.maximumf %259, %260 : vector<1x32xf32>
    %262 = vector.broadcast %255 : vector<1x32xf32> to vector<64x32xf32>
    %263 = arith.subf %246, %262 : vector<64x32xf32>
    %cst_92 = arith.constant 9.99999974E-6 : f32
    %264 = vector.broadcast %cst_92 : f32 to vector<1x32xf32>
    %265 = arith.addf %261, %264 : vector<1x32xf32>
    %266 = math.rsqrt %265 : vector<1x32xf32>
    %267 = vector.broadcast %266 : vector<1x32xf32> to vector<64x32xf32>
    %268 = arith.mulf %263, %267 : vector<64x32xf32>
    %269 = vector.broadcast %247 : vector<1x32xf32> to vector<64x32xf32>
    %270 = arith.mulf %268, %269 : vector<64x32xf32>
    %271 = vector.broadcast %248 : vector<1x32xf32> to vector<64x32xf32>
    %272 = arith.addf %270, %271 : vector<64x32xf32>
    %273 = arith.negf %272 : vector<64x32xf32>
    %274 = math.exp %273 : vector<64x32xf32>
    %cst_93 = arith.constant 1.000000e+00 : f32
    %275 = vector.broadcast %cst_93 : f32 to vector<64x32xf32>
    %276 = arith.addf %275, %274 : vector<64x32xf32>
    %277 = arith.divf %275, %276 : vector<64x32xf32>
    %278 = arith.mulf %272, %277 : vector<64x32xf32>
    %279 = tpu.concatenate %278, %212 in 1 : vector<64x32xf32>, vector<64x64xf32> -> vector<64x96xf32>
    %c440 = arith.constant 440 : index
    %c0_94 = arith.constant 0 : index
    %280 = vector.load %arg1[%c440, %c0_94] : memref<696x128xf32, #tpu.memory_space<vmem>>, vector<96x32xf32>
    %cst_95 = arith.constant dense<0.000000e+00> : vector<64x32xf32>
    %281 = tpu.matmul %279, %280, %cst_95 {dimension_numbers = #tpu.dot_dimension_numbers<[1], [0], [0], [1], [0, 0, 1, 1], [], []>} : vector<64x96xf32>, vector<96x32xf32>, vector<64x32xf32> -> vector<64x32xf32>
    %c20 = arith.constant 20 : index
    %c0_96 = arith.constant 0 : index
    %282 = vector.load %arg2[%c20, %c0_96] : memref<34x128xf32, #tpu.memory_space<vmem>>, vector<1x32xf32>
    %283 = vector.broadcast %282 : vector<1x32xf32> to vector<64x32xf32>
    %284 = arith.addf %281, %283 : vector<64x32xf32>
    %c21 = arith.constant 21 : index
    %c0_97 = arith.constant 0 : index
    %285 = vector.load %arg2[%c21, %c0_97] : memref<34x128xf32, #tpu.memory_space<vmem>>, vector<1x32xf32>
    %c22 = arith.constant 22 : index
    %c0_98 = arith.constant 0 : index
    %286 = vector.load %arg2[%c22, %c0_98] : memref<34x128xf32, #tpu.memory_space<vmem>>, vector<1x32xf32>
    %cst_99 = arith.constant dense<0.000000e+00> : vector<32xf32>
    %287 = vector.multi_reduction <add>, %284, %cst_99 [0] : vector<64x32xf32> to vector<32xf32>
    %288 = vector.shape_cast %287 : vector<32xf32> to vector<1x32xf32>
    %289 = arith.mulf %284, %284 : vector<64x32xf32>
    %cst_100 = arith.constant dense<0.000000e+00> : vector<32xf32>
    %290 = vector.multi_reduction <add>, %289, %cst_100 [0] : vector<64x32xf32> to vector<32xf32>
    %291 = vector.shape_cast %290 : vector<32xf32> to vector<1x32xf32>
    %cst_101 = arith.constant 1.562500e-02 : f32
    %292 = vector.broadcast %cst_101 : f32 to vector<1x32xf32>
    %293 = arith.mulf %288, %292 : vector<1x32xf32>
    %cst_102 = arith.constant 1.562500e-02 : f32
    %294 = vector.broadcast %cst_102 : f32 to vector<1x32xf32>
    %295 = arith.mulf %291, %294 : vector<1x32xf32>
    %296 = arith.mulf %293, %293 : vector<1x32xf32>
    %297 = arith.subf %295, %296 : vector<1x32xf32>
    %cst_103 = arith.constant 0.000000e+00 : f32
    %298 = vector.broadcast %cst_103 : f32 to vector<1x32xf32>
    %299 = arith.maximumf %297, %298 : vector<1x32xf32>
    %300 = vector.broadcast %293 : vector<1x32xf32> to vector<64x32xf32>
    %301 = arith.subf %284, %300 : vector<64x32xf32>
    %cst_104 = arith.constant 9.99999974E-6 : f32
    %302 = vector.broadcast %cst_104 : f32 to vector<1x32xf32>
    %303 = arith.addf %299, %302 : vector<1x32xf32>
    %304 = math.rsqrt %303 : vector<1x32xf32>
    %305 = vector.broadcast %304 : vector<1x32xf32> to vector<64x32xf32>
    %306 = arith.mulf %301, %305 : vector<64x32xf32>
    %307 = vector.broadcast %285 : vector<1x32xf32> to vector<64x32xf32>
    %308 = arith.mulf %306, %307 : vector<64x32xf32>
    %309 = vector.broadcast %286 : vector<1x32xf32> to vector<64x32xf32>
    %310 = arith.addf %308, %309 : vector<64x32xf32>
    %311 = arith.negf %310 : vector<64x32xf32>
    %312 = math.exp %311 : vector<64x32xf32>
    %cst_105 = arith.constant 1.000000e+00 : f32
    %313 = vector.broadcast %cst_105 : f32 to vector<64x32xf32>
    %314 = arith.addf %313, %312 : vector<64x32xf32>
    %315 = arith.divf %313, %314 : vector<64x32xf32>
    %316 = arith.mulf %310, %315 : vector<64x32xf32>
    %c536 = arith.constant 536 : index
    %c0_106 = arith.constant 0 : index
    %317 = vector.load %arg1[%c536, %c0_106] : memref<696x128xf32, #tpu.memory_space<vmem>>, vector<32x32xf32>
    %cst_107 = arith.constant dense<0.000000e+00> : vector<64x32xf32>
    %318 = tpu.matmul %316, %317, %cst_107 {dimension_numbers = #tpu.dot_dimension_numbers<[1], [0], [0], [1], [0, 0, 1, 1], [], []>} : vector<64x32xf32>, vector<32x32xf32>, vector<64x32xf32> -> vector<64x32xf32>
    %c23 = arith.constant 23 : index
    %c0_108 = arith.constant 0 : index
    %319 = vector.load %arg2[%c23, %c0_108] : memref<34x128xf32, #tpu.memory_space<vmem>>, vector<1x32xf32>
    %c24 = arith.constant 24 : index
    %c0_109 = arith.constant 0 : index
    %320 = vector.load %arg2[%c24, %c0_109] : memref<34x128xf32, #tpu.memory_space<vmem>>, vector<1x32xf32>
    %cst_110 = arith.constant dense<0.000000e+00> : vector<32xf32>
    %321 = vector.multi_reduction <add>, %318, %cst_110 [0] : vector<64x32xf32> to vector<32xf32>
    %322 = vector.shape_cast %321 : vector<32xf32> to vector<1x32xf32>
    %323 = arith.mulf %318, %318 : vector<64x32xf32>
    %cst_111 = arith.constant dense<0.000000e+00> : vector<32xf32>
    %324 = vector.multi_reduction <add>, %323, %cst_111 [0] : vector<64x32xf32> to vector<32xf32>
    %325 = vector.shape_cast %324 : vector<32xf32> to vector<1x32xf32>
    %cst_112 = arith.constant 1.562500e-02 : f32
    %326 = vector.broadcast %cst_112 : f32 to vector<1x32xf32>
    %327 = arith.mulf %322, %326 : vector<1x32xf32>
    %cst_113 = arith.constant 1.562500e-02 : f32
    %328 = vector.broadcast %cst_113 : f32 to vector<1x32xf32>
    %329 = arith.mulf %325, %328 : vector<1x32xf32>
    %330 = arith.mulf %327, %327 : vector<1x32xf32>
    %331 = arith.subf %329, %330 : vector<1x32xf32>
    %cst_114 = arith.constant 0.000000e+00 : f32
    %332 = vector.broadcast %cst_114 : f32 to vector<1x32xf32>
    %333 = arith.maximumf %331, %332 : vector<1x32xf32>
    %334 = vector.broadcast %327 : vector<1x32xf32> to vector<64x32xf32>
    %335 = arith.subf %318, %334 : vector<64x32xf32>
    %cst_115 = arith.constant 9.99999974E-6 : f32
    %336 = vector.broadcast %cst_115 : f32 to vector<1x32xf32>
    %337 = arith.addf %333, %336 : vector<1x32xf32>
    %338 = math.rsqrt %337 : vector<1x32xf32>
    %339 = vector.broadcast %338 : vector<1x32xf32> to vector<64x32xf32>
    %340 = arith.mulf %335, %339 : vector<64x32xf32>
    %341 = vector.broadcast %319 : vector<1x32xf32> to vector<64x32xf32>
    %342 = arith.mulf %340, %341 : vector<64x32xf32>
    %343 = vector.broadcast %320 : vector<1x32xf32> to vector<64x32xf32>
    %344 = arith.addf %342, %343 : vector<64x32xf32>
    %345 = arith.negf %344 : vector<64x32xf32>
    %346 = math.exp %345 : vector<64x32xf32>
    %cst_116 = arith.constant 1.000000e+00 : f32
    %347 = vector.broadcast %cst_116 : f32 to vector<64x32xf32>
    %348 = arith.addf %347, %346 : vector<64x32xf32>
    %349 = arith.divf %347, %348 : vector<64x32xf32>
    %350 = arith.mulf %344, %349 : vector<64x32xf32>
    %c568 = arith.constant 568 : index
    %c0_117 = arith.constant 0 : index
    %351 = vector.load %arg1[%c568, %c0_117] : memref<696x128xf32, #tpu.memory_space<vmem>>, vector<32x32xf32>
    %cst_118 = arith.constant dense<0.000000e+00> : vector<64x32xf32>
    %352 = tpu.matmul %350, %351, %cst_118 {dimension_numbers = #tpu.dot_dimension_numbers<[1], [0], [0], [1], [0, 0, 1, 1], [], []>} : vector<64x32xf32>, vector<32x32xf32>, vector<64x32xf32> -> vector<64x32xf32>
    %353 = arith.addf %284, %352 : vector<64x32xf32>
    %c25 = arith.constant 25 : index
    %c0_119 = arith.constant 0 : index
    %354 = vector.load %arg2[%c25, %c0_119] : memref<34x128xf32, #tpu.memory_space<vmem>>, vector<1x32xf32>
    %355 = vector.broadcast %354 : vector<1x32xf32> to vector<64x32xf32>
    %356 = arith.addf %353, %355 : vector<64x32xf32>
    %c26 = arith.constant 26 : index
    %c0_120 = arith.constant 0 : index
    %357 = vector.load %arg2[%c26, %c0_120] : memref<34x128xf32, #tpu.memory_space<vmem>>, vector<1x32xf32>
    %c27 = arith.constant 27 : index
    %c0_121 = arith.constant 0 : index
    %358 = vector.load %arg2[%c27, %c0_121] : memref<34x128xf32, #tpu.memory_space<vmem>>, vector<1x32xf32>
    %cst_122 = arith.constant dense<0.000000e+00> : vector<32xf32>
    %359 = vector.multi_reduction <add>, %356, %cst_122 [0] : vector<64x32xf32> to vector<32xf32>
    %360 = vector.shape_cast %359 : vector<32xf32> to vector<1x32xf32>
    %361 = arith.mulf %356, %356 : vector<64x32xf32>
    %cst_123 = arith.constant dense<0.000000e+00> : vector<32xf32>
    %362 = vector.multi_reduction <add>, %361, %cst_123 [0] : vector<64x32xf32> to vector<32xf32>
    %363 = vector.shape_cast %362 : vector<32xf32> to vector<1x32xf32>
    %cst_124 = arith.constant 1.562500e-02 : f32
    %364 = vector.broadcast %cst_124 : f32 to vector<1x32xf32>
    %365 = arith.mulf %360, %364 : vector<1x32xf32>
    %cst_125 = arith.constant 1.562500e-02 : f32
    %366 = vector.broadcast %cst_125 : f32 to vector<1x32xf32>
    %367 = arith.mulf %363, %366 : vector<1x32xf32>
    %368 = arith.mulf %365, %365 : vector<1x32xf32>
    %369 = arith.subf %367, %368 : vector<1x32xf32>
    %cst_126 = arith.constant 0.000000e+00 : f32
    %370 = vector.broadcast %cst_126 : f32 to vector<1x32xf32>
    %371 = arith.maximumf %369, %370 : vector<1x32xf32>
    %372 = vector.broadcast %365 : vector<1x32xf32> to vector<64x32xf32>
    %373 = arith.subf %356, %372 : vector<64x32xf32>
    %cst_127 = arith.constant 9.99999974E-6 : f32
    %374 = vector.broadcast %cst_127 : f32 to vector<1x32xf32>
    %375 = arith.addf %371, %374 : vector<1x32xf32>
    %376 = math.rsqrt %375 : vector<1x32xf32>
    %377 = vector.broadcast %376 : vector<1x32xf32> to vector<64x32xf32>
    %378 = arith.mulf %373, %377 : vector<64x32xf32>
    %379 = vector.broadcast %357 : vector<1x32xf32> to vector<64x32xf32>
    %380 = arith.mulf %378, %379 : vector<64x32xf32>
    %381 = vector.broadcast %358 : vector<1x32xf32> to vector<64x32xf32>
    %382 = arith.addf %380, %381 : vector<64x32xf32>
    %383 = arith.negf %382 : vector<64x32xf32>
    %384 = math.exp %383 : vector<64x32xf32>
    %cst_128 = arith.constant 1.000000e+00 : f32
    %385 = vector.broadcast %cst_128 : f32 to vector<64x32xf32>
    %386 = arith.addf %385, %384 : vector<64x32xf32>
    %387 = arith.divf %385, %386 : vector<64x32xf32>
    %388 = arith.mulf %382, %387 : vector<64x32xf32>
    %c600 = arith.constant 600 : index
    %c0_129 = arith.constant 0 : index
    %389 = vector.load %arg1[%c600, %c0_129] : memref<696x128xf32, #tpu.memory_space<vmem>>, vector<32x32xf32>
    %cst_130 = arith.constant dense<0.000000e+00> : vector<64x32xf32>
    %390 = tpu.matmul %388, %389, %cst_130 {dimension_numbers = #tpu.dot_dimension_numbers<[1], [0], [0], [1], [0, 0, 1, 1], [], []>} : vector<64x32xf32>, vector<32x32xf32>, vector<64x32xf32> -> vector<64x32xf32>
    %c28 = arith.constant 28 : index
    %c0_131 = arith.constant 0 : index
    %391 = vector.load %arg2[%c28, %c0_131] : memref<34x128xf32, #tpu.memory_space<vmem>>, vector<1x32xf32>
    %c29 = arith.constant 29 : index
    %c0_132 = arith.constant 0 : index
    %392 = vector.load %arg2[%c29, %c0_132] : memref<34x128xf32, #tpu.memory_space<vmem>>, vector<1x32xf32>
    %cst_133 = arith.constant dense<0.000000e+00> : vector<32xf32>
    %393 = vector.multi_reduction <add>, %390, %cst_133 [0] : vector<64x32xf32> to vector<32xf32>
    %394 = vector.shape_cast %393 : vector<32xf32> to vector<1x32xf32>
    %395 = arith.mulf %390, %390 : vector<64x32xf32>
    %cst_134 = arith.constant dense<0.000000e+00> : vector<32xf32>
    %396 = vector.multi_reduction <add>, %395, %cst_134 [0] : vector<64x32xf32> to vector<32xf32>
    %397 = vector.shape_cast %396 : vector<32xf32> to vector<1x32xf32>
    %cst_135 = arith.constant 1.562500e-02 : f32
    %398 = vector.broadcast %cst_135 : f32 to vector<1x32xf32>
    %399 = arith.mulf %394, %398 : vector<1x32xf32>
    %cst_136 = arith.constant 1.562500e-02 : f32
    %400 = vector.broadcast %cst_136 : f32 to vector<1x32xf32>
    %401 = arith.mulf %397, %400 : vector<1x32xf32>
    %402 = arith.mulf %399, %399 : vector<1x32xf32>
    %403 = arith.subf %401, %402 : vector<1x32xf32>
    %cst_137 = arith.constant 0.000000e+00 : f32
    %404 = vector.broadcast %cst_137 : f32 to vector<1x32xf32>
    %405 = arith.maximumf %403, %404 : vector<1x32xf32>
    %406 = vector.broadcast %399 : vector<1x32xf32> to vector<64x32xf32>
    %407 = arith.subf %390, %406 : vector<64x32xf32>
    %cst_138 = arith.constant 9.99999974E-6 : f32
    %408 = vector.broadcast %cst_138 : f32 to vector<1x32xf32>
    %409 = arith.addf %405, %408 : vector<1x32xf32>
    %410 = math.rsqrt %409 : vector<1x32xf32>
    %411 = vector.broadcast %410 : vector<1x32xf32> to vector<64x32xf32>
    %412 = arith.mulf %407, %411 : vector<64x32xf32>
    %413 = vector.broadcast %391 : vector<1x32xf32> to vector<64x32xf32>
    %414 = arith.mulf %412, %413 : vector<64x32xf32>
    %415 = vector.broadcast %392 : vector<1x32xf32> to vector<64x32xf32>
    %416 = arith.addf %414, %415 : vector<64x32xf32>
    %417 = arith.negf %416 : vector<64x32xf32>
    %418 = math.exp %417 : vector<64x32xf32>
    %cst_139 = arith.constant 1.000000e+00 : f32
    %419 = vector.broadcast %cst_139 : f32 to vector<64x32xf32>
    %420 = arith.addf %419, %418 : vector<64x32xf32>
    %421 = arith.divf %419, %420 : vector<64x32xf32>
    %422 = arith.mulf %416, %421 : vector<64x32xf32>
    %c632 = arith.constant 632 : index
    %c0_140 = arith.constant 0 : index
    %423 = vector.load %arg1[%c632, %c0_140] : memref<696x128xf32, #tpu.memory_space<vmem>>, vector<32x32xf32>
    %cst_141 = arith.constant dense<0.000000e+00> : vector<64x32xf32>
    %424 = tpu.matmul %422, %423, %cst_141 {dimension_numbers = #tpu.dot_dimension_numbers<[1], [0], [0], [1], [0, 0, 1, 1], [], []>} : vector<64x32xf32>, vector<32x32xf32>, vector<64x32xf32> -> vector<64x32xf32>
    %425 = arith.addf %356, %424 : vector<64x32xf32>
    %c30 = arith.constant 30 : index
    %c0_142 = arith.constant 0 : index
    %426 = vector.load %arg2[%c30, %c0_142] : memref<34x128xf32, #tpu.memory_space<vmem>>, vector<1x32xf32>
    %427 = vector.broadcast %426 : vector<1x32xf32> to vector<64x32xf32>
    %428 = arith.addf %425, %427 : vector<64x32xf32>
    %c31 = arith.constant 31 : index
    %c0_143 = arith.constant 0 : index
    %429 = vector.load %arg2[%c31, %c0_143] : memref<34x128xf32, #tpu.memory_space<vmem>>, vector<1x32xf32>
    %c32 = arith.constant 32 : index
    %c0_144 = arith.constant 0 : index
    %430 = vector.load %arg2[%c32, %c0_144] : memref<34x128xf32, #tpu.memory_space<vmem>>, vector<1x32xf32>
    %cst_145 = arith.constant dense<0.000000e+00> : vector<32xf32>
    %431 = vector.multi_reduction <add>, %428, %cst_145 [0] : vector<64x32xf32> to vector<32xf32>
    %432 = vector.shape_cast %431 : vector<32xf32> to vector<1x32xf32>
    %433 = arith.mulf %428, %428 : vector<64x32xf32>
    %cst_146 = arith.constant dense<0.000000e+00> : vector<32xf32>
    %434 = vector.multi_reduction <add>, %433, %cst_146 [0] : vector<64x32xf32> to vector<32xf32>
    %435 = vector.shape_cast %434 : vector<32xf32> to vector<1x32xf32>
    %cst_147 = arith.constant 1.562500e-02 : f32
    %436 = vector.broadcast %cst_147 : f32 to vector<1x32xf32>
    %437 = arith.mulf %432, %436 : vector<1x32xf32>
    %cst_148 = arith.constant 1.562500e-02 : f32
    %438 = vector.broadcast %cst_148 : f32 to vector<1x32xf32>
    %439 = arith.mulf %435, %438 : vector<1x32xf32>
    %440 = arith.mulf %437, %437 : vector<1x32xf32>
    %441 = arith.subf %439, %440 : vector<1x32xf32>
    %cst_149 = arith.constant 0.000000e+00 : f32
    %442 = vector.broadcast %cst_149 : f32 to vector<1x32xf32>
    %443 = arith.maximumf %441, %442 : vector<1x32xf32>
    %444 = vector.broadcast %437 : vector<1x32xf32> to vector<64x32xf32>
    %445 = arith.subf %428, %444 : vector<64x32xf32>
    %cst_150 = arith.constant 9.99999974E-6 : f32
    %446 = vector.broadcast %cst_150 : f32 to vector<1x32xf32>
    %447 = arith.addf %443, %446 : vector<1x32xf32>
    %448 = math.rsqrt %447 : vector<1x32xf32>
    %449 = vector.broadcast %448 : vector<1x32xf32> to vector<64x32xf32>
    %450 = arith.mulf %445, %449 : vector<64x32xf32>
    %451 = vector.broadcast %429 : vector<1x32xf32> to vector<64x32xf32>
    %452 = arith.mulf %450, %451 : vector<64x32xf32>
    %453 = vector.broadcast %430 : vector<1x32xf32> to vector<64x32xf32>
    %454 = arith.addf %452, %453 : vector<64x32xf32>
    %455 = arith.negf %454 : vector<64x32xf32>
    %456 = math.exp %455 : vector<64x32xf32>
    %cst_151 = arith.constant 1.000000e+00 : f32
    %457 = vector.broadcast %cst_151 : f32 to vector<64x32xf32>
    %458 = arith.addf %457, %456 : vector<64x32xf32>
    %459 = arith.divf %457, %458 : vector<64x32xf32>
    %460 = arith.mulf %454, %459 : vector<64x32xf32>
    %c664 = arith.constant 664 : index
    %c0_152 = arith.constant 0 : index
    %461 = vector.load %arg1[%c664, %c0_152] : memref<696x128xf32, #tpu.memory_space<vmem>>, vector<32x16xf32>
    %cst_153 = arith.constant dense<0.000000e+00> : vector<64x16xf32>
    %462 = tpu.matmul %460, %461, %cst_153 {dimension_numbers = #tpu.dot_dimension_numbers<[1], [0], [0], [1], [0, 0, 1, 1], [], []>} : vector<64x32xf32>, vector<32x16xf32>, vector<64x16xf32> -> vector<64x16xf32>
    %c33 = arith.constant 33 : index
    %c0_154 = arith.constant 0 : index
    %463 = vector.load %arg2[%c33, %c0_154] : memref<34x128xf32, #tpu.memory_space<vmem>>, vector<1x16xf32>
    %464 = vector.broadcast %463 : vector<1x16xf32> to vector<64x16xf32>
    %465 = arith.addf %462, %464 : vector<64x16xf32>
    %c0_155 = arith.constant 0 : index
    %c0_156 = arith.constant 0 : index
    %466 = vector.load %arg3[%c0_155, %c0_156] : memref<64x16xf32, #tpu.memory_space<vmem>>, vector<64x16xf32>
    tpu.vector_store %arg3[%c0_155, %c0_156], %465 {strides = array<i32>} : memref<64x16xf32, #tpu.memory_space<vmem>>, vector<64x16xf32>,
    return
  }
}

</mosaic_0001>

<llo_original>
// kernel: tpu_custom_call.1
$region0: #{tpu_custom_call.1}
  #allocation0 [shape = 'u32[]', space=smem, size = 0x4, offset = 0x4, fixed_abs, tag = 'smem constant byte address 0x4 - core index']
  #allocation1 [shape = 'u32[144,128]{1,0:T(1,128)}', space=vmem, size = 0x12000, scoped, tag = 'internal scratch']
  %s0 = inlined_call_operand.vmem [shape: f32[64,16], index: 0, kind: input, shape index: {}]
  %s1 = inlined_call_operand.hbm [shape: f32[696,128], index: 1, kind: input, shape index: {}]
  %s2 = inlined_call_operand.vmem [shape: f32[34,128], index: 2, kind: input, shape index: {}]
  %s3 = inlined_call_operand.vmem [shape: f32[64,16], index: 3, kind: output, shape index: {}]
  %s4 = sld [smem:[#allocation0]]
  $region26: #{tpu_custom_call.1} parent=0
    _
  %s6 = ssub.s32 1, %s4
  %s7 = scalar_select 0, %s6, %s4
  $region1: #{tpu_custom_call.1} parent=0
    #allocation2 [shape = 'u8[356352]{0}', space=vmem, size = 0x57000, scoped, tag = 'input window, operand 1, single buffered']
    #allocation3 [shape = 's32[1]{0}', space=sflag, size = 0x4, scoped, tag = 'scoped memory for tpu_custom_call.1']
    %8 = vsyncpa [#allocation3], 0
    // Predicated region
    $region2: #{tpu_custom_call.1} parent=1 // pred_check
      _
    $region3: #{tpu_custom_call.1} parent=1 // pred_check_branch
      %10 = sbr.rel (0) target = $region5
    $region4: #{tpu_custom_call.1} parent=1 // pred_region
      _
    $region5: #{tpu_custom_call.1} parent=1 // pred_fallthru
      _
    // Predicated region
    $region6: #{tpu_custom_call.1} parent=1 // pred_check
      _
    $region7: #{tpu_custom_call.1} parent=1 // pred_check_branch
      %12 = sbr.rel (0) target = $region9
    $region8: #{tpu_custom_call.1} parent=1 // pred_region
      %s14 = ssub.s32 11136, 11136
      %15 = vsyncadd [#allocation3], %s14
      %s16 = sshll.u32 [#allocation2], 4
      %s17 = int_to_ptr.vmem [resolvable:$true] %s16
      %22 = dma.hbm_to_vmem [thread:$0]  %s1, 11136, %s17, [#allocation3], 128, 128, 8
    $region9: #{tpu_custom_call.1} parent=1 // pred_fallthru
      _
    // Predicated region
    $region10: #{tpu_custom_call.1} parent=1 // pred_check
      _
    $region11: #{tpu_custom_call.1} parent=1 // pred_check_branch
      %24 = sbr.rel (0) target = $region13
    $region12: #{tpu_custom_call.1} parent=1 // pred_region
      _
    $region13: #{tpu_custom_call.1} parent=1 // pred_fallthru
      _
    // Predicated region
    $region14: #{tpu_custom_call.1} parent=1 // pred_check
      _
    $region15: #{tpu_custom_call.1} parent=1 // pred_check_branch
      %26 = sbr.rel (0) target = $region17
    $region16: #{tpu_custom_call.1} parent=1 // pred_region
      %27 = dma.done [#allocation3], 11136
    $region17: #{tpu_custom_call.1} parent=1 // pred_fallthru
      _
    %v28 = vld [vmem:[%s0] sm:$0xff]
    %v29 = vld [vmem:[%s0 + $0x8] sm:$0xff]
    %v30 = vld [vmem:[%s0 + $0x10] sm:$0xff]
    %v31 = vld [vmem:[%s0 + $0x18] sm:$0xff]
    %v32 = vld [vmem:[%s0 + $0x20] sm:$0xff]
    %v33 = vld [vmem:[%s0 + $0x28] sm:$0xff]
    %v34 = vld [vmem:[%s0 + $0x30] sm:$0xff]
    %v35 = vld [vmem:[%s0 + $0x38] sm:$0xff]
    %v36 = vld [vmem:[#allocation2] sm:$0xff]
    %v37 = vld [vmem:[#allocation2 + $0x8] sm:$0xff]
    %v38 = vld [vmem:[%s2] sm:$0x1]
    %v39 = vlaneseq
    %v40 = vshrl.u32 %v39, 7
    %v41 = vsub.s32 0, %v40
    %v42 = vrot.slane %v38, %v41
    %vm43 = vcmask 130048
    %v45 = vsel %vm43, %v28, 0
    %v48 = vsel %vm43, %v29, 0
    %v51 = vsel %vm43, %v30, 0
    %v54 = vsel %vm43, %v31, 0
    %v57 = vsel %vm43, %v32, 0
    %v60 = vsel %vm43, %v33, 0
    %v63 = vsel %vm43, %v34, 0
    %v66 = vsel %vm43, %v35, 0
    %68 = vmatprep.subr.mxu0 0.0
    %69 = vmatpush1.msra.mxu0 0.0
    %70 = vmatprep.subr.mxu0 0.0
    %71 = vmatpush1.msra.mxu0 0.0
    %72 = vmatprep.subr.mxu0 0.0
    %73 = vmatpush1.msra.mxu0 0.0
    %74 = vmatprep.subr.mxu0 0.0
    %75 = vmatpush1.msra.mxu0 0.0
    %76 = vmatprep.subr.mxu0 0.0
    %77 = vmatpush1.msra.mxu0 0.0
    %78 = vmatprep.subr.mxu0 0.0
    %79 = vmatpush1.msra.mxu0 0.0
    %80 = vmatprep.subr.mxu0 0.0
    %81 = vmatpush1.msra.mxu0 0.0
    %82 = vmatprep.subr.mxu0 0.0
    %83 = vmatpush1.msra.mxu0 0.0
    %84 = vmatprep.subr.mxu0 0.0
    %85 = vmatpush1.msra.mxu0 0.0
    %86 = vmatprep.subr.mxu0 0.0
    %87 = vmatpush1.msra.mxu0 0.0
    %88 = vmatprep.subr.mxu0 0.0
    %89 = vmatpush1.msra.mxu0 0.0
    %90 = vmatprep.subr.mxu0 0.0
    %91 = vmatpush1.msra.mxu0 0.0
    %92 = vmatprep.subr.mxu0 0.0
    %93 = vmatpush1.msra.mxu0 0.0
    %94 = vmatprep.subr.mxu0 0.0
    %95 = vmatpush1.msra.mxu0 0.0
    %96 = vmatprep.subr.mxu0 0.0
    %97 = vmatpush1.msra.mxu0 %v37
    %98 = vmatprep.subr.mxu0 0.0
    %99 = vmatpush1.msra.mxu0 %v36
    %100 = vmatprep.subr.mxu0 0.0
    %101 = vmatpush2.msra.mxu0 0.0
    %102 = vmatprep.subr.mxu0 0.0
    %103 = vmatpush2.msra.mxu0 0.0
    %104 = vmatprep.subr.mxu0 0.0
    %105 = vmatpush2.msra.mxu0 0.0
    %106 = vmatprep.subr.mxu0 0.0
    %107 = vmatpush2.msra.mxu0 0.0
    %108 = vmatprep.subr.mxu0 0.0
    %109 = vmatpush2.msra.mxu0 0.0
    %110 = vmatprep.subr.mxu0 0.0
    %111 = vmatpush2.msra.mxu0 0.0
    %112 = vmatprep.subr.mxu0 0.0
    %113 = vmatpush2.msra.mxu0 0.0
    %114 = vmatprep.subr.mxu0 0.0
    %115 = vmatpush2.msra.mxu0 0.0
    %116 = vmatprep.subr.mxu0 0.0
    %117 = vmatpush2.msra.mxu0 0.0
    %118 = vmatprep.subr.mxu0 0.0
    %119 = vmatpush2.msra.mxu0 0.0
    %120 = vmatprep.subr.mxu0 0.0
    %121 = vmatpush2.msra.mxu0 0.0
    %122 = vmatprep.subr.mxu0 0.0
    %123 = vmatpush2.msra.mxu0 0.0
    %124 = vmatprep.subr.mxu0 0.0
    %125 = vmatpush2.msra.mxu0 0.0
    %126 = vmatprep.subr.mxu0 0.0
    %127 = vmatpush2.msra.mxu0 0.0
    %128 = vmatprep.subr.mxu0 0.0
    %129 = vmatpush2.msra.mxu0 0.0
    %130 = vmatprep.subr.mxu0 0.0
    %131 = vmatpush2.msra.mxu0 0.0
    %132 = vmatprep.mubr.f32.mxu0 0.0
    %133 = vmatmul.mubr.f32.gmra.mxu0 %v45
    %v134 = vpop.f32.mrf.mxu0
    %v135 = vadd.f32 %v42, %v134
    %v136 = vpop.f32.mrf.mxu0
    %137 = vmatprep.mubr.f32.mxu0 0.0
    %138 = vmatmul.mubr.f32.gmra.mxu0 %v48
    %v139 = vpop.f32.mrf.mxu0
    %v140 = vadd.f32 %v42, %v139
    %v141 = vpop.f32.mrf.mxu0
    %142 = vmatprep.mubr.f32.mxu0 0.0
    %143 = vmatmul.mubr.f32.gmra.mxu0 %v51
    %v144 = vpop.f32.mrf.mxu0
    %v145 = vadd.f32 %v42, %v144
    %v146 = vpop.f32.mrf.mxu0
    %147 = vmatprep.mubr.f32.mxu0 0.0
    %148 = vmatmul.mubr.f32.gmra.mxu0 %v54
    %v149 = vpop.f32.mrf.mxu0
    %v150 = vadd.f32 %v42, %v149
    %v151 = vpop.f32.mrf.mxu0
    %152 = vmatprep.mubr.f32.mxu0 0.0
    %153 = vmatmul.mubr.f32.gmra.mxu0 %v57
    %v154 = vpop.f32.mrf.mxu0
    %v155 = vadd.f32 %v42, %v154
    %v156 = vpop.f32.mrf.mxu0
    %157 = vmatprep.mubr.f32.mxu0 0.0
    %158 = vmatmul.mubr.f32.gmra.mxu0 %v60
    %v159 = vpop.f32.mrf.mxu0
    %v160 = vadd.f32 %v42, %v159
    %v161 = vpop.f32.mrf.mxu0
    %162 = vmatprep.mubr.f32.mxu0 0.0
    %163 = vmatmul.mubr.f32.gmra.mxu0 %v63
    %v164 = vpop.f32.mrf.mxu0
    %v165 = vadd.f32 %v42, %v164
    %v166 = vpop.f32.mrf.mxu0
    %167 = vmatprep.mubr.f32.mxu0 0.0
    %168 = vmatmul.mubr.f32.gmra.mxu0 %v66
    %v169 = vpop.f32.mrf.mxu0
    %v170 = vadd.f32 %v42, %v169
    %v171 = vpop.f32.mrf.mxu0
    %172 = vdwg.mxu0
    %v173 = vld [vmem:[%s2 + $0x1] sm:$0x1]
    %v174 = vld [vmem:[%s2 + $0x2] sm:$0x1]
    %vm175 = vcmask 261120
    %v176 = vsel %vm175, %v135, 0.0
    %v177 = vsel %vm175, %v140, 0.0
    %v178 = vadd.f32 %v176, %v177
    %v179 = vsel %vm175, %v145, 0.0
    %v180 = vadd.f32 %v178, %v179
    %v181 = vsel %vm175, %v150, 0.0
    %v182 = vadd.f32 %v180, %v181
    %v183 = vsel %vm175, %v155, 0.0
    %v184 = vadd.f32 %v182, %v183
    %v185 = vsel %vm175, %v160, 0.0
    %v186 = vadd.f32 %v184, %v185
    %v187 = vsel %vm175, %v165, 0.0
    %v188 = vadd.f32 %v186, %v187
    %v189 = vsel %vm175, %v170, 0.0
    %v190 = vadd.f32 %v188, %v189
    %v191 = vrot.slane %v190, 4
    %v192 = vadd.f32 %v190, %v191
    %v193 = vrot.slane %v192, 2
    %v194 = vadd.f32 %v192, %v193
    %v195 = vrot.slane %v194, 1
    %v196 = vadd.f32 %v194, %v195
    %v197 = vmul.f32 %v135, %v135
    %v198 = vmul.f32 %v140, %v140
    %v199 = vmul.f32 %v145, %v145
    %v200 = vmul.f32 %v150, %v150
    %v201 = vmul.f32 %v155, %v155
    %v202 = vmul.f32 %v160, %v160
    %v203 = vmul.f32 %v165, %v165
    %v204 = vmul.f32 %v170, %v170
    %v205 = vsel %vm175, %v197, 0.0
    %v206 = vsel %vm175, %v198, 0.0
    %v207 = vadd.f32 %v205, %v206
    %v208 = vsel %vm175, %v199, 0.0
    %v209 = vadd.f32 %v207, %v208
    %v210 = vsel %vm175, %v200, 0.0
    %v211 = vadd.f32 %v209, %v210
    %v212 = vsel %vm175, %v201, 0.0
    %v213 = vadd.f32 %v211, %v212
    %v214 = vsel %vm175, %v202, 0.0
    %v215 = vadd.f32 %v213, %v214
    %v216 = vsel %vm175, %v203, 0.0
    %v217 = vadd.f32 %v215, %v216
    %v218 = vsel %vm175, %v204, 0.0
    %v219 = vadd.f32 %v217, %v218
    %v220 = vrot.slane %v219, 4
    %v221 = vadd.f32 %v219, %v220
    %v222 = vrot.slane %v221, 2
    %v223 = vadd.f32 %v221, %v222
    %v224 = vrot.slane %v223, 1
    %v225 = vadd.f32 %v223, %v224
    %v226 = vmul.f32 %v196, 0.015625
    %v227 = vmul.f32 %v225, 0.015625
    %v228 = vmul.f32 %v226, %v226
    %v229 = vsub.f32 %v227, %v228
    %v230 = vmax.f32 %v229, 0.0
    %v231 = vsub.f32 %v135, %v226
    %v232 = vsub.f32 %v140, %v226
    %v233 = vsub.f32 %v145, %v226
    %v234 = vsub.f32 %v150, %v226
    %v235 = vsub.f32 %v155, %v226
    %v236 = vsub.f32 %v160, %v226
    %v237 = vsub.f32 %v165, %v226
    %v238 = vsub.f32 %v170, %v226
    %v239 = vadd.f32 %v230, 1e-05
    %v240 = vrsqrt.pop %v239
    %v241 = vmul.f32 %v231, %v240
    %v242 = vmul.f32 %v232, %v240
    %v243 = vmul.f32 %v233, %v240
    %v244 = vmul.f32 %v234, %v240
    %v245 = vmul.f32 %v235, %v240
    %v246 = vmul.f32 %v236, %v240
    %v247 = vmul.f32 %v237, %v240
    %v248 = vmul.f32 %v238, %v240
    %v249 = vlaneseq
    %v250 = vshrl.u32 %v249, 7
    %v251 = vsub.s32 0, %v250
    %v252 = vrot.slane %v173, %v251
    %v253 = vmul.f32 %v241, %v252
    %v254 = vmul.f32 %v242, %v252
    %v255 = vmul.f32 %v243, %v252
    %v256 = vmul.f32 %v244, %v252
    %v257 = vmul.f32 %v245, %v252
    %v258 = vmul.f32 %v246, %v252
    %v259 = vmul.f32 %v247, %v252
    %v260 = vmul.f32 %v248, %v252
    %v261 = vlaneseq
    %v262 = vshrl.u32 %v261, 7
    %v263 = vsub.s32 0, %v262
    %v264 = vrot.slane %v174, %v263
    %v265 = vadd.f32 %v253, %v264
    %v266 = vadd.f32 %v254, %v264
    %v267 = vadd.f32 %v255, %v264
    %v268 = vadd.f32 %v256, %v264
    %v269 = vadd.f32 %v257, %v264
    %v270 = vadd.f32 %v258, %v264
    %v271 = vadd.f32 %v259, %v264
    %v272 = vadd.f32 %v260, %v264
    %v273 = vxor.u32 %v265, 2147483648
    %v274 = vxor.u32 %v266, 2147483648
    %v275 = vxor.u32 %v267, 2147483648
    %v276 = vxor.u32 %v268, 2147483648
    %v277 = vxor.u32 %v269, 2147483648
    %v278 = vxor.u32 %v270, 2147483648
    %v279 = vxor.u32 %v271, 2147483648
    %v280 = vxor.u32 %v272, 2147483648
    %v281 = vmul.f32 %v273, 1.442695
    %v282 = vpow.pop %v281
    %v283 = vmul.f32 %v274, 1.442695
    %v284 = vpow.pop %v283
    %v285 = vmul.f32 %v275, 1.442695
    %v286 = vpow.pop %v285
    %v287 = vmul.f32 %v276, 1.442695
    %v288 = vpow.pop %v287
    %v289 = vmul.f32 %v277, 1.442695
    %v290 = vpow.pop %v289
    %v291 = vmul.f32 %v278, 1.442695
    %v292 = vpow.pop %v291
    %v293 = vmul.f32 %v279, 1.442695
    %v294 = vpow.pop %v293
    %v295 = vmul.f32 %v280, 1.442695
    %v296 = vpow.pop %v295
    %v297 = vadd.f32 %v282, 1.0
    %v298 = vadd.f32 %v284, 1.0
    %v299 = vadd.f32 %v286, 1.0
    %v300 = vadd.f32 %v288, 1.0
    %v301 = vadd.f32 %v290, 1.0
    %v302 = vadd.f32 %v292, 1.0
    %v303 = vadd.f32 %v294, 1.0
    %v304 = vadd.f32 %v296, 1.0
    %v305 = vrcp.pop %v297
    %v306 = vmul.f32 1.0, %v305
    %v307 = vrcp.pop %v298
    %v308 = vmul.f32 1.0, %v307
    %v309 = vrcp.pop %v299
    %v310 = vmul.f32 1.0, %v309
    %v311 = vrcp.pop %v300
    %v312 = vmul.f32 1.0, %v311
    %v313 = vrcp.pop %v301
    %v314 = vmul.f32 1.0, %v313
    %v315 = vrcp.pop %v302
    %v316 = vmul.f32 1.0, %v315
    %v317 = vrcp.pop %v303
    %v318 = vmul.f32 1.0, %v317
    %v319 = vrcp.pop %v304
    %v320 = vmul.f32 1.0, %v319
    %v321 = vmul.f32 %v265, %v306
    %v322 = vmul.f32 %v266, %v308
    %v323 = vmul.f32 %v267, %v310
    %v324 = vmul.f32 %v268, %v312
    %v325 = vmul.f32 %v269, %v314
    %v326 = vmul.f32 %v270, %v316
    %v327 = vmul.f32 %v271, %v318
    %v328 = vmul.f32 %v272, %v320
    %v329 = vld [vmem:[#allocation2 + $0x10] sm:$0xff]
    %v330 = vld [vmem:[#allocation2 + $0x18] sm:$0xff]
    %v331 = vld [vmem:[#allocation2 + $0x20] sm:$0xff]
    %v332 = vld [vmem:[#allocation2 + $0x28] sm:$0xff]
    %v334 = vsel %vm175, %v321, 0
    %v337 = vsel %vm175, %v322, 0
    %v340 = vsel %vm175, %v323, 0
    %v343 = vsel %vm175, %v324, 0
    %v346 = vsel %vm175, %v325, 0
    %v349 = vsel %vm175, %v326, 0
    %v352 = vsel %vm175, %v327, 0
    %v355 = vsel %vm175, %v328, 0
    %357 = vmatprep.subr.mxu0 0.0
    %358 = vmatpush1.msra.mxu0 0.0
    %359 = vmatprep.subr.mxu0 0.0
    %360 = vmatpush1.msra.mxu0 0.0
    %361 = vmatprep.subr.mxu0 0.0
    %362 = vmatpush1.msra.mxu0 0.0
    %363 = vmatprep.subr.mxu0 0.0
    %364 = vmatpush1.msra.mxu0 0.0
    %365 = vmatprep.subr.mxu0 0.0
    %366 = vmatpush1.msra.mxu0 0.0
    %367 = vmatprep.subr.mxu0 0.0
    %368 = vmatpush1.msra.mxu0 0.0
    %369 = vmatprep.subr.mxu0 0.0
    %370 = vmatpush1.msra.mxu0 0.0
    %371 = vmatprep.subr.mxu0 0.0
    %372 = vmatpush1.msra.mxu0 0.0
    %373 = vmatprep.subr.mxu0 0.0
    %374 = vmatpush1.msra.mxu0 0.0
    %375 = vmatprep.subr.mxu0 0.0
    %376 = vmatpush1.msra.mxu0 0.0
    %377 = vmatprep.subr.mxu0 0.0
    %378 = vmatpush1.msra.mxu0 0.0
    %379 = vmatprep.subr.mxu0 0.0
    %380 = vmatpush1.msra.mxu0 0.0
    %381 = vmatprep.subr.mxu0 0.0
    %382 = vmatpush1.msra.mxu0 %v332
    %383 = vmatprep.subr.mxu0 0.0
    %384 = vmatpush1.msra.mxu0 %v331
    %385 = vmatprep.subr.mxu0 0.0
    %386 = vmatpush1.msra.mxu0 %v330
    %387 = vmatprep.subr.mxu0 0.0
    %388 = vmatpush1.msra.mxu0 %v329
    %389 = vmatprep.subr.mxu0 0.0
    %390 = vmatpush2.msra.mxu0 0.0
    %391 = vmatprep.subr.mxu0 0.0
    %392 = vmatpush2.msra.mxu0 0.0
    %393 = vmatprep.subr.mxu0 0.0
    %394 = vmatpush2.msra.mxu0 0.0
    %395 = vmatprep.subr.mxu0 0.0
    %396 = vmatpush2.msra.mxu0 0.0
    %397 = vmatprep.subr.mxu0 0.0
    %398 = vmatpush2.msra.mxu0 0.0
    %399 = vmatprep.subr.mxu0 0.0
    %400 = vmatpush2.msra.mxu0 0.0
    %401 = vmatprep.subr.mxu0 0.0
    %402 = vmatpush2.msra.mxu0 0.0
    %403 = vmatprep.subr.mxu0 0.0
    %404 = vmatpush2.msra.mxu0 0.0
    %405 = vmatprep.subr.mxu0 0.0
    %406 = vmatpush2.msra.mxu0 0.0
    %407 = vmatprep.subr.mxu0 0.0
    %408 = vmatpush2.msra.mxu0 0.0
    %409 = vmatprep.subr.mxu0 0.0
    %410 = vmatpush2.msra.mxu0 0.0
    %411 = vmatprep.subr.mxu0 0.0
    %412 = vmatpush2.msra.mxu0 0.0
    %413 = vmatprep.subr.mxu0 0.0
    %414 = vmatpush2.msra.mxu0 0.0
    %415 = vmatprep.subr.mxu0 0.0
    %416 = vmatpush2.msra.mxu0 0.0
    %417 = vmatprep.subr.mxu0 0.0
    %418 = vmatpush2.msra.mxu0 0.0
    %419 = vmatprep.subr.mxu0 0.0
    %420 = vmatpush2.msra.mxu0 0.0
    %421 = vmatprep.mubr.f32.mxu0 0.0
    %422 = vmatmul.mubr.f32.gmra.mxu0 %v334
    %v423 = vpop.f32.mrf.mxu0
    %v424 = vadd.f32 0.0, %v423
    %v425 = vpop.f32.mrf.mxu0
    %426 = vmatprep.mubr.f32.mxu0 0.0
    %427 = vmatmul.mubr.f32.gmra.mxu0 %v337
    %v428 = vpop.f32.mrf.mxu0
    %v429 = vadd.f32 0.0, %v428
    %v430 = vpop.f32.mrf.mxu0
    %431 = vmatprep.mubr.f32.mxu0 0.0
    %432 = vmatmul.mubr.f32.gmra.mxu0 %v340
    %v433 = vpop.f32.mrf.mxu0
    %v434 = vadd.f32 0.0, %v433
    %v435 = vpop.f32.mrf.mxu0
    %436 = vmatprep.mubr.f32.mxu0 0.0
    %437 = vmatmul.mubr.f32.gmra.mxu0 %v343
    %v438 = vpop.f32.mrf.mxu0
    %v439 = vadd.f32 0.0, %v438
    %v440 = vpop.f32.mrf.mxu0
    %441 = vmatprep.mubr.f32.mxu0 0.0
    %442 = vmatmul.mubr.f32.gmra.mxu0 %v346
    %v443 = vpop.f32.mrf.mxu0
    %v444 = vadd.f32 0.0, %v443
    %v445 = vpop.f32.mrf.mxu0
    %446 = vmatprep.mubr.f32.mxu0 0.0
    %447 = vmatmul.mubr.f32.gmra.mxu0 %v349
    %v448 = vpop.f32.mrf.mxu0
    %v449 = vadd.f32 0.0, %v448
    %v450 = vpop.f32.mrf.mxu0
    %451 = vmatprep.mubr.f32.mxu0 0.0
    %452 = vmatmul.mubr.f32.gmra.mxu0 %v352
    %v453 = vpop.f32.mrf.mxu0
    %v454 = vadd.f32 0.0, %v453
    %v455 = vpop.f32.mrf.mxu0
    %456 = vmatprep.mubr.f32.mxu0 0.0
    %457 = vmatmul.mubr.f32.gmra.mxu0 %v355
    %v458 = vpop.f32.mrf.mxu0
    %v459 = vadd.f32 0.0, %v458
    %v460 = vpop.f32.mrf.mxu0
    %461 = vdwg.mxu0
    %v462 = vld [vmem:[%s2 + $0x3] sm:$0x1]
    %v463 = vld [vmem:[%s2 + $0x4] sm:$0x1]
    %vm464 = vcmask 523264
    %v465 = vsel %vm464, %v424, 0.0
    %v466 = vsel %vm464, %v429, 0.0
    %v467 = vadd.f32 %v465, %v466
    %v468 = vsel %vm464, %v434, 0.0
    %v469 = vadd.f32 %v467, %v468
    %v470 = vsel %vm464, %v439, 0.0
    %v471 = vadd.f32 %v469, %v470
    %v472 = vsel %vm464, %v444, 0.0
    %v473 = vadd.f32 %v471, %v472
    %v474 = vsel %vm464, %v449, 0.0
    %v475 = vadd.f32 %v473, %v474
    %v476 = vsel %vm464, %v454, 0.0
    %v477 = vadd.f32 %v475, %v476
    %v478 = vsel %vm464, %v459, 0.0
    %v479 = vadd.f32 %v477, %v478
    %v480 = vrot.slane %v479, 4
    %v481 = vadd.f32 %v479, %v480
    %v482 = vrot.slane %v481, 2
    %v483 = vadd.f32 %v481, %v482
    %v484 = vrot.slane %v483, 1
    %v485 = vadd.f32 %v483, %v484
    %v486 = vmul.f32 %v424, %v424
    %v487 = vmul.f32 %v429, %v429
    %v488 = vmul.f32 %v434, %v434
    %v489 = vmul.f32 %v439, %v439
    %v490 = vmul.f32 %v444, %v444
    %v491 = vmul.f32 %v449, %v449
    %v492 = vmul.f32 %v454, %v454
    %v493 = vmul.f32 %v459, %v459
    %v494 = vsel %vm464, %v486, 0.0
    %v495 = vsel %vm464, %v487, 0.0
    %v496 = vadd.f32 %v494, %v495
    %v497 = vsel %vm464, %v488, 0.0
    %v498 = vadd.f32 %v496, %v497
    %v499 = vsel %vm464, %v489, 0.0
    %v500 = vadd.f32 %v498, %v499
    %v501 = vsel %vm464, %v490, 0.0
    %v502 = vadd.f32 %v500, %v501
    %v503 = vsel %vm464, %v491, 0.0
    %v504 = vadd.f32 %v502, %v503
    %v505 = vsel %vm464, %v492, 0.0
    %v506 = vadd.f32 %v504, %v505
    %v507 = vsel %vm464, %v493, 0.0
    %v508 = vadd.f32 %v506, %v507
    %v509 = vrot.slane %v508, 4
    %v510 = vadd.f32 %v508, %v509
    %v511 = vrot.slane %v510, 2
    %v512 = vadd.f32 %v510, %v511
    %v513 = vrot.slane %v512, 1
    %v514 = vadd.f32 %v512, %v513
    %v515 = vmul.f32 %v485, 0.015625
    %v516 = vmul.f32 %v514, 0.015625
    %v517 = vmul.f32 %v515, %v515
    %v518 = vsub.f32 %v516, %v517
    %v519 = vmax.f32 %v518, 0.0
    %v520 = vsub.f32 %v424, %v515
    %v521 = vsub.f32 %v429, %v515
    %v522 = vsub.f32 %v434, %v515
    %v523 = vsub.f32 %v439, %v515
    %v524 = vsub.f32 %v444, %v515
    %v525 = vsub.f32 %v449, %v515
    %v526 = vsub.f32 %v454, %v515
    %v527 = vsub.f32 %v459, %v515
    %v528 = vadd.f32 %v519, 1e-05
    %v529 = vrsqrt.pop %v528
    %v530 = vmul.f32 %v520, %v529
    %v531 = vmul.f32 %v521, %v529
    %v532 = vmul.f32 %v522, %v529
    %v533 = vmul.f32 %v523, %v529
    %v534 = vmul.f32 %v524, %v529
    %v535 = vmul.f32 %v525, %v529
    %v536 = vmul.f32 %v526, %v529
    %v537 = vmul.f32 %v527, %v529
    %v538 = vlaneseq
    %v539 = vshrl.u32 %v538, 7
    %v540 = vsub.s32 0, %v539
    %v541 = vrot.slane %v462, %v540
    %v542 = vmul.f32 %v530, %v541
    %v543 = vmul.f32 %v531, %v541
    %v544 = vmul.f32 %v532, %v541
    %v545 = vmul.f32 %v533, %v541
    %v546 = vmul.f32 %v534, %v541
    %v547 = vmul.f32 %v535, %v541
    %v548 = vmul.f32 %v536, %v541
    %v549 = vmul.f32 %v537, %v541
    %v550 = vlaneseq
    %v551 = vshrl.u32 %v550, 7
    %v552 = vsub.s32 0, %v551
    %v553 = vrot.slane %v463, %v552
    %v554 = vadd.f32 %v542, %v553
    %v555 = vadd.f32 %v543, %v553
    %v556 = vadd.f32 %v544, %v553
    %v557 = vadd.f32 %v545, %v553
    %v558 = vadd.f32 %v546, %v553
    %v559 = vadd.f32 %v547, %v553
    %v560 = vadd.f32 %v548, %v553
    %v561 = vadd.f32 %v549, %v553
    %v562 = vxor.u32 %v554, 2147483648
    %v563 = vxor.u32 %v555, 2147483648
    %v564 = vxor.u32 %v556, 2147483648
    %v565 = vxor.u32 %v557, 2147483648
    %v566 = vxor.u32 %v558, 2147483648
    %v567 = vxor.u32 %v559, 2147483648
    %v568 = vxor.u32 %v560, 2147483648
    %v569 = vxor.u32 %v561, 2147483648
    %v570 = vmul.f32 %v562, 1.442695
    %v571 = vpow.pop %v570
    %v572 = vmul.f32 %v563, 1.442695
    %v573 = vpow.pop %v572
    %v574 = vmul.f32 %v564, 1.442695
    %v575 = vpow.pop %v574
    %v576 = vmul.f32 %v565, 1.442695
    %v577 = vpow.pop %v576
    %v578 = vmul.f32 %v566, 1.442695
    %v579 = vpow.pop %v578
    %v580 = vmul.f32 %v567, 1.442695
    %v581 = vpow.pop %v580
    %v582 = vmul.f32 %v568, 1.442695
    %v583 = vpow.pop %v582
    %v584 = vmul.f32 %v569, 1.442695
    %v585 = vpow.pop %v584
    %v586 = vadd.f32 %v571, 1.0
    %v587 = vadd.f32 %v573, 1.0
    %v588 = vadd.f32 %v575, 1.0
    %v589 = vadd.f32 %v577, 1.0
    %v590 = vadd.f32 %v579, 1.0
    %v591 = vadd.f32 %v581, 1.0
    %v592 = vadd.f32 %v583, 1.0
    %v593 = vadd.f32 %v585, 1.0
    %v594 = vrcp.pop %v586
    %v595 = vmul.f32 1.0, %v594
    %v596 = vrcp.pop %v587
    %v597 = vmul.f32 1.0, %v596
    %v598 = vrcp.pop %v588
    %v599 = vmul.f32 1.0, %v598
    %v600 = vrcp.pop %v589
    %v601 = vmul.f32 1.0, %v600
    %v602 = vrcp.pop %v590
    %v603 = vmul.f32 1.0, %v602
    %v604 = vrcp.pop %v591
    %v605 = vmul.f32 1.0, %v604
    %v606 = vrcp.pop %v592
    %v607 = vmul.f32 1.0, %v606
    %v608 = vrcp.pop %v593
    %v609 = vmul.f32 1.0, %v608
    %v610 = vmul.f32 %v554, %v595
    %v611 = vmul.f32 %v555, %v597
    %v612 = vmul.f32 %v556, %v599
    %v613 = vmul.f32 %v557, %v601
    %v614 = vmul.f32 %v558, %v603
    %v615 = vmul.f32 %v559, %v605
    %v616 = vmul.f32 %v560, %v607
    %v617 = vmul.f32 %v561, %v609
    %626 = vrot.lane.b32.xlu0 %v135, 64
    %v627 = vpop.permute.xlu0 %626
    %628 = vrot.lane.b32.xlu0 %v140, 64
    %v629 = vpop.permute.xlu0 %628
    %630 = vrot.lane.b32.xlu0 %v145, 64
    %v631 = vpop.permute.xlu0 %630
    %632 = vrot.lane.b32.xlu0 %v150, 64
    %v633 = vpop.permute.xlu0 %632
    %634 = vrot.lane.b32.xlu0 %v155, 64
    %v635 = vpop.permute.xlu0 %634
    %636 = vrot.lane.b32.xlu0 %v160, 64
    %v637 = vpop.permute.xlu0 %636
    %638 = vrot.lane.b32.xlu0 %v165, 64
    %v639 = vpop.permute.xlu0 %638
    %640 = vrot.lane.b32.xlu0 %v170, 64
    %v641 = vpop.permute.xlu0 %640
    %v650 = vsel %vm464, %v610, %v627
    %v651 = vsel %vm464, %v611, %v629
    %v652 = vsel %vm464, %v612, %v631
    %v653 = vsel %vm464, %v613, %v633
    %v654 = vsel %vm464, %v614, %v635
    %v655 = vsel %vm464, %v615, %v637
    %v656 = vsel %vm464, %v616, %v639
    %v657 = vsel %vm464, %v617, %v641
    %v658 = vld [vmem:[#allocation2 + $0x30] sm:$0xff]
    %v659 = vld [vmem:[#allocation2 + $0x38] sm:$0xff]
    %v660 = vld [vmem:[#allocation2 + $0x40] sm:$0xff]
    %v661 = vld [vmem:[#allocation2 + $0x48] sm:$0xff]
    %v662 = vld [vmem:[#allocation2 + $0x50] sm:$0xff]
    %v663 = vld [vmem:[#allocation2 + $0x58] sm:$0xff]
    %v664 = vld [vmem:[#allocation2 + $0x60] sm:$0xff]
    %v665 = vld [vmem:[#allocation2 + $0x68] sm:$0xff]
    %v666 = vld [vmem:[#allocation2 + $0x70] sm:$0xff]
    %v667 = vld [vmem:[#allocation2 + $0x78] sm:$0xff]
    %v668 = vld [vmem:[#allocation2 + $0x80] sm:$0xff]
    %v669 = vld [vmem:[#allocation2 + $0x88] sm:$0xff]
    %v670 = vld [vmem:[%s2 + $0x5] sm:$0x1]
    %v671 = vlaneseq
    %v672 = vshrl.u32 %v671, 7
    %v673 = vsub.s32 0, %v672
    %v674 = vrot.slane %v670, %v673
    %vm675 = vcmask 785408
    %v677 = vsel %vm675, %v650, 0
    %v680 = vsel %vm675, %v651, 0
    %v683 = vsel %vm675, %v652, 0
    %v686 = vsel %vm675, %v653, 0
    %v689 = vsel %vm675, %v654, 0
    %v692 = vsel %vm675, %v655, 0
    %v695 = vsel %vm675, %v656, 0
    %v698 = vsel %vm675, %v657, 0
    %700 = vmatprep.subr.mxu0 0.0
    %701 = vmatpush1.msra.mxu0 0.0
    %702 = vmatprep.subr.mxu0 0.0
    %703 = vmatpush1.msra.mxu0 0.0
    %704 = vmatprep.subr.mxu0 0.0
    %705 = vmatpush1.msra.mxu0 0.0
    %706 = vmatprep.subr.mxu0 0.0
    %707 = vmatpush1.msra.mxu0 0.0
    %708 = vmatprep.subr.mxu0 0.0
    %709 = vmatpush1.msra.mxu0 %v669
    %710 = vmatprep.subr.mxu0 0.0
    %711 = vmatpush1.msra.mxu0 %v668
    %712 = vmatprep.subr.mxu0 0.0
    %713 = vmatpush1.msra.mxu0 %v667
    %714 = vmatprep.subr.mxu0 0.0
    %715 = vmatpush1.msra.mxu0 %v666
    %716 = vmatprep.subr.mxu0 0.0
    %717 = vmatpush1.msra.mxu0 %v665
    %718 = vmatprep.subr.mxu0 0.0
    %719 = vmatpush1.msra.mxu0 %v664
    %720 = vmatprep.subr.mxu0 0.0
    %721 = vmatpush1.msra.mxu0 %v663
    %722 = vmatprep.subr.mxu0 0.0
    %723 = vmatpush1.msra.mxu0 %v662
    %724 = vmatprep.subr.mxu0 0.0
    %725 = vmatpush1.msra.mxu0 %v661
    %726 = vmatprep.subr.mxu0 0.0
    %727 = vmatpush1.msra.mxu0 %v660
    %728 = vmatprep.subr.mxu0 0.0
    %729 = vmatpush1.msra.mxu0 %v659
    %730 = vmatprep.subr.mxu0 0.0
    %731 = vmatpush1.msra.mxu0 %v658
    %732 = vmatprep.subr.mxu0 0.0
    %733 = vmatpush2.msra.mxu0 0.0
    %734 = vmatprep.subr.mxu0 0.0
    %735 = vmatpush2.msra.mxu0 0.0
    %736 = vmatprep.subr.mxu0 0.0
    %737 = vmatpush2.msra.mxu0 0.0
    %738 = vmatprep.subr.mxu0 0.0
    %739 = vmatpush2.msra.mxu0 0.0
    %740 = vmatprep.subr.mxu0 0.0
    %741 = vmatpush2.msra.mxu0 0.0
    %742 = vmatprep.subr.mxu0 0.0
    %743 = vmatpush2.msra.mxu0 0.0
    %744 = vmatprep.subr.mxu0 0.0
    %745 = vmatpush2.msra.mxu0 0.0
    %746 = vmatprep.subr.mxu0 0.0
    %747 = vmatpush2.msra.mxu0 0.0
    %748 = vmatprep.subr.mxu0 0.0
    %749 = vmatpush2.msra.mxu0 0.0
    %750 = vmatprep.subr.mxu0 0.0
    %751 = vmatpush2.msra.mxu0 0.0
    %752 = vmatprep.subr.mxu0 0.0
    %753 = vmatpush2.msra.mxu0 0.0
    %754 = vmatprep.subr.mxu0 0.0
    %755 = vmatpush2.msra.mxu0 0.0
    %756 = vmatprep.subr.mxu0 0.0
    %757 = vmatpush2.msra.mxu0 0.0
    %758 = vmatprep.subr.mxu0 0.0
    %759 = vmatpush2.msra.mxu0 0.0
    %760 = vmatprep.subr.mxu0 0.0
    %761 = vmatpush2.msra.mxu0 0.0
    %762 = vmatprep.subr.mxu0 0.0
    %763 = vmatpush2.msra.mxu0 0.0
    %764 = vmatprep.mubr.f32.mxu0 0.0
    %765 = vmatmul.mubr.f32.gmra.mxu0 %v677
    %v766 = vpop.f32.mrf.mxu0
    %v767 = vadd.f32 %v674, %v766
    %v768 = vpop.f32.mrf.mxu0
    %769 = vmatprep.mubr.f32.mxu0 0.0
    %770 = vmatmul.mubr.f32.gmra.mxu0 %v680
    %v771 = vpop.f32.mrf.mxu0
    %v772 = vadd.f32 %v674, %v771
    %v773 = vpop.f32.mrf.mxu0
    %774 = vmatprep.mubr.f32.mxu0 0.0
    %775 = vmatmul.mubr.f32.gmra.mxu0 %v683
    %v776 = vpop.f32.mrf.mxu0
    %v777 = vadd.f32 %v674, %v776
    %v778 = vpop.f32.mrf.mxu0
    %779 = vmatprep.mubr.f32.mxu0 0.0
    %780 = vmatmul.mubr.f32.gmra.mxu0 %v686
    %v781 = vpop.f32.mrf.mxu0
    %v782 = vadd.f32 %v674, %v781
    %v783 = vpop.f32.mrf.mxu0
    %784 = vmatprep.mubr.f32.mxu0 0.0
    %785 = vmatmul.mubr.f32.gmra.mxu0 %v689
    %v786 = vpop.f32.mrf.mxu0
    %v787 = vadd.f32 %v674, %v786
    %v788 = vpop.f32.mrf.mxu0
    %789 = vmatprep.mubr.f32.mxu0 0.0
    %790 = vmatmul.mubr.f32.gmra.mxu0 %v692
    %v791 = vpop.f32.mrf.mxu0
    %v792 = vadd.f32 %v674, %v791
    %v793 = vpop.f32.mrf.mxu0
    %794 = vmatprep.mubr.f32.mxu0 0.0
    %795 = vmatmul.mubr.f32.gmra.mxu0 %v695
    %v796 = vpop.f32.mrf.mxu0
    %v797 = vadd.f32 %v674, %v796
    %v798 = vpop.f32.mrf.mxu0
    %799 = vmatprep.mubr.f32.mxu0 0.0
    %800 = vmatmul.mubr.f32.gmra.mxu0 %v698
    %v801 = vpop.f32.mrf.mxu0
    %v802 = vadd.f32 %v674, %v801
    %v803 = vpop.f32.mrf.mxu0
    %804 = vdwg.mxu0
    %v805 = vld [vmem:[%s2 + $0x6] sm:$0x1]
    %v806 = vld [vmem:[%s2 + $0x7] sm:$0x1]
    %v807 = vsel %vm464, %v767, 0.0
    %v808 = vsel %vm464, %v772, 0.0
    %v809 = vadd.f32 %v807, %v808
    %v810 = vsel %vm464, %v777, 0.0
    %v811 = vadd.f32 %v809, %v810
    %v812 = vsel %vm464, %v782, 0.0
    %v813 = vadd.f32 %v811, %v812
    %v814 = vsel %vm464, %v787, 0.0
    %v815 = vadd.f32 %v813, %v814
    %v816 = vsel %vm464, %v792, 0.0
    %v817 = vadd.f32 %v815, %v816
    %v818 = vsel %vm464, %v797, 0.0
    %v819 = vadd.f32 %v817, %v818
    %v820 = vsel %vm464, %v802, 0.0
    %v821 = vadd.f32 %v819, %v820
    %v822 = vrot.slane %v821, 4
    %v823 = vadd.f32 %v821, %v822
    %v824 = vrot.slane %v823, 2
    %v825 = vadd.f32 %v823, %v824
    %v826 = vrot.slane %v825, 1
    %v827 = vadd.f32 %v825, %v826
    %v828 = vmul.f32 %v767, %v767
    %v829 = vmul.f32 %v772, %v772
    %v830 = vmul.f32 %v777, %v777
    %v831 = vmul.f32 %v782, %v782
    %v832 = vmul.f32 %v787, %v787
    %v833 = vmul.f32 %v792, %v792
    %v834 = vmul.f32 %v797, %v797
    %v835 = vmul.f32 %v802, %v802
    %v836 = vsel %vm464, %v828, 0.0
    %v837 = vsel %vm464, %v829, 0.0
    %v838 = vadd.f32 %v836, %v837
    %v839 = vsel %vm464, %v830, 0.0
    %v840 = vadd.f32 %v838, %v839
    %v841 = vsel %vm464, %v831, 0.0
    %v842 = vadd.f32 %v840, %v841
    %v843 = vsel %vm464, %v832, 0.0
    %v844 = vadd.f32 %v842, %v843
    %v845 = vsel %vm464, %v833, 0.0
    %v846 = vadd.f32 %v844, %v845
    %v847 = vsel %vm464, %v834, 0.0
    %v848 = vadd.f32 %v846, %v847
    %v849 = vsel %vm464, %v835, 0.0
    %v850 = vadd.f32 %v848, %v849
    %v851 = vrot.slane %v850, 4
    %v852 = vadd.f32 %v850, %v851
    %v853 = vrot.slane %v852, 2
    %v854 = vadd.f32 %v852, %v853
    %v855 = vrot.slane %v854, 1
    %v856 = vadd.f32 %v854, %v855
    %v857 = vmul.f32 %v827, 0.015625
    %v858 = vmul.f32 %v856, 0.015625
    %v859 = vmul.f32 %v857, %v857
    %v860 = vsub.f32 %v858, %v859
    %v861 = vmax.f32 %v860, 0.0
    %v862 = vsub.f32 %v767, %v857
    %v863 = vsub.f32 %v772, %v857
    %v864 = vsub.f32 %v777, %v857
    %v865 = vsub.f32 %v782, %v857
    %v866 = vsub.f32 %v787, %v857
    %v867 = vsub.f32 %v792, %v857
    %v868 = vsub.f32 %v797, %v857
    %v869 = vsub.f32 %v802, %v857
    %v870 = vadd.f32 %v861, 1e-05
    %v871 = vrsqrt.pop %v870
    %v872 = vmul.f32 %v862, %v871
    %v873 = vmul.f32 %v863, %v871
    %v874 = vmul.f32 %v864, %v871
    %v875 = vmul.f32 %v865, %v871
    %v876 = vmul.f32 %v866, %v871
    %v877 = vmul.f32 %v867, %v871
    %v878 = vmul.f32 %v868, %v871
    %v879 = vmul.f32 %v869, %v871
    %v880 = vlaneseq
    %v881 = vshrl.u32 %v880, 7
    %v882 = vsub.s32 0, %v881
    %v883 = vrot.slane %v805, %v882
    %v884 = vmul.f32 %v872, %v883
    %v885 = vmul.f32 %v873, %v883
    %v886 = vmul.f32 %v874, %v883
    %v887 = vmul.f32 %v875, %v883
    %v888 = vmul.f32 %v876, %v883
    %v889 = vmul.f32 %v877, %v883
    %v890 = vmul.f32 %v878, %v883
    %v891 = vmul.f32 %v879, %v883
    %v892 = vlaneseq
    %v893 = vshrl.u32 %v892, 7
    %v894 = vsub.s32 0, %v893
    %v895 = vrot.slane %v806, %v894
    %v896 = vadd.f32 %v884, %v895
    %v897 = vadd.f32 %v885, %v895
    %v898 = vadd.f32 %v886, %v895
    %v899 = vadd.f32 %v887, %v895
    %v900 = vadd.f32 %v888, %v895
    %v901 = vadd.f32 %v889, %v895
    %v902 = vadd.f32 %v890, %v895
    %v903 = vadd.f32 %v891, %v895
    %v904 = vxor.u32 %v896, 2147483648
    %v905 = vxor.u32 %v897, 2147483648
    %v906 = vxor.u32 %v898, 2147483648
    %v907 = vxor.u32 %v899, 2147483648
    %v908 = vxor.u32 %v900, 2147483648
    %v909 = vxor.u32 %v901, 2147483648
    %v910 = vxor.u32 %v902, 2147483648
    %v911 = vxor.u32 %v903, 2147483648
    %v912 = vmul.f32 %v904, 1.442695
    %v913 = vpow.pop %v912
    %v914 = vmul.f32 %v905, 1.442695
    %v915 = vpow.pop %v914
    %v916 = vmul.f32 %v906, 1.442695
    %v917 = vpow.pop %v916
    %v918 = vmul.f32 %v907, 1.442695
    %v919 = vpow.pop %v918
    %v920 = vmul.f32 %v908, 1.442695
    %v921 = vpow.pop %v920
    %v922 = vmul.f32 %v909, 1.442695
    %v923 = vpow.pop %v922
    %v924 = vmul.f32 %v910, 1.442695
    %v925 = vpow.pop %v924
    %v926 = vmul.f32 %v911, 1.442695
    %v927 = vpow.pop %v926
    %v928 = vadd.f32 %v913, 1.0
    %v929 = vadd.f32 %v915, 1.0
    %v930 = vadd.f32 %v917, 1.0
    %v931 = vadd.f32 %v919, 1.0
    %v932 = vadd.f32 %v921, 1.0
    %v933 = vadd.f32 %v923, 1.0
    %v934 = vadd.f32 %v925, 1.0
    %v935 = vadd.f32 %v927, 1.0
    %v936 = vrcp.pop %v928
    %v937 = vmul.f32 1.0, %v936
    %v938 = vrcp.pop %v929
    %v939 = vmul.f32 1.0, %v938
    %v940 = vrcp.pop %v930
    %v941 = vmul.f32 1.0, %v940
    %v942 = vrcp.pop %v931
    %v943 = vmul.f32 1.0, %v942
    %v944 = vrcp.pop %v932
    %v945 = vmul.f32 1.0, %v944
    %v946 = vrcp.pop %v933
    %v947 = vmul.f32 1.0, %v946
    %v948 = vrcp.pop %v934
    %v949 = vmul.f32 1.0, %v948
    %v950 = vrcp.pop %v935
    %v951 = vmul.f32 1.0, %v950
    %v952 = vmul.f32 %v896, %v937
    %v953 = vmul.f32 %v897, %v939
    %v954 = vmul.f32 %v898, %v941
    %v955 = vmul.f32 %v899, %v943
    %v956 = vmul.f32 %v900, %v945
    %v957 = vmul.f32 %v901, %v947
    %v958 = vmul.f32 %v902, %v949
    %v959 = vmul.f32 %v903, %v951
    %v960 = vld [vmem:[#allocation2 + $0x90] sm:$0xff]
    %v961 = vld [vmem:[#allocation2 + $0x98] sm:$0xff]
    %v962 = vld [vmem:[#allocation2 + $0xa0] sm:$0xff]
    %v963 = vld [vmem:[#allocation2 + $0xa8] sm:$0xff]
    %v964 = vld [vmem:[#allocation2 + $0xb0] sm:$0xff]
    %v965 = vld [vmem:[#allocation2 + $0xb8] sm:$0xff]
    %v966 = vld [vmem:[#allocation2 + $0xc0] sm:$0xff]
    %v967 = vld [vmem:[#allocation2 + $0xc8] sm:$0xff]
    %v969 = vsel %vm464, %v952, 0
    %v972 = vsel %vm464, %v953, 0
    %v975 = vsel %vm464, %v954, 0
    %v978 = vsel %vm464, %v955, 0
    %v981 = vsel %vm464, %v956, 0
    %v984 = vsel %vm464, %v957, 0
    %v987 = vsel %vm464, %v958, 0
    %v990 = vsel %vm464, %v959, 0
    %992 = vmatprep.subr.mxu0 0.0
    %993 = vmatpush1.msra.mxu0 0.0
    %994 = vmatprep.subr.mxu0 0.0
    %995 = vmatpush1.msra.mxu0 0.0
    %996 = vmatprep.subr.mxu0 0.0
    %997 = vmatpush1.msra.mxu0 0.0
    %998 = vmatprep.subr.mxu0 0.0
    %999 = vmatpush1.msra.mxu0 0.0
    %1000 = vmatprep.subr.mxu0 0.0
    %1001 = vmatpush1.msra.mxu0 0.0
    %1002 = vmatprep.subr.mxu0 0.0
    %1003 = vmatpush1.msra.mxu0 0.0
    %1004 = vmatprep.subr.mxu0 0.0
    %1005 = vmatpush1.msra.mxu0 0.0
    %1006 = vmatprep.subr.mxu0 0.0
    %1007 = vmatpush1.msra.mxu0 0.0
    %1008 = vmatprep.subr.mxu0 0.0
    %1009 = vmatpush1.msra.mxu0 %v967
    %1010 = vmatprep.subr.mxu0 0.0
    %1011 = vmatpush1.msra.mxu0 %v966
    %1012 = vmatprep.subr.mxu0 0.0
    %1013 = vmatpush1.msra.mxu0 %v965
    %1014 = vmatprep.subr.mxu0 0.0
    %1015 = vmatpush1.msra.mxu0 %v964
    %1016 = vmatprep.subr.mxu0 0.0
    %1017 = vmatpush1.msra.mxu0 %v963
    %1018 = vmatprep.subr.mxu0 0.0
    %1019 = vmatpush1.msra.mxu0 %v962
    %1020 = vmatprep.subr.mxu0 0.0
    %1021 = vmatpush1.msra.mxu0 %v961
    %1022 = vmatprep.subr.mxu0 0.0
    %1023 = vmatpush1.msra.mxu0 %v960
    %1024 = vmatprep.subr.mxu0 0.0
    %1025 = vmatpush2.msra.mxu0 0.0
    %1026 = vmatprep.subr.mxu0 0.0
    %1027 = vmatpush2.msra.mxu0 0.0
    %1028 = vmatprep.subr.mxu0 0.0
    %1029 = vmatpush2.msra.mxu0 0.0
    %1030 = vmatprep.subr.mxu0 0.0
    %1031 = vmatpush2.msra.mxu0 0.0
    %1032 = vmatprep.subr.mxu0 0.0
    %1033 = vmatpush2.msra.mxu0 0.0
    %1034 = vmatprep.subr.mxu0 0.0
    %1035 = vmatpush2.msra.mxu0 0.0
    %1036 = vmatprep.subr.mxu0 0.0
    %1037 = vmatpush2.msra.mxu0 0.0
    %1038 = vmatprep.subr.mxu0 0.0
    %1039 = vmatpush2.msra.mxu0 0.0
    %1040 = vmatprep.subr.mxu0 0.0
    %1041 = vmatpush2.msra.mxu0 0.0
    %1042 = vmatprep.subr.mxu0 0.0
    %1043 = vmatpush2.msra.mxu0 0.0
    %1044 = vmatprep.subr.mxu0 0.0
    %1045 = vmatpush2.msra.mxu0 0.0
    %1046 = vmatprep.subr.mxu0 0.0
    %1047 = vmatpush2.msra.mxu0 0.0
    %1048 = vmatprep.subr.mxu0 0.0
    %1049 = vmatpush2.msra.mxu0 0.0
    %1050 = vmatprep.subr.mxu0 0.0
    %1051 = vmatpush2.msra.mxu0 0.0
    %1052 = vmatprep.subr.mxu0 0.0
    %1053 = vmatpush2.msra.mxu0 0.0
    %1054 = vmatprep.subr.mxu0 0.0
    %1055 = vmatpush2.msra.mxu0 0.0
    %1056 = vmatprep.mubr.f32.mxu0 0.0
    %1057 = vmatmul.mubr.f32.gmra.mxu0 %v969
    %v1058 = vpop.f32.mrf.mxu0
    %v1059 = vadd.f32 0.0, %v1058
    %v1060 = vpop.f32.mrf.mxu0
    %1061 = vmatprep.mubr.f32.mxu0 0.0
    %1062 = vmatmul.mubr.f32.gmra.mxu0 %v972
    %v1063 = vpop.f32.mrf.mxu0
    %v1064 = vadd.f32 0.0, %v1063
    %v1065 = vpop.f32.mrf.mxu0
    %1066 = vmatprep.mubr.f32.mxu0 0.0
    %1067 = vmatmul.mubr.f32.gmra.mxu0 %v975
    %v1068 = vpop.f32.mrf.mxu0
    %v1069 = vadd.f32 0.0, %v1068
    %v1070 = vpop.f32.mrf.mxu0
    %1071 = vmatprep.mubr.f32.mxu0 0.0
    %1072 = vmatmul.mubr.f32.gmra.mxu0 %v978
    %v1073 = vpop.f32.mrf.mxu0
    %v1074 = vadd.f32 0.0, %v1073
    %v1075 = vpop.f32.mrf.mxu0
    %1076 = vmatprep.mubr.f32.mxu0 0.0
    %1077 = vmatmul.mubr.f32.gmra.mxu0 %v981
    %v1078 = vpop.f32.mrf.mxu0
    %v1079 = vadd.f32 0.0, %v1078
    %v1080 = vpop.f32.mrf.mxu0
    %1081 = vmatprep.mubr.f32.mxu0 0.0
    %1082 = vmatmul.mubr.f32.gmra.mxu0 %v984
    %v1083 = vpop.f32.mrf.mxu0
    %v1084 = vadd.f32 0.0, %v1083
    %v1085 = vpop.f32.mrf.mxu0
    %1086 = vmatprep.mubr.f32.mxu0 0.0
    %1087 = vmatmul.mubr.f32.gmra.mxu0 %v987
    %v1088 = vpop.f32.mrf.mxu0
    %v1089 = vadd.f32 0.0, %v1088
    %v1090 = vpop.f32.mrf.mxu0
    %1091 = vmatprep.mubr.f32.mxu0 0.0
    %1092 = vmatmul.mubr.f32.gmra.mxu0 %v990
    %v1093 = vpop.f32.mrf.mxu0
    %v1094 = vadd.f32 0.0, %v1093
    %v1095 = vpop.f32.mrf.mxu0
    %1096 = vdwg.mxu0
    %v1097 = vld [vmem:[%s2 + $0x8] sm:$0x1]
    %v1098 = vld [vmem:[%s2 + $0x9] sm:$0x1]
    %v1099 = vsel %vm464, %v1059, 0.0
    %v1100 = vsel %vm464, %v1064, 0.0
    %v1101 = vadd.f32 %v1099, %v1100
    %v1102 = vsel %vm464, %v1069, 0.0
    %v1103 = vadd.f32 %v1101, %v1102
    %v1104 = vsel %vm464, %v1074, 0.0
    %v1105 = vadd.f32 %v1103, %v1104
    %v1106 = vsel %vm464, %v1079, 0.0
    %v1107 = vadd.f32 %v1105, %v1106
    %v1108 = vsel %vm464, %v1084, 0.0
    %v1109 = vadd.f32 %v1107, %v1108
    %v1110 = vsel %vm464, %v1089, 0.0
    %v1111 = vadd.f32 %v1109, %v1110
    %v1112 = vsel %vm464, %v1094, 0.0
    %v1113 = vadd.f32 %v1111, %v1112
    %v1114 = vrot.slane %v1113, 4
    %v1115 = vadd.f32 %v1113, %v1114
    %v1116 = vrot.slane %v1115, 2
    %v1117 = vadd.f32 %v1115, %v1116
    %v1118 = vrot.slane %v1117, 1
    %v1119 = vadd.f32 %v1117, %v1118
    %v1120 = vmul.f32 %v1059, %v1059
    %v1121 = vmul.f32 %v1064, %v1064
    %v1122 = vmul.f32 %v1069, %v1069
    %v1123 = vmul.f32 %v1074, %v1074
    %v1124 = vmul.f32 %v1079, %v1079
    %v1125 = vmul.f32 %v1084, %v1084
    %v1126 = vmul.f32 %v1089, %v1089
    %v1127 = vmul.f32 %v1094, %v1094
    %v1128 = vsel %vm464, %v1120, 0.0
    %v1129 = vsel %vm464, %v1121, 0.0
    %v1130 = vadd.f32 %v1128, %v1129
    %v1131 = vsel %vm464, %v1122, 0.0
    %v1132 = vadd.f32 %v1130, %v1131
    %v1133 = vsel %vm464, %v1123, 0.0
    %v1134 = vadd.f32 %v1132, %v1133
    %v1135 = vsel %vm464, %v1124, 0.0
    %v1136 = vadd.f32 %v1134, %v1135
    %v1137 = vsel %vm464, %v1125, 0.0
    %v1138 = vadd.f32 %v1136, %v1137
    %v1139 = vsel %vm464, %v1126, 0.0
    %v1140 = vadd.f32 %v1138, %v1139
    %v1141 = vsel %vm464, %v1127, 0.0
    %v1142 = vadd.f32 %v1140, %v1141
    %v1143 = vrot.slane %v1142, 4
    %v1144 = vadd.f32 %v1142, %v1143
    %v1145 = vrot.slane %v1144, 2
    %v1146 = vadd.f32 %v1144, %v1145
    %v1147 = vrot.slane %v1146, 1
    %v1148 = vadd.f32 %v1146, %v1147
    %v1149 = vmul.f32 %v1119, 0.015625
    %v1150 = vmul.f32 %v1148, 0.015625
    %v1151 = vmul.f32 %v1149, %v1149
    %v1152 = vsub.f32 %v1150, %v1151
    %v1153 = vmax.f32 %v1152, 0.0
    %v1154 = vsub.f32 %v1059, %v1149
    %v1155 = vsub.f32 %v1064, %v1149
    %v1156 = vsub.f32 %v1069, %v1149
    %v1157 = vsub.f32 %v1074, %v1149
    %v1158 = vsub.f32 %v1079, %v1149
    %v1159 = vsub.f32 %v1084, %v1149
    %v1160 = vsub.f32 %v1089, %v1149
    %v1161 = vsub.f32 %v1094, %v1149
    %v1162 = vadd.f32 %v1153, 1e-05
    %v1163 = vrsqrt.pop %v1162
    %v1164 = vmul.f32 %v1154, %v1163
    %v1165 = vmul.f32 %v1155, %v1163
    %v1166 = vmul.f32 %v1156, %v1163
    %v1167 = vmul.f32 %v1157, %v1163
    %v1168 = vmul.f32 %v1158, %v1163
    %v1169 = vmul.f32 %v1159, %v1163
    %v1170 = vmul.f32 %v1160, %v1163
    %v1171 = vmul.f32 %v1161, %v1163
    %v1172 = vlaneseq
    %v1173 = vshrl.u32 %v1172, 7
    %v1174 = vsub.s32 0, %v1173
    %v1175 = vrot.slane %v1097, %v1174
    %v1176 = vmul.f32 %v1164, %v1175
    %v1177 = vmul.f32 %v1165, %v1175
    %v1178 = vmul.f32 %v1166, %v1175
    %v1179 = vmul.f32 %v1167, %v1175
    %v1180 = vmul.f32 %v1168, %v1175
    %v1181 = vmul.f32 %v1169, %v1175
    %v1182 = vmul.f32 %v1170, %v1175
    %v1183 = vmul.f32 %v1171, %v1175
    %v1184 = vlaneseq
    %v1185 = vshrl.u32 %v1184, 7
    %v1186 = vsub.s32 0, %v1185
    %v1187 = vrot.slane %v1098, %v1186
    %v1188 = vadd.f32 %v1176, %v1187
    %v1189 = vadd.f32 %v1177, %v1187
    %v1190 = vadd.f32 %v1178, %v1187
    %v1191 = vadd.f32 %v1179, %v1187
    %v1192 = vadd.f32 %v1180, %v1187
    %v1193 = vadd.f32 %v1181, %v1187
    %v1194 = vadd.f32 %v1182, %v1187
    %v1195 = vadd.f32 %v1183, %v1187
    %v1196 = vxor.u32 %v1188, 2147483648
    %v1197 = vxor.u32 %v1189, 2147483648
    %v1198 = vxor.u32 %v1190, 2147483648
    %v1199 = vxor.u32 %v1191, 2147483648
    %v1200 = vxor.u32 %v1192, 2147483648
    %v1201 = vxor.u32 %v1193, 2147483648
    %v1202 = vxor.u32 %v1194, 2147483648
    %v1203 = vxor.u32 %v1195, 2147483648
    %v1204 = vmul.f32 %v1196, 1.442695
    %v1205 = vpow.pop %v1204
    %v1206 = vmul.f32 %v1197, 1.442695
    %v1207 = vpow.pop %v1206
    %v1208 = vmul.f32 %v1198, 1.442695
    %v1209 = vpow.pop %v1208
    %v1210 = vmul.f32 %v1199, 1.442695
    %v1211 = vpow.pop %v1210
    %v1212 = vmul.f32 %v1200, 1.442695
    %v1213 = vpow.pop %v1212
    %v1214 = vmul.f32 %v1201, 1.442695
    %v1215 = vpow.pop %v1214
    %v1216 = vmul.f32 %v1202, 1.442695
    %v1217 = vpow.pop %v1216
    %v1218 = vmul.f32 %v1203, 1.442695
    %v1219 = vpow.pop %v1218
    %v1220 = vadd.f32 %v1205, 1.0
    %v1221 = vadd.f32 %v1207, 1.0
    %v1222 = vadd.f32 %v1209, 1.0
    %v1223 = vadd.f32 %v1211, 1.0
    %v1224 = vadd.f32 %v1213, 1.0
    %v1225 = vadd.f32 %v1215, 1.0
    %v1226 = vadd.f32 %v1217, 1.0
    %v1227 = vadd.f32 %v1219, 1.0
    %v1228 = vrcp.pop %v1220
    %v1229 = vmul.f32 1.0, %v1228
    %v1230 = vrcp.pop %v1221
    %v1231 = vmul.f32 1.0, %v1230
    %v1232 = vrcp.pop %v1222
    %v1233 = vmul.f32 1.0, %v1232
    %v1234 = vrcp.pop %v1223
    %v1235 = vmul.f32 1.0, %v1234
    %v1236 = vrcp.pop %v1224
    %v1237 = vmul.f32 1.0, %v1236
    %v1238 = vrcp.pop %v1225
    %v1239 = vmul.f32 1.0, %v1238
    %v1240 = vrcp.pop %v1226
    %v1241 = vmul.f32 1.0, %v1240
    %v1242 = vrcp.pop %v1227
    %v1243 = vmul.f32 1.0, %v1242
    %v1244 = vmul.f32 %v1188, %v1229
    %v1245 = vmul.f32 %v1189, %v1231
    %v1246 = vmul.f32 %v1190, %v1233
    %v1247 = vmul.f32 %v1191, %v1235
    %v1248 = vmul.f32 %v1192, %v1237
    %v1249 = vmul.f32 %v1193, %v1239
    %v1250 = vmul.f32 %v1194, %v1241
    %v1251 = vmul.f32 %v1195, %v1243
    %v1252 = vld [vmem:[#allocation2 + $0xd0] sm:$0xff]
    %v1253 = vld [vmem:[#allocation2 + $0xd8] sm:$0xff]
    %v1254 = vld [vmem:[#allocation2 + $0xe0] sm:$0xff]
    %v1255 = vld [vmem:[#allocation2 + $0xe8] sm:$0xff]
    %v1256 = vld [vmem:[#allocation2 + $0xf0] sm:$0xff]
    %v1257 = vld [vmem:[#allocation2 + $0xf8] sm:$0xff]
    %v1258 = vld [vmem:[#allocation2 + $0x100] sm:$0xff]
    %v1259 = vld [vmem:[#allocation2 + $0x108] sm:$0xff]
    %v1261 = vsel %vm464, %v1244, 0
    %v1264 = vsel %vm464, %v1245, 0
    %v1267 = vsel %vm464, %v1246, 0
    %v1270 = vsel %vm464, %v1247, 0
    %v1273 = vsel %vm464, %v1248, 0
    %v1276 = vsel %vm464, %v1249, 0
    %v1279 = vsel %vm464, %v1250, 0
    %v1282 = vsel %vm464, %v1251, 0
    %1284 = vmatprep.subr.mxu0 0.0
    %1285 = vmatpush1.msra.mxu0 0.0
    %1286 = vmatprep.subr.mxu0 0.0
    %1287 = vmatpush1.msra.mxu0 0.0
    %1288 = vmatprep.subr.mxu0 0.0
    %1289 = vmatpush1.msra.mxu0 0.0
    %1290 = vmatprep.subr.mxu0 0.0
    %1291 = vmatpush1.msra.mxu0 0.0
    %1292 = vmatprep.subr.mxu0 0.0
    %1293 = vmatpush1.msra.mxu0 0.0
    %1294 = vmatprep.subr.mxu0 0.0
    %1295 = vmatpush1.msra.mxu0 0.0
    %1296 = vmatprep.subr.mxu0 0.0
    %1297 = vmatpush1.msra.mxu0 0.0
    %1298 = vmatprep.subr.mxu0 0.0
    %1299 = vmatpush1.msra.mxu0 0.0
    %1300 = vmatprep.subr.mxu0 0.0
    %1301 = vmatpush1.msra.mxu0 %v1259
    %1302 = vmatprep.subr.mxu0 0.0
    %1303 = vmatpush1.msra.mxu0 %v1258
    %1304 = vmatprep.subr.mxu0 0.0
    %1305 = vmatpush1.msra.mxu0 %v1257
    %1306 = vmatprep.subr.mxu0 0.0
    %1307 = vmatpush1.msra.mxu0 %v1256
    %1308 = vmatprep.subr.mxu0 0.0
    %1309 = vmatpush1.msra.mxu0 %v1255
    %1310 = vmatprep.subr.mxu0 0.0
    %1311 = vmatpush1.msra.mxu0 %v1254
    %1312 = vmatprep.subr.mxu0 0.0
    %1313 = vmatpush1.msra.mxu0 %v1253
    %1314 = vmatprep.subr.mxu0 0.0
    %1315 = vmatpush1.msra.mxu0 %v1252
    %1316 = vmatprep.subr.mxu0 0.0
    %1317 = vmatpush2.msra.mxu0 0.0
    %1318 = vmatprep.subr.mxu0 0.0
    %1319 = vmatpush2.msra.mxu0 0.0
    %1320 = vmatprep.subr.mxu0 0.0
    %1321 = vmatpush2.msra.mxu0 0.0
    %1322 = vmatprep.subr.mxu0 0.0
    %1323 = vmatpush2.msra.mxu0 0.0
    %1324 = vmatprep.subr.mxu0 0.0
    %1325 = vmatpush2.msra.mxu0 0.0
    %1326 = vmatprep.subr.mxu0 0.0
    %1327 = vmatpush2.msra.mxu0 0.0
    %1328 = vmatprep.subr.mxu0 0.0
    %1329 = vmatpush2.msra.mxu0 0.0
    %1330 = vmatprep.subr.mxu0 0.0
    %1331 = vmatpush2.msra.mxu0 0.0
    %1332 = vmatprep.subr.mxu0 0.0
    %1333 = vmatpush2.msra.mxu0 0.0
    %1334 = vmatprep.subr.mxu0 0.0
    %1335 = vmatpush2.msra.mxu0 0.0
    %1336 = vmatprep.subr.mxu0 0.0
    %1337 = vmatpush2.msra.mxu0 0.0
    %1338 = vmatprep.subr.mxu0 0.0
    %1339 = vmatpush2.msra.mxu0 0.0
    %1340 = vmatprep.subr.mxu0 0.0
    %1341 = vmatpush2.msra.mxu0 0.0
    %1342 = vmatprep.subr.mxu0 0.0
    %1343 = vmatpush2.msra.mxu0 0.0
    %1344 = vmatprep.subr.mxu0 0.0
    %1345 = vmatpush2.msra.mxu0 0.0
    %1346 = vmatprep.subr.mxu0 0.0
    %1347 = vmatpush2.msra.mxu0 0.0
    %1348 = vmatprep.mubr.f32.mxu0 0.0
    %1349 = vmatmul.mubr.f32.gmra.mxu0 %v1261
    %v1350 = vpop.f32.mrf.mxu0
    %v1351 = vadd.f32 0.0, %v1350
    %v1352 = vpop.f32.mrf.mxu0
    %1353 = vmatprep.mubr.f32.mxu0 0.0
    %1354 = vmatmul.mubr.f32.gmra.mxu0 %v1264
    %v1355 = vpop.f32.mrf.mxu0
    %v1356 = vadd.f32 0.0, %v1355
    %v1357 = vpop.f32.mrf.mxu0
    %1358 = vmatprep.mubr.f32.mxu0 0.0
    %1359 = vmatmul.mubr.f32.gmra.mxu0 %v1267
    %v1360 = vpop.f32.mrf.mxu0
    %v1361 = vadd.f32 0.0, %v1360
    %v1362 = vpop.f32.mrf.mxu0
    %1363 = vmatprep.mubr.f32.mxu0 0.0
    %1364 = vmatmul.mubr.f32.gmra.mxu0 %v1270
    %v1365 = vpop.f32.mrf.mxu0
    %v1366 = vadd.f32 0.0, %v1365
    %v1367 = vpop.f32.mrf.mxu0
    %1368 = vmatprep.mubr.f32.mxu0 0.0
    %1369 = vmatmul.mubr.f32.gmra.mxu0 %v1273
    %v1370 = vpop.f32.mrf.mxu0
    %v1371 = vadd.f32 0.0, %v1370
    %v1372 = vpop.f32.mrf.mxu0
    %1373 = vmatprep.mubr.f32.mxu0 0.0
    %1374 = vmatmul.mubr.f32.gmra.mxu0 %v1276
    %v1375 = vpop.f32.mrf.mxu0
    %v1376 = vadd.f32 0.0, %v1375
    %v1377 = vpop.f32.mrf.mxu0
    %1378 = vmatprep.mubr.f32.mxu0 0.0
    %1379 = vmatmul.mubr.f32.gmra.mxu0 %v1279
    %v1380 = vpop.f32.mrf.mxu0
    %v1381 = vadd.f32 0.0, %v1380
    %v1382 = vpop.f32.mrf.mxu0
    %1383 = vmatprep.mubr.f32.mxu0 0.0
    %1384 = vmatmul.mubr.f32.gmra.mxu0 %v1282
    %v1385 = vpop.f32.mrf.mxu0
    %v1386 = vadd.f32 0.0, %v1385
    %v1387 = vpop.f32.mrf.mxu0
    %1388 = vdwg.mxu0
    %v1389 = vadd.f32 %v767, %v1351
    %v1390 = vadd.f32 %v772, %v1356
    %v1391 = vadd.f32 %v777, %v1361
    %v1392 = vadd.f32 %v782, %v1366
    %v1393 = vadd.f32 %v787, %v1371
    %v1394 = vadd.f32 %v792, %v1376
    %v1395 = vadd.f32 %v797, %v1381
    %v1396 = vadd.f32 %v802, %v1386
    %v1397 = vld [vmem:[%s2 + $0xa] sm:$0x1]
    %v1398 = vlaneseq
    %v1399 = vshrl.u32 %v1398, 7
    %v1400 = vsub.s32 0, %v1399
    %v1401 = vrot.slane %v1397, %v1400
    %v1402 = vadd.f32 %v1389, %v1401
    %v1403 = vadd.f32 %v1390, %v1401
    %v1404 = vadd.f32 %v1391, %v1401
    %v1405 = vadd.f32 %v1392, %v1401
    %v1406 = vadd.f32 %v1393, %v1401
    %v1407 = vadd.f32 %v1394, %v1401
    %v1408 = vadd.f32 %v1395, %v1401
    %v1409 = vadd.f32 %v1396, %v1401
    %v1410 = vld [vmem:[%s2 + $0xb] sm:$0x1]
    %v1411 = vld [vmem:[%s2 + $0xc] sm:$0x1]
    %v1412 = vsel %vm464, %v1402, 0.0
    %v1413 = vsel %vm464, %v1403, 0.0
    %v1414 = vadd.f32 %v1412, %v1413
    %v1415 = vsel %vm464, %v1404, 0.0
    %v1416 = vadd.f32 %v1414, %v1415
    %v1417 = vsel %vm464, %v1405, 0.0
    %v1418 = vadd.f32 %v1416, %v1417
    %v1419 = vsel %vm464, %v1406, 0.0
    %v1420 = vadd.f32 %v1418, %v1419
    %v1421 = vsel %vm464, %v1407, 0.0
    %v1422 = vadd.f32 %v1420, %v1421
    %v1423 = vsel %vm464, %v1408, 0.0
    %v1424 = vadd.f32 %v1422, %v1423
    %v1425 = vsel %vm464, %v1409, 0.0
    %v1426 = vadd.f32 %v1424, %v1425
    %v1427 = vrot.slane %v1426, 4
    %v1428 = vadd.f32 %v1426, %v1427
    %v1429 = vrot.slane %v1428, 2
    %v1430 = vadd.f32 %v1428, %v1429
    %v1431 = vrot.slane %v1430, 1
    %v1432 = vadd.f32 %v1430, %v1431
    %v1433 = vmul.f32 %v1402, %v1402
    %v1434 = vmul.f32 %v1403, %v1403
    %v1435 = vmul.f32 %v1404, %v1404
    %v1436 = vmul.f32 %v1405, %v1405
    %v1437 = vmul.f32 %v1406, %v1406
    %v1438 = vmul.f32 %v1407, %v1407
    %v1439 = vmul.f32 %v1408, %v1408
    %v1440 = vmul.f32 %v1409, %v1409
    %v1441 = vsel %vm464, %v1433, 0.0
    %v1442 = vsel %vm464, %v1434, 0.0
    %v1443 = vadd.f32 %v1441, %v1442
    %v1444 = vsel %vm464, %v1435, 0.0
    %v1445 = vadd.f32 %v1443, %v1444
    %v1446 = vsel %vm464, %v1436, 0.0
    %v1447 = vadd.f32 %v1445, %v1446
    %v1448 = vsel %vm464, %v1437, 0.0
    %v1449 = vadd.f32 %v1447, %v1448
    %v1450 = vsel %vm464, %v1438, 0.0
    %v1451 = vadd.f32 %v1449, %v1450
    %v1452 = vsel %vm464, %v1439, 0.0
    %v1453 = vadd.f32 %v1451, %v1452
    %v1454 = vsel %vm464, %v1440, 0.0
    %v1455 = vadd.f32 %v1453, %v1454
    %v1456 = vrot.slane %v1455, 4
    %v1457 = vadd.f32 %v1455, %v1456
    %v1458 = vrot.slane %v1457, 2
    %v1459 = vadd.f32 %v1457, %v1458
    %v1460 = vrot.slane %v1459, 1
    %v1461 = vadd.f32 %v1459, %v1460
    %v1462 = vmul.f32 %v1432, 0.015625
    %v1463 = vmul.f32 %v1461, 0.015625
    %v1464 = vmul.f32 %v1462, %v1462
    %v1465 = vsub.f32 %v1463, %v1464
    %v1466 = vmax.f32 %v1465, 0.0
    %v1467 = vsub.f32 %v1402, %v1462
    %v1468 = vsub.f32 %v1403, %v1462
    %v1469 = vsub.f32 %v1404, %v1462
    %v1470 = vsub.f32 %v1405, %v1462
    %v1471 = vsub.f32 %v1406, %v1462
    %v1472 = vsub.f32 %v1407, %v1462
    %v1473 = vsub.f32 %v1408, %v1462
    %v1474 = vsub.f32 %v1409, %v1462
    %v1475 = vadd.f32 %v1466, 1e-05
    %v1476 = vrsqrt.pop %v1475
    %v1477 = vmul.f32 %v1467, %v1476
    %v1478 = vmul.f32 %v1468, %v1476
    %v1479 = vmul.f32 %v1469, %v1476
    %v1480 = vmul.f32 %v1470, %v1476
    %v1481 = vmul.f32 %v1471, %v1476
    %v1482 = vmul.f32 %v1472, %v1476
    %v1483 = vmul.f32 %v1473, %v1476
    %v1484 = vmul.f32 %v1474, %v1476
    %v1485 = vlaneseq
    %v1486 = vshrl.u32 %v1485, 7
    %v1487 = vsub.s32 0, %v1486
    %v1488 = vrot.slane %v1410, %v1487
    %v1489 = vmul.f32 %v1477, %v1488
    %v1490 = vmul.f32 %v1478, %v1488
    %v1491 = vmul.f32 %v1479, %v1488
    %v1492 = vmul.f32 %v1480, %v1488
    %v1493 = vmul.f32 %v1481, %v1488
    %v1494 = vmul.f32 %v1482, %v1488
    %v1495 = vmul.f32 %v1483, %v1488
    %v1496 = vmul.f32 %v1484, %v1488
    %v1497 = vlaneseq
    %v1498 = vshrl.u32 %v1497, 7
    %v1499 = vsub.s32 0, %v1498
    %v1500 = vrot.slane %v1411, %v1499
    %v1501 = vadd.f32 %v1489, %v1500
    %v1502 = vadd.f32 %v1490, %v1500
    %v1503 = vadd.f32 %v1491, %v1500
    %v1504 = vadd.f32 %v1492, %v1500
    %v1505 = vadd.f32 %v1493, %v1500
    %v1506 = vadd.f32 %v1494, %v1500
    %v1507 = vadd.f32 %v1495, %v1500
    %v1508 = vadd.f32 %v1496, %v1500
    %v1509 = vxor.u32 %v1501, 2147483648
    %v1510 = vxor.u32 %v1502, 2147483648
    %v1511 = vxor.u32 %v1503, 2147483648
    %v1512 = vxor.u32 %v1504, 2147483648
    %v1513 = vxor.u32 %v1505, 2147483648
    %v1514 = vxor.u32 %v1506, 2147483648
    %v1515 = vxor.u32 %v1507, 2147483648
    %v1516 = vxor.u32 %v1508, 2147483648
    %v1517 = vmul.f32 %v1509, 1.442695
    %v1518 = vpow.pop %v1517
    %v1519 = vmul.f32 %v1510, 1.442695
    %v1520 = vpow.pop %v1519
    %v1521 = vmul.f32 %v1511, 1.442695
    %v1522 = vpow.pop %v1521
    %v1523 = vmul.f32 %v1512, 1.442695
    %v1524 = vpow.pop %v1523
    %v1525 = vmul.f32 %v1513, 1.442695
    %v1526 = vpow.pop %v1525
    %v1527 = vmul.f32 %v1514, 1.442695
    %v1528 = vpow.pop %v1527
    %v1529 = vmul.f32 %v1515, 1.442695
    %v1530 = vpow.pop %v1529
    %v1531 = vmul.f32 %v1516, 1.442695
    %v1532 = vpow.pop %v1531
    %v1533 = vadd.f32 %v1518, 1.0
    %v1534 = vadd.f32 %v1520, 1.0
    %v1535 = vadd.f32 %v1522, 1.0
    %v1536 = vadd.f32 %v1524, 1.0
    %v1537 = vadd.f32 %v1526, 1.0
    %v1538 = vadd.f32 %v1528, 1.0
    %v1539 = vadd.f32 %v1530, 1.0
    %v1540 = vadd.f32 %v1532, 1.0
    %v1541 = vrcp.pop %v1533
    %v1542 = vmul.f32 1.0, %v1541
    %v1543 = vrcp.pop %v1534
    %v1544 = vmul.f32 1.0, %v1543
    %v1545 = vrcp.pop %v1535
    %v1546 = vmul.f32 1.0, %v1545
    %v1547 = vrcp.pop %v1536
    %v1548 = vmul.f32 1.0, %v1547
    %v1549 = vrcp.pop %v1537
    %v1550 = vmul.f32 1.0, %v1549
    %v1551 = vrcp.pop %v1538
    %v1552 = vmul.f32 1.0, %v1551
    %v1553 = vrcp.pop %v1539
    %v1554 = vmul.f32 1.0, %v1553
    %v1555 = vrcp.pop %v1540
    %v1556 = vmul.f32 1.0, %v1555
    %v1557 = vmul.f32 %v1501, %v1542
    %v1558 = vmul.f32 %v1502, %v1544
    %v1559 = vmul.f32 %v1503, %v1546
    %v1560 = vmul.f32 %v1504, %v1548
    %v1561 = vmul.f32 %v1505, %v1550
    %v1562 = vmul.f32 %v1506, %v1552
    %v1563 = vmul.f32 %v1507, %v1554
    %v1564 = vmul.f32 %v1508, %v1556
    %v1565 = vld [vmem:[#allocation2 + $0x110] sm:$0xff]
    %v1566 = vld [vmem:[#allocation2 + $0x118] sm:$0xff]
    %v1567 = vld [vmem:[#allocation2 + $0x120] sm:$0xff]
    %v1568 = vld [vmem:[#allocation2 + $0x128] sm:$0xff]
    %v1569 = vld [vmem:[#allocation2 + $0x130] sm:$0xff]
    %v1570 = vld [vmem:[#allocation2 + $0x138] sm:$0xff]
    %v1571 = vld [vmem:[#allocation2 + $0x140] sm:$0xff]
    %v1572 = vld [vmem:[#allocation2 + $0x148] sm:$0xff]
    %v1573 = vld [vmem:[%s2 + $0xd] sm:$0x1]
    %v1574 = vlaneseq
    %v1575 = vshrl.u32 %v1574, 7
    %v1576 = vsub.s32 0, %v1575
    %v1577 = vrot.slane %v1573, %v1576
    %v1579 = vsel %vm464, %v1557, 0
    %v1582 = vsel %vm464, %v1558, 0
    %v1585 = vsel %vm464, %v1559, 0
    %v1588 = vsel %vm464, %v1560, 0
    %v1591 = vsel %vm464, %v1561, 0
    %v1594 = vsel %vm464, %v1562, 0
    %v1597 = vsel %vm464, %v1563, 0
    %v1600 = vsel %vm464, %v1564, 0
    %1602 = vmatprep.subr.mxu0 0.0
    %1603 = vmatpush1.msra.mxu0 0.0
    %1604 = vmatprep.subr.mxu0 0.0
    %1605 = vmatpush1.msra.mxu0 0.0
    %1606 = vmatprep.subr.mxu0 0.0
    %1607 = vmatpush1.msra.mxu0 0.0
    %1608 = vmatprep.subr.mxu0 0.0
    %1609 = vmatpush1.msra.mxu0 0.0
    %1610 = vmatprep.subr.mxu0 0.0
    %1611 = vmatpush1.msra.mxu0 0.0
    %1612 = vmatprep.subr.mxu0 0.0
    %1613 = vmatpush1.msra.mxu0 0.0
    %1614 = vmatprep.subr.mxu0 0.0
    %1615 = vmatpush1.msra.mxu0 0.0
    %1616 = vmatprep.subr.mxu0 0.0
    %1617 = vmatpush1.msra.mxu0 0.0
    %1618 = vmatprep.subr.mxu0 0.0
    %1619 = vmatpush1.msra.mxu0 %v1572
    %1620 = vmatprep.subr.mxu0 0.0
    %1621 = vmatpush1.msra.mxu0 %v1571
    %1622 = vmatprep.subr.mxu0 0.0
    %1623 = vmatpush1.msra.mxu0 %v1570
    %1624 = vmatprep.subr.mxu0 0.0
    %1625 = vmatpush1.msra.mxu0 %v1569
    %1626 = vmatprep.subr.mxu0 0.0
    %1627 = vmatpush1.msra.mxu0 %v1568
    %1628 = vmatprep.subr.mxu0 0.0
    %1629 = vmatpush1.msra.mxu0 %v1567
    %1630 = vmatprep.subr.mxu0 0.0
    %1631 = vmatpush1.msra.mxu0 %v1566
    %1632 = vmatprep.subr.mxu0 0.0
    %1633 = vmatpush1.msra.mxu0 %v1565
    %1634 = vmatprep.subr.mxu0 0.0
    %1635 = vmatpush2.msra.mxu0 0.0
    %1636 = vmatprep.subr.mxu0 0.0
    %1637 = vmatpush2.msra.mxu0 0.0
    %1638 = vmatprep.subr.mxu0 0.0
    %1639 = vmatpush2.msra.mxu0 0.0
    %1640 = vmatprep.subr.mxu0 0.0
    %1641 = vmatpush2.msra.mxu0 0.0
    %1642 = vmatprep.subr.mxu0 0.0
    %1643 = vmatpush2.msra.mxu0 0.0
    %1644 = vmatprep.subr.mxu0 0.0
    %1645 = vmatpush2.msra.mxu0 0.0
    %1646 = vmatprep.subr.mxu0 0.0
    %1647 = vmatpush2.msra.mxu0 0.0
    %1648 = vmatprep.subr.mxu0 0.0
    %1649 = vmatpush2.msra.mxu0 0.0
    %1650 = vmatprep.subr.mxu0 0.0
    %1651 = vmatpush2.msra.mxu0 0.0
    %1652 = vmatprep.subr.mxu0 0.0
    %1653 = vmatpush2.msra.mxu0 0.0
    %1654 = vmatprep.subr.mxu0 0.0
    %1655 = vmatpush2.msra.mxu0 0.0
    %1656 = vmatprep.subr.mxu0 0.0
    %1657 = vmatpush2.msra.mxu0 0.0
    %1658 = vmatprep.subr.mxu0 0.0
    %1659 = vmatpush2.msra.mxu0 0.0
    %1660 = vmatprep.subr.mxu0 0.0
    %1661 = vmatpush2.msra.mxu0 0.0
    %1662 = vmatprep.subr.mxu0 0.0
    %1663 = vmatpush2.msra.mxu0 0.0
    %1664 = vmatprep.subr.mxu0 0.0
    %1665 = vmatpush2.msra.mxu0 0.0
    %1666 = vmatprep.mubr.f32.mxu0 0.0
    %1667 = vmatmul.mubr.f32.gmra.mxu0 %v1579
    %v1668 = vpop.f32.mrf.mxu0
    %v1669 = vadd.f32 %v1577, %v1668
    %v1670 = vpop.f32.mrf.mxu0
    %1671 = vmatprep.mubr.f32.mxu0 0.0
    %1672 = vmatmul.mubr.f32.gmra.mxu0 %v1582
    %v1673 = vpop.f32.mrf.mxu0
    %v1674 = vadd.f32 %v1577, %v1673
    %v1675 = vpop.f32.mrf.mxu0
    %1676 = vmatprep.mubr.f32.mxu0 0.0
    %1677 = vmatmul.mubr.f32.gmra.mxu0 %v1585
    %v1678 = vpop.f32.mrf.mxu0
    %v1679 = vadd.f32 %v1577, %v1678
    %v1680 = vpop.f32.mrf.mxu0
    %1681 = vmatprep.mubr.f32.mxu0 0.0
    %1682 = vmatmul.mubr.f32.gmra.mxu0 %v1588
    %v1683 = vpop.f32.mrf.mxu0
    %v1684 = vadd.f32 %v1577, %v1683
    %v1685 = vpop.f32.mrf.mxu0
    %1686 = vmatprep.mubr.f32.mxu0 0.0
    %1687 = vmatmul.mubr.f32.gmra.mxu0 %v1591
    %v1688 = vpop.f32.mrf.mxu0
    %v1689 = vadd.f32 %v1577, %v1688
    %v1690 = vpop.f32.mrf.mxu0
    %1691 = vmatprep.mubr.f32.mxu0 0.0
    %1692 = vmatmul.mubr.f32.gmra.mxu0 %v1594
    %v1693 = vpop.f32.mrf.mxu0
    %v1694 = vadd.f32 %v1577, %v1693
    %v1695 = vpop.f32.mrf.mxu0
    %1696 = vmatprep.mubr.f32.mxu0 0.0
    %1697 = vmatmul.mubr.f32.gmra.mxu0 %v1597
    %v1698 = vpop.f32.mrf.mxu0
    %v1699 = vadd.f32 %v1577, %v1698
    %v1700 = vpop.f32.mrf.mxu0
    %1701 = vmatprep.mubr.f32.mxu0 0.0
    %1702 = vmatmul.mubr.f32.gmra.mxu0 %v1600
    %v1703 = vpop.f32.mrf.mxu0
    %v1704 = vadd.f32 %v1577, %v1703
    %v1705 = vpop.f32.mrf.mxu0
    %1706 = vdwg.mxu0
    %v1707 = vld [vmem:[#allocation2 + $0x150] sm:$0xff]
    %v1708 = vld [vmem:[#allocation2 + $0x158] sm:$0xff]
    %v1709 = vld [vmem:[#allocation2 + $0x160] sm:$0xff]
    %v1710 = vld [vmem:[#allocation2 + $0x168] sm:$0xff]
    %v1711 = vld [vmem:[%s2 + $0xe] sm:$0x1]
    %vm1712 = vcmask 64512
    %v1714 = vsel %vm1712, %v1669, 0
    %v1717 = vsel %vm1712, %v1674, 0
    %v1720 = vsel %vm1712, %v1679, 0
    %v1723 = vsel %vm1712, %v1684, 0
    %v1726 = vsel %vm1712, %v1689, 0
    %v1729 = vsel %vm1712, %v1694, 0
    %v1732 = vsel %vm1712, %v1699, 0
    %v1735 = vsel %vm1712, %v1704, 0
    %v1738 = vsel %vm1712, %v1707, 0
    %v1741 = vsel %vm1712, %v1708, 0
    %v1744 = vsel %vm1712, %v1709, 0
    %v1747 = vsel %vm1712, %v1710, 0
    %1749 = vmatprep.subr.mxu0 0.0
    %1750 = vmatpush1.xpose.msra.mxu0 0.0
    %1751 = vmatprep.subr.mxu0 0.0
    %1752 = vmatpush1.xpose.msra.mxu0 0.0
    %1753 = vmatprep.subr.mxu0 0.0
    %1754 = vmatpush1.xpose.msra.mxu0 0.0
    %1755 = vmatprep.subr.mxu0 0.0
    %1756 = vmatpush1.xpose.msra.mxu0 0.0
    %1757 = vmatprep.subr.mxu0 0.0
    %1758 = vmatpush1.xpose.msra.mxu0 0.0
    %1759 = vmatprep.subr.mxu0 0.0
    %1760 = vmatpush1.xpose.msra.mxu0 0.0
    %1761 = vmatprep.subr.mxu0 0.0
    %1762 = vmatpush1.xpose.msra.mxu0 0.0
    %1763 = vmatprep.subr.mxu0 0.0
    %1764 = vmatpush1.xpose.msra.mxu0 0.0
    %1765 = vmatprep.subr.mxu0 0.0
    %1766 = vmatpush1.xpose.msra.mxu0 0.0
    %1767 = vmatprep.subr.mxu0 0.0
    %1768 = vmatpush1.xpose.msra.mxu0 0.0
    %1769 = vmatprep.subr.mxu0 0.0
    %1770 = vmatpush1.xpose.msra.mxu0 0.0
    %1771 = vmatprep.subr.mxu0 0.0
    %1772 = vmatpush1.xpose.msra.mxu0 0.0
    %1773 = vmatprep.subr.mxu0 0.0
    %1774 = vmatpush1.xpose.msra.mxu0 %v1747
    %1775 = vmatprep.subr.mxu0 0.0
    %1776 = vmatpush1.xpose.msra.mxu0 %v1744
    %1777 = vmatprep.subr.mxu0 0.0
    %1778 = vmatpush1.xpose.msra.mxu0 %v1741
    %1779 = vmatprep.subr.mxu0 0.0
    %1780 = vmatpush1.xpose.msra.mxu0 %v1738
    %1781 = vmatprep.subr.mxu0 0.0
    %1782 = vmatpush2.xpose.msra.mxu0 0.0
    %1783 = vmatprep.subr.mxu0 0.0
    %1784 = vmatpush2.xpose.msra.mxu0 0.0
    %1785 = vmatprep.subr.mxu0 0.0
    %1786 = vmatpush2.xpose.msra.mxu0 0.0
    %1787 = vmatprep.subr.mxu0 0.0
    %1788 = vmatpush2.xpose.msra.mxu0 0.0
    %1789 = vmatprep.subr.mxu0 0.0
    %1790 = vmatpush2.xpose.msra.mxu0 0.0
    %1791 = vmatprep.subr.mxu0 0.0
    %1792 = vmatpush2.xpose.msra.mxu0 0.0
    %1793 = vmatprep.subr.mxu0 0.0
    %1794 = vmatpush2.xpose.msra.mxu0 0.0
    %1795 = vmatprep.subr.mxu0 0.0
    %1796 = vmatpush2.xpose.msra.mxu0 0.0
    %1797 = vmatprep.subr.mxu0 0.0
    %1798 = vmatpush2.xpose.msra.mxu0 0.0
    %1799 = vmatprep.subr.mxu0 0.0
    %1800 = vmatpush2.xpose.msra.mxu0 0.0
    %1801 = vmatprep.subr.mxu0 0.0
    %1802 = vmatpush2.xpose.msra.mxu0 0.0
    %1803 = vmatprep.subr.mxu0 0.0
    %1804 = vmatpush2.xpose.msra.mxu0 0.0
    %1805 = vmatprep.subr.mxu0 0.0
    %1806 = vmatpush2.xpose.msra.mxu0 0.0
    %1807 = vmatprep.subr.mxu0 0.0
    %1808 = vmatpush2.xpose.msra.mxu0 0.0
    %1809 = vmatprep.subr.mxu0 0.0
    %1810 = vmatpush2.xpose.msra.mxu0 0.0
    %1811 = vmatprep.subr.mxu0 0.0
    %1812 = vmatpush2.xpose.msra.mxu0 0.0
    %1813 = vmatprep.mubr.f32.mxu0 0.0
    %1814 = vmatmul.mubr.f32.gmra.mxu0 %v1714
    %v1815 = vpop.f32.mrf.mxu0
    %v1816 = vadd.f32 0.0, %v1815
    %v1817 = vpop.f32.mrf.mxu0
    %1818 = vmatprep.mubr.f32.mxu0 0.0
    %1819 = vmatmul.mubr.f32.gmra.mxu0 %v1717
    %v1820 = vpop.f32.mrf.mxu0
    %v1821 = vadd.f32 0.0, %v1820
    %v1822 = vpop.f32.mrf.mxu0
    %1823 = vmatprep.mubr.f32.mxu0 0.0
    %1824 = vmatmul.mubr.f32.gmra.mxu0 %v1720
    %v1825 = vpop.f32.mrf.mxu0
    %v1826 = vadd.f32 0.0, %v1825
    %v1827 = vpop.f32.mrf.mxu0
    %1828 = vmatprep.mubr.f32.mxu0 0.0
    %1829 = vmatmul.mubr.f32.gmra.mxu0 %v1723
    %v1830 = vpop.f32.mrf.mxu0
    %v1831 = vadd.f32 0.0, %v1830
    %v1832 = vpop.f32.mrf.mxu0
    %1833 = vmatprep.mubr.f32.mxu0 0.0
    %1834 = vmatmul.mubr.f32.gmra.mxu0 %v1726
    %v1835 = vpop.f32.mrf.mxu0
    %v1836 = vadd.f32 0.0, %v1835
    %v1837 = vpop.f32.mrf.mxu0
    %1838 = vmatprep.mubr.f32.mxu0 0.0
    %1839 = vmatmul.mubr.f32.gmra.mxu0 %v1729
    %v1840 = vpop.f32.mrf.mxu0
    %v1841 = vadd.f32 0.0, %v1840
    %v1842 = vpop.f32.mrf.mxu0
    %1843 = vmatprep.mubr.f32.mxu0 0.0
    %1844 = vmatmul.mubr.f32.gmra.mxu0 %v1732
    %v1845 = vpop.f32.mrf.mxu0
    %v1846 = vadd.f32 0.0, %v1845
    %v1847 = vpop.f32.mrf.mxu0
    %1848 = vmatprep.mubr.f32.mxu0 0.0
    %1849 = vmatmul.mubr.f32.gmra.mxu0 %v1735
    %v1850 = vpop.f32.mrf.mxu0
    %v1851 = vadd.f32 0.0, %v1850
    %v1852 = vpop.f32.mrf.mxu0
    %1853 = vdwg.mxu0
    %v1854 = vmul.f32 %v1816, 2.0
    %v1855 = vmul.f32 %v1821, 2.0
    %v1856 = vmul.f32 %v1826, 2.0
    %v1857 = vmul.f32 %v1831, 2.0
    %v1858 = vmul.f32 %v1836, 2.0
    %v1859 = vmul.f32 %v1841, 2.0
    %v1860 = vmul.f32 %v1846, 2.0
    %v1861 = vmul.f32 %v1851, 2.0
    %v1862 = vlaneseq
    %v1863 = vshrl.u32 %v1862, 7
    %v1864 = vsub.s32 0, %v1863
    %v1865 = vrot.slane %v1711, %v1864
    %v1866 = vsub.f32 %v1865, %v1854
    %v1867 = vsub.f32 %v1865, %v1855
    %v1868 = vsub.f32 %v1865, %v1856
    %v1869 = vsub.f32 %v1865, %v1857
    %v1870 = vsub.f32 %v1865, %v1858
    %v1871 = vsub.f32 %v1865, %v1859
    %v1872 = vsub.f32 %v1865, %v1860
    %v1873 = vsub.f32 %v1865, %v1861
    %v1874 = vsel %vm175, %v1866, inf
    %1875 = vmin.xlane.f32.xlu0 %v1874
    %v1876 = vpop.xlane.xlu0 %1875
    %v1877 = vsel %vm175, %v1867, inf
    %1878 = vmin.xlane.f32.xlu0 %v1877
    %v1879 = vpop.xlane.xlu0 %1878
    %v1880 = vsel %vm175, %v1868, inf
    %1881 = vmin.xlane.f32.xlu0 %v1880
    %v1882 = vpop.xlane.xlu0 %1881
    %v1883 = vsel %vm175, %v1869, inf
    %1884 = vmin.xlane.f32.xlu0 %v1883
    %v1885 = vpop.xlane.xlu0 %1884
    %v1886 = vsel %vm175, %v1870, inf
    %1887 = vmin.xlane.f32.xlu0 %v1886
    %v1888 = vpop.xlane.xlu0 %1887
    %v1889 = vsel %vm175, %v1871, inf
    %1890 = vmin.xlane.f32.xlu0 %v1889
    %v1891 = vpop.xlane.xlu0 %1890
    %v1892 = vsel %vm175, %v1872, inf
    %1893 = vmin.xlane.f32.xlu0 %v1892
    %v1894 = vpop.xlane.xlu0 %1893
    %v1895 = vsel %vm175, %v1873, inf
    %1896 = vmin.xlane.f32.xlu0 %v1895
    %v1897 = vpop.xlane.xlu0 %1896
    %v1898 = vlaneseq
    %v1899 = vand.u32 %v1898, 127
    %vm1900 = vcmp.eq.f32.partialorder %v1866, %v1876
    %vm1901 = vcmp.eq.f32.partialorder %v1867, %v1879
    %vm1902 = vcmp.eq.f32.partialorder %v1868, %v1882
    %vm1903 = vcmp.eq.f32.partialorder %v1869, %v1885
    %vm1904 = vcmp.eq.f32.partialorder %v1870, %v1888
    %vm1905 = vcmp.eq.f32.partialorder %v1871, %v1891
    %vm1906 = vcmp.eq.f32.partialorder %v1872, %v1894
    %vm1907 = vcmp.eq.f32.partialorder %v1873, %v1897
    %v1908 = vsel %vm1900, %v1899, 32
    %v1909 = vsel %vm1901, %v1899, 32
    %v1910 = vsel %vm1902, %v1899, 32
    %v1911 = vsel %vm1903, %v1899, 32
    %v1912 = vsel %vm1904, %v1899, 32
    %v1913 = vsel %vm1905, %v1899, 32
    %v1914 = vsel %vm1906, %v1899, 32
    %v1915 = vsel %vm1907, %v1899, 32
    %v1916 = vsel %vm175, %v1908, 2147483647
    %v1917 = vand.u32 %v1916, 65535
    %v1918 = vshra.s32 %v1916, 16
    %v1919 = vcvt.s32.f32 %v1917
    %v1920 = vcvt.s32.f32 %v1918
    %1921 = vmin.xlane.f32.xlu0 %v1920
    %v1922 = vpop.xlane.xlu0 %1921
    %vm1923 = vcmp.eq.f32.partialorder %v1920, %v1922
    %v1924 = vsel %vm1923, %v1919, inf
    %1925 = vmin.xlane.f32.xlu0 %v1924
    %v1926 = vpop.xlane.xlu0 %1925
    %v1927 = vcvt.f32.s32 %v1926
    %v1928 = vcvt.f32.s32 %v1922
    %v1929 = vshll.u32 %v1928, 16
    %v1930 = vadd.s32 %v1929, %v1927
    %v1931 = vsel %vm175, %v1909, 2147483647
    %v1932 = vand.u32 %v1931, 65535
    %v1933 = vshra.s32 %v1931, 16
    %v1934 = vcvt.s32.f32 %v1932
    %v1935 = vcvt.s32.f32 %v1933
    %1936 = vmin.xlane.f32.xlu0 %v1935
    %v1937 = vpop.xlane.xlu0 %1936
    %vm1938 = vcmp.eq.f32.partialorder %v1935, %v1937
    %v1939 = vsel %vm1938, %v1934, inf
    %1940 = vmin.xlane.f32.xlu0 %v1939
    %v1941 = vpop.xlane.xlu0 %1940
    %v1942 = vcvt.f32.s32 %v1941
    %v1943 = vcvt.f32.s32 %v1937
    %v1944 = vshll.u32 %v1943, 16
    %v1945 = vadd.s32 %v1944, %v1942
    %v1946 = vsel %vm175, %v1910, 2147483647
    %v1947 = vand.u32 %v1946, 65535
    %v1948 = vshra.s32 %v1946, 16
    %v1949 = vcvt.s32.f32 %v1947
    %v1950 = vcvt.s32.f32 %v1948
    %1951 = vmin.xlane.f32.xlu0 %v1950
    %v1952 = vpop.xlane.xlu0 %1951
    %vm1953 = vcmp.eq.f32.partialorder %v1950, %v1952
    %v1954 = vsel %vm1953, %v1949, inf
    %1955 = vmin.xlane.f32.xlu0 %v1954
    %v1956 = vpop.xlane.xlu0 %1955
    %v1957 = vcvt.f32.s32 %v1956
    %v1958 = vcvt.f32.s32 %v1952
    %v1959 = vshll.u32 %v1958, 16
    %v1960 = vadd.s32 %v1959, %v1957
    %v1961 = vsel %vm175, %v1911, 2147483647
    %v1962 = vand.u32 %v1961, 65535
    %v1963 = vshra.s32 %v1961, 16
    %v1964 = vcvt.s32.f32 %v1962
    %v1965 = vcvt.s32.f32 %v1963
    %1966 = vmin.xlane.f32.xlu0 %v1965
    %v1967 = vpop.xlane.xlu0 %1966
    %vm1968 = vcmp.eq.f32.partialorder %v1965, %v1967
    %v1969 = vsel %vm1968, %v1964, inf
    %1970 = vmin.xlane.f32.xlu0 %v1969
    %v1971 = vpop.xlane.xlu0 %1970
    %v1972 = vcvt.f32.s32 %v1971
    %v1973 = vcvt.f32.s32 %v1967
    %v1974 = vshll.u32 %v1973, 16
    %v1975 = vadd.s32 %v1974, %v1972
    %v1976 = vsel %vm175, %v1912, 2147483647
    %v1977 = vand.u32 %v1976, 65535
    %v1978 = vshra.s32 %v1976, 16
    %v1979 = vcvt.s32.f32 %v1977
    %v1980 = vcvt.s32.f32 %v1978
    %1981 = vmin.xlane.f32.xlu0 %v1980
    %v1982 = vpop.xlane.xlu0 %1981
    %vm1983 = vcmp.eq.f32.partialorder %v1980, %v1982
    %v1984 = vsel %vm1983, %v1979, inf
    %1985 = vmin.xlane.f32.xlu0 %v1984
    %v1986 = vpop.xlane.xlu0 %1985
    %v1987 = vcvt.f32.s32 %v1986
    %v1988 = vcvt.f32.s32 %v1982
    %v1989 = vshll.u32 %v1988, 16
    %v1990 = vadd.s32 %v1989, %v1987
    %v1991 = vsel %vm175, %v1913, 2147483647
    %v1992 = vand.u32 %v1991, 65535
    %v1993 = vshra.s32 %v1991, 16
    %v1994 = vcvt.s32.f32 %v1992
    %v1995 = vcvt.s32.f32 %v1993
    %1996 = vmin.xlane.f32.xlu0 %v1995
    %v1997 = vpop.xlane.xlu0 %1996
    %vm1998 = vcmp.eq.f32.partialorder %v1995, %v1997
    %v1999 = vsel %vm1998, %v1994, inf
    %2000 = vmin.xlane.f32.xlu0 %v1999
    %v2001 = vpop.xlane.xlu0 %2000
    %v2002 = vcvt.f32.s32 %v2001
    %v2003 = vcvt.f32.s32 %v1997
    %v2004 = vshll.u32 %v2003, 16
    %v2005 = vadd.s32 %v2004, %v2002
    %v2006 = vsel %vm175, %v1914, 2147483647
    %v2007 = vand.u32 %v2006, 65535
    %v2008 = vshra.s32 %v2006, 16
    %v2009 = vcvt.s32.f32 %v2007
    %v2010 = vcvt.s32.f32 %v2008
    %2011 = vmin.xlane.f32.xlu0 %v2010
    %v2012 = vpop.xlane.xlu0 %2011
    %vm2013 = vcmp.eq.f32.partialorder %v2010, %v2012
    %v2014 = vsel %vm2013, %v2009, inf
    %2015 = vmin.xlane.f32.xlu0 %v2014
    %v2016 = vpop.xlane.xlu0 %2015
    %v2017 = vcvt.f32.s32 %v2016
    %v2018 = vcvt.f32.s32 %v2012
    %v2019 = vshll.u32 %v2018, 16
    %v2020 = vadd.s32 %v2019, %v2017
    %v2021 = vsel %vm175, %v1915, 2147483647
    %v2022 = vand.u32 %v2021, 65535
    %v2023 = vshra.s32 %v2021, 16
    %v2024 = vcvt.s32.f32 %v2022
    %v2025 = vcvt.s32.f32 %v2023
    %2026 = vmin.xlane.f32.xlu0 %v2025
    %v2027 = vpop.xlane.xlu0 %2026
    %vm2028 = vcmp.eq.f32.partialorder %v2025, %v2027
    %v2029 = vsel %vm2028, %v2024, inf
    %2030 = vmin.xlane.f32.xlu0 %v2029
    %v2031 = vpop.xlane.xlu0 %2030
    %v2032 = vcvt.f32.s32 %v2031
    %v2033 = vcvt.f32.s32 %v2027
    %v2034 = vshll.u32 %v2033, 16
    %v2035 = vadd.s32 %v2034, %v2032
    %vm2036 = vcmp.eq.s32.totalorder %v1899, %v1930
    %vm2037 = vcmp.eq.s32.totalorder %v1899, %v1945
    %vm2038 = vcmp.eq.s32.totalorder %v1899, %v1960
    %vm2039 = vcmp.eq.s32.totalorder %v1899, %v1975
    %vm2040 = vcmp.eq.s32.totalorder %v1899, %v1990
    %vm2041 = vcmp.eq.s32.totalorder %v1899, %v2005
    %vm2042 = vcmp.eq.s32.totalorder %v1899, %v2020
    %vm2043 = vcmp.eq.s32.totalorder %v1899, %v2035
    %v2044 = vsel %vm2036, 1, 0
    %v2045 = vsel %vm2037, 1, 0
    %v2046 = vsel %vm2038, 1, 0
    %v2047 = vsel %vm2039, 1, 0
    %v2048 = vsel %vm2040, 1, 0
    %v2049 = vsel %vm2041, 1, 0
    %v2050 = vsel %vm2042, 1, 0
    %v2051 = vsel %vm2043, 1, 0
    %v2052 = vcvt.s32.f32 %v2044
    %v2053 = vcvt.s32.f32 %v2045
    %v2054 = vcvt.s32.f32 %v2046
    %v2055 = vcvt.s32.f32 %v2047
    %v2056 = vcvt.s32.f32 %v2048
    %v2057 = vcvt.s32.f32 %v2049
    %v2058 = vcvt.s32.f32 %v2050
    %v2059 = vcvt.s32.f32 %v2051
    %v2061 = vsel %vm175, %v2052, 0
    %v2064 = vsel %vm175, %v2053, 0
    %v2067 = vsel %vm175, %v2054, 0
    %v2070 = vsel %vm175, %v2055, 0
    %v2073 = vsel %vm175, %v2056, 0
    %v2076 = vsel %vm175, %v2057, 0
    %v2079 = vsel %vm175, %v2058, 0
    %v2082 = vsel %vm175, %v2059, 0
    %2084 = vmatprep.subr.mxu0 0.0
    %2085 = vmatpush1.msra.mxu0 0.0
    %2086 = vmatprep.subr.mxu0 0.0
    %2087 = vmatpush1.msra.mxu0 0.0
    %2088 = vmatprep.subr.mxu0 0.0
    %2089 = vmatpush1.msra.mxu0 0.0
    %2090 = vmatprep.subr.mxu0 0.0
    %2091 = vmatpush1.msra.mxu0 0.0
    %2092 = vmatprep.subr.mxu0 0.0
    %2093 = vmatpush1.msra.mxu0 0.0
    %2094 = vmatprep.subr.mxu0 0.0
    %2095 = vmatpush1.msra.mxu0 0.0
    %2096 = vmatprep.subr.mxu0 0.0
    %2097 = vmatpush1.msra.mxu0 0.0
    %2098 = vmatprep.subr.mxu0 0.0
    %2099 = vmatpush1.msra.mxu0 0.0
    %2100 = vmatprep.subr.mxu0 0.0
    %2101 = vmatpush1.msra.mxu0 0.0
    %2102 = vmatprep.subr.mxu0 0.0
    %2103 = vmatpush1.msra.mxu0 0.0
    %2104 = vmatprep.subr.mxu0 0.0
    %2105 = vmatpush1.msra.mxu0 0.0
    %2106 = vmatprep.subr.mxu0 0.0
    %2107 = vmatpush1.msra.mxu0 0.0
    %2108 = vmatprep.subr.mxu0 0.0
    %2109 = vmatpush1.msra.mxu0 %v1710
    %2110 = vmatprep.subr.mxu0 0.0
    %2111 = vmatpush1.msra.mxu0 %v1709
    %2112 = vmatprep.subr.mxu0 0.0
    %2113 = vmatpush1.msra.mxu0 %v1708
    %2114 = vmatprep.subr.mxu0 0.0
    %2115 = vmatpush1.msra.mxu0 %v1707
    %2116 = vmatprep.subr.mxu0 0.0
    %2117 = vmatpush2.msra.mxu0 0.0
    %2118 = vmatprep.subr.mxu0 0.0
    %2119 = vmatpush2.msra.mxu0 0.0
    %2120 = vmatprep.subr.mxu0 0.0
    %2121 = vmatpush2.msra.mxu0 0.0
    %2122 = vmatprep.subr.mxu0 0.0
    %2123 = vmatpush2.msra.mxu0 0.0
    %2124 = vmatprep.subr.mxu0 0.0
    %2125 = vmatpush2.msra.mxu0 0.0
    %2126 = vmatprep.subr.mxu0 0.0
    %2127 = vmatpush2.msra.mxu0 0.0
    %2128 = vmatprep.subr.mxu0 0.0
    %2129 = vmatpush2.msra.mxu0 0.0
    %2130 = vmatprep.subr.mxu0 0.0
    %2131 = vmatpush2.msra.mxu0 0.0
    %2132 = vmatprep.subr.mxu0 0.0
    %2133 = vmatpush2.msra.mxu0 0.0
    %2134 = vmatprep.subr.mxu0 0.0
    %2135 = vmatpush2.msra.mxu0 0.0
    %2136 = vmatprep.subr.mxu0 0.0
    %2137 = vmatpush2.msra.mxu0 0.0
    %2138 = vmatprep.subr.mxu0 0.0
    %2139 = vmatpush2.msra.mxu0 0.0
    %2140 = vmatprep.subr.mxu0 0.0
    %2141 = vmatpush2.msra.mxu0 0.0
    %2142 = vmatprep.subr.mxu0 0.0
    %2143 = vmatpush2.msra.mxu0 0.0
    %2144 = vmatprep.subr.mxu0 0.0
    %2145 = vmatpush2.msra.mxu0 0.0
    %2146 = vmatprep.subr.mxu0 0.0
    %2147 = vmatpush2.msra.mxu0 0.0
    %2148 = vmatprep.mubr.f32.mxu0 0.0
    %2149 = vmatmul.mubr.f32.gmra.mxu0 %v2061
    %v2150 = vpop.f32.mrf.mxu0
    %v2151 = vadd.f32 0.0, %v2150
    %v2152 = vpop.f32.mrf.mxu0
    %2153 = vmatprep.mubr.f32.mxu0 0.0
    %2154 = vmatmul.mubr.f32.gmra.mxu0 %v2064
    %v2155 = vpop.f32.mrf.mxu0
    %v2156 = vadd.f32 0.0, %v2155
    %v2157 = vpop.f32.mrf.mxu0
    %2158 = vmatprep.mubr.f32.mxu0 0.0
    %2159 = vmatmul.mubr.f32.gmra.mxu0 %v2067
    %v2160 = vpop.f32.mrf.mxu0
    %v2161 = vadd.f32 0.0, %v2160
    %v2162 = vpop.f32.mrf.mxu0
    %2163 = vmatprep.mubr.f32.mxu0 0.0
    %2164 = vmatmul.mubr.f32.gmra.mxu0 %v2070
    %v2165 = vpop.f32.mrf.mxu0
    %v2166 = vadd.f32 0.0, %v2165
    %v2167 = vpop.f32.mrf.mxu0
    %2168 = vmatprep.mubr.f32.mxu0 0.0
    %2169 = vmatmul.mubr.f32.gmra.mxu0 %v2073
    %v2170 = vpop.f32.mrf.mxu0
    %v2171 = vadd.f32 0.0, %v2170
    %v2172 = vpop.f32.mrf.mxu0
    %2173 = vmatprep.mubr.f32.mxu0 0.0
    %2174 = vmatmul.mubr.f32.gmra.mxu0 %v2076
    %v2175 = vpop.f32.mrf.mxu0
    %v2176 = vadd.f32 0.0, %v2175
    %v2177 = vpop.f32.mrf.mxu0
    %2178 = vmatprep.mubr.f32.mxu0 0.0
    %2179 = vmatmul.mubr.f32.gmra.mxu0 %v2079
    %v2180 = vpop.f32.mrf.mxu0
    %v2181 = vadd.f32 0.0, %v2180
    %v2182 = vpop.f32.mrf.mxu0
    %2183 = vmatprep.mubr.f32.mxu0 0.0
    %2184 = vmatmul.mubr.f32.gmra.mxu0 %v2082
    %v2185 = vpop.f32.mrf.mxu0
    %v2186 = vadd.f32 0.0, %v2185
    %v2187 = vpop.f32.mrf.mxu0
    %2188 = vdwg.mxu0
    %v2189 = vld [vmem:[#allocation2 + $0x170] sm:$0xff]
    %v2190 = vld [vmem:[%s2 + $0xf] sm:$0x1]
    %v2191 = vlaneseq
    %v2192 = vshrl.u32 %v2191, 7
    %v2193 = vsub.s32 0, %v2192
    %v2194 = vrot.slane %v2190, %v2193
    %v2196 = vsel %vm1712, %v2151, 0
    %v2199 = vsel %vm1712, %v2156, 0
    %v2202 = vsel %vm1712, %v2161, 0
    %v2205 = vsel %vm1712, %v2166, 0
    %v2208 = vsel %vm1712, %v2171, 0
    %v2211 = vsel %vm1712, %v2176, 0
    %v2214 = vsel %vm1712, %v2181, 0
    %v2217 = vsel %vm1712, %v2186, 0
    %2219 = vmatprep.subr.mxu0 0.0
    %2220 = vmatpush1.msra.mxu0 0.0
    %2221 = vmatprep.subr.mxu0 0.0
    %2222 = vmatpush1.msra.mxu0 0.0
    %2223 = vmatprep.subr.mxu0 0.0
    %2224 = vmatpush1.msra.mxu0 0.0
    %2225 = vmatprep.subr.mxu0 0.0
    %2226 = vmatpush1.msra.mxu0 0.0
    %2227 = vmatprep.subr.mxu0 0.0
    %2228 = vmatpush1.msra.mxu0 0.0
    %2229 = vmatprep.subr.mxu0 0.0
    %2230 = vmatpush1.msra.mxu0 0.0
    %2231 = vmatprep.subr.mxu0 0.0
    %2232 = vmatpush1.msra.mxu0 0.0
    %2233 = vmatprep.subr.mxu0 0.0
    %2234 = vmatpush1.msra.mxu0 0.0
    %2235 = vmatprep.subr.mxu0 0.0
    %2236 = vmatpush1.msra.mxu0 0.0
    %2237 = vmatprep.subr.mxu0 0.0
    %2238 = vmatpush1.msra.mxu0 0.0
    %2239 = vmatprep.subr.mxu0 0.0
    %2240 = vmatpush1.msra.mxu0 0.0
    %2241 = vmatprep.subr.mxu0 0.0
    %2242 = vmatpush1.msra.mxu0 0.0
    %2243 = vmatprep.subr.mxu0 0.0
    %2244 = vmatpush1.msra.mxu0 0.0
    %2245 = vmatprep.subr.mxu0 0.0
    %2246 = vmatpush1.msra.mxu0 0.0
    %2247 = vmatprep.subr.mxu0 0.0
    %2248 = vmatpush1.msra.mxu0 0.0
    %2249 = vmatprep.subr.mxu0 0.0
    %2250 = vmatpush1.msra.mxu0 %v2189
    %2251 = vmatprep.subr.mxu0 0.0
    %2252 = vmatpush2.msra.mxu0 0.0
    %2253 = vmatprep.subr.mxu0 0.0
    %2254 = vmatpush2.msra.mxu0 0.0
    %2255 = vmatprep.subr.mxu0 0.0
    %2256 = vmatpush2.msra.mxu0 0.0
    %2257 = vmatprep.subr.mxu0 0.0
    %2258 = vmatpush2.msra.mxu0 0.0
    %2259 = vmatprep.subr.mxu0 0.0
    %2260 = vmatpush2.msra.mxu0 0.0
    %2261 = vmatprep.subr.mxu0 0.0
    %2262 = vmatpush2.msra.mxu0 0.0
    %2263 = vmatprep.subr.mxu0 0.0
    %2264 = vmatpush2.msra.mxu0 0.0
    %2265 = vmatprep.subr.mxu0 0.0
    %2266 = vmatpush2.msra.mxu0 0.0
    %2267 = vmatprep.subr.mxu0 0.0
    %2268 = vmatpush2.msra.mxu0 0.0
    %2269 = vmatprep.subr.mxu0 0.0
    %2270 = vmatpush2.msra.mxu0 0.0
    %2271 = vmatprep.subr.mxu0 0.0
    %2272 = vmatpush2.msra.mxu0 0.0
    %2273 = vmatprep.subr.mxu0 0.0
    %2274 = vmatpush2.msra.mxu0 0.0
    %2275 = vmatprep.subr.mxu0 0.0
    %2276 = vmatpush2.msra.mxu0 0.0
    %2277 = vmatprep.subr.mxu0 0.0
    %2278 = vmatpush2.msra.mxu0 0.0
    %2279 = vmatprep.subr.mxu0 0.0
    %2280 = vmatpush2.msra.mxu0 0.0
    %2281 = vmatprep.subr.mxu0 0.0
    %2282 = vmatpush2.msra.mxu0 0.0
    %2283 = vmatprep.mubr.f32.mxu0 0.0
    %2284 = vmatmul.mubr.f32.gmra.mxu0 %v2196
    %v2285 = vpop.f32.mrf.mxu0
    %v2286 = vadd.f32 %v2194, %v2285
    %v2287 = vpop.f32.mrf.mxu0
    %2288 = vmatprep.mubr.f32.mxu0 0.0
    %2289 = vmatmul.mubr.f32.gmra.mxu0 %v2199
    %v2290 = vpop.f32.mrf.mxu0
    %v2291 = vadd.f32 %v2194, %v2290
    %v2292 = vpop.f32.mrf.mxu0
    %2293 = vmatprep.mubr.f32.mxu0 0.0
    %2294 = vmatmul.mubr.f32.gmra.mxu0 %v2202
    %v2295 = vpop.f32.mrf.mxu0
    %v2296 = vadd.f32 %v2194, %v2295
    %v2297 = vpop.f32.mrf.mxu0
    %2298 = vmatprep.mubr.f32.mxu0 0.0
    %2299 = vmatmul.mubr.f32.gmra.mxu0 %v2205
    %v2300 = vpop.f32.mrf.mxu0
    %v2301 = vadd.f32 %v2194, %v2300
    %v2302 = vpop.f32.mrf.mxu0
    %2303 = vmatprep.mubr.f32.mxu0 0.0
    %2304 = vmatmul.mubr.f32.gmra.mxu0 %v2208
    %v2305 = vpop.f32.mrf.mxu0
    %v2306 = vadd.f32 %v2194, %v2305
    %v2307 = vpop.f32.mrf.mxu0
    %2308 = vmatprep.mubr.f32.mxu0 0.0
    %2309 = vmatmul.mubr.f32.gmra.mxu0 %v2211
    %v2310 = vpop.f32.mrf.mxu0
    %v2311 = vadd.f32 %v2194, %v2310
    %v2312 = vpop.f32.mrf.mxu0
    %2313 = vmatprep.mubr.f32.mxu0 0.0
    %2314 = vmatmul.mubr.f32.gmra.mxu0 %v2214
    %v2315 = vpop.f32.mrf.mxu0
    %v2316 = vadd.f32 %v2194, %v2315
    %v2317 = vpop.f32.mrf.mxu0
    %2318 = vmatprep.mubr.f32.mxu0 0.0
    %2319 = vmatmul.mubr.f32.gmra.mxu0 %v2217
    %v2320 = vpop.f32.mrf.mxu0
    %v2321 = vadd.f32 %v2194, %v2320
    %v2322 = vpop.f32.mrf.mxu0
    %2323 = vdwg.mxu0
    %v2324 = vld [vmem:[%s2 + $0x10] sm:$0x1]
    %v2325 = vld [vmem:[%s2 + $0x11] sm:$0x1]
    %v2326 = vsel %vm464, %v2286, 0.0
    %v2327 = vsel %vm464, %v2291, 0.0
    %v2328 = vadd.f32 %v2326, %v2327
    %v2329 = vsel %vm464, %v2296, 0.0
    %v2330 = vadd.f32 %v2328, %v2329
    %v2331 = vsel %vm464, %v2301, 0.0
    %v2332 = vadd.f32 %v2330, %v2331
    %v2333 = vsel %vm464, %v2306, 0.0
    %v2334 = vadd.f32 %v2332, %v2333
    %v2335 = vsel %vm464, %v2311, 0.0
    %v2336 = vadd.f32 %v2334, %v2335
    %v2337 = vsel %vm464, %v2316, 0.0
    %v2338 = vadd.f32 %v2336, %v2337
    %v2339 = vsel %vm464, %v2321, 0.0
    %v2340 = vadd.f32 %v2338, %v2339
    %v2341 = vrot.slane %v2340, 4
    %v2342 = vadd.f32 %v2340, %v2341
    %v2343 = vrot.slane %v2342, 2
    %v2344 = vadd.f32 %v2342, %v2343
    %v2345 = vrot.slane %v2344, 1
    %v2346 = vadd.f32 %v2344, %v2345
    %v2347 = vmul.f32 %v2286, %v2286
    %v2348 = vmul.f32 %v2291, %v2291
    %v2349 = vmul.f32 %v2296, %v2296
    %v2350 = vmul.f32 %v2301, %v2301
    %v2351 = vmul.f32 %v2306, %v2306
    %v2352 = vmul.f32 %v2311, %v2311
    %v2353 = vmul.f32 %v2316, %v2316
    %v2354 = vmul.f32 %v2321, %v2321
    %v2355 = vsel %vm464, %v2347, 0.0
    %v2356 = vsel %vm464, %v2348, 0.0
    %v2357 = vadd.f32 %v2355, %v2356
    %v2358 = vsel %vm464, %v2349, 0.0
    %v2359 = vadd.f32 %v2357, %v2358
    %v2360 = vsel %vm464, %v2350, 0.0
    %v2361 = vadd.f32 %v2359, %v2360
    %v2362 = vsel %vm464, %v2351, 0.0
    %v2363 = vadd.f32 %v2361, %v2362
    %v2364 = vsel %vm464, %v2352, 0.0
    %v2365 = vadd.f32 %v2363, %v2364
    %v2366 = vsel %vm464, %v2353, 0.0
    %v2367 = vadd.f32 %v2365, %v2366
    %v2368 = vsel %vm464, %v2354, 0.0
    %v2369 = vadd.f32 %v2367, %v2368
    %v2370 = vrot.slane %v2369, 4
    %v2371 = vadd.f32 %v2369, %v2370
    %v2372 = vrot.slane %v2371, 2
    %v2373 = vadd.f32 %v2371, %v2372
    %v2374 = vrot.slane %v2373, 1
    %v2375 = vadd.f32 %v2373, %v2374
    %v2376 = vmul.f32 %v2346, 0.015625
    %v2377 = vmul.f32 %v2375, 0.015625
    %v2378 = vmul.f32 %v2376, %v2376
    %v2379 = vsub.f32 %v2377, %v2378
    %v2380 = vmax.f32 %v2379, 0.0
    %v2381 = vsub.f32 %v2286, %v2376
    %v2382 = vsub.f32 %v2291, %v2376
    %v2383 = vsub.f32 %v2296, %v2376
    %v2384 = vsub.f32 %v2301, %v2376
    %v2385 = vsub.f32 %v2306, %v2376
    %v2386 = vsub.f32 %v2311, %v2376
    %v2387 = vsub.f32 %v2316, %v2376
    %v2388 = vsub.f32 %v2321, %v2376
    %v2389 = vadd.f32 %v2380, 1e-05
    %v2390 = vrsqrt.pop %v2389
    %v2391 = vmul.f32 %v2381, %v2390
    %v2392 = vmul.f32 %v2382, %v2390
    %v2393 = vmul.f32 %v2383, %v2390
    %v2394 = vmul.f32 %v2384, %v2390
    %v2395 = vmul.f32 %v2385, %v2390
    %v2396 = vmul.f32 %v2386, %v2390
    %v2397 = vmul.f32 %v2387, %v2390
    %v2398 = vmul.f32 %v2388, %v2390
    %v2399 = vlaneseq
    %v2400 = vshrl.u32 %v2399, 7
    %v2401 = vsub.s32 0, %v2400
    %v2402 = vrot.slane %v2324, %v2401
    %v2403 = vmul.f32 %v2391, %v2402
    %v2404 = vmul.f32 %v2392, %v2402
    %v2405 = vmul.f32 %v2393, %v2402
    %v2406 = vmul.f32 %v2394, %v2402
    %v2407 = vmul.f32 %v2395, %v2402
    %v2408 = vmul.f32 %v2396, %v2402
    %v2409 = vmul.f32 %v2397, %v2402
    %v2410 = vmul.f32 %v2398, %v2402
    %v2411 = vlaneseq
    %v2412 = vshrl.u32 %v2411, 7
    %v2413 = vsub.s32 0, %v2412
    %v2414 = vrot.slane %v2325, %v2413
    %v2415 = vadd.f32 %v2403, %v2414
    %v2416 = vadd.f32 %v2404, %v2414
    %v2417 = vadd.f32 %v2405, %v2414
    %v2418 = vadd.f32 %v2406, %v2414
    %v2419 = vadd.f32 %v2407, %v2414
    %v2420 = vadd.f32 %v2408, %v2414
    %v2421 = vadd.f32 %v2409, %v2414
    %v2422 = vadd.f32 %v2410, %v2414
    %v2423 = vxor.u32 %v2415, 2147483648
    %v2424 = vxor.u32 %v2416, 2147483648
    %v2425 = vxor.u32 %v2417, 2147483648
    %v2426 = vxor.u32 %v2418, 2147483648
    %v2427 = vxor.u32 %v2419, 2147483648
    %v2428 = vxor.u32 %v2420, 2147483648
    %v2429 = vxor.u32 %v2421, 2147483648
    %v2430 = vxor.u32 %v2422, 2147483648
    %v2431 = vmul.f32 %v2423, 1.442695
    %v2432 = vpow.pop %v2431
    %v2433 = vmul.f32 %v2424, 1.442695
    %v2434 = vpow.pop %v2433
    %v2435 = vmul.f32 %v2425, 1.442695
    %v2436 = vpow.pop %v2435
    %v2437 = vmul.f32 %v2426, 1.442695
    %v2438 = vpow.pop %v2437
    %v2439 = vmul.f32 %v2427, 1.442695
    %v2440 = vpow.pop %v2439
    %v2441 = vmul.f32 %v2428, 1.442695
    %v2442 = vpow.pop %v2441
    %v2443 = vmul.f32 %v2429, 1.442695
    %v2444 = vpow.pop %v2443
    %v2445 = vmul.f32 %v2430, 1.442695
    %v2446 = vpow.pop %v2445
    %v2447 = vadd.f32 %v2432, 1.0
    %v2448 = vadd.f32 %v2434, 1.0
    %v2449 = vadd.f32 %v2436, 1.0
    %v2450 = vadd.f32 %v2438, 1.0
    %v2451 = vadd.f32 %v2440, 1.0
    %v2452 = vadd.f32 %v2442, 1.0
    %v2453 = vadd.f32 %v2444, 1.0
    %v2454 = vadd.f32 %v2446, 1.0
    %v2455 = vrcp.pop %v2447
    %v2456 = vmul.f32 1.0, %v2455
    %v2457 = vrcp.pop %v2448
    %v2458 = vmul.f32 1.0, %v2457
    %v2459 = vrcp.pop %v2449
    %v2460 = vmul.f32 1.0, %v2459
    %v2461 = vrcp.pop %v2450
    %v2462 = vmul.f32 1.0, %v2461
    %v2463 = vrcp.pop %v2451
    %v2464 = vmul.f32 1.0, %v2463
    %v2465 = vrcp.pop %v2452
    %v2466 = vmul.f32 1.0, %v2465
    %v2467 = vrcp.pop %v2453
    %v2468 = vmul.f32 1.0, %v2467
    %v2469 = vrcp.pop %v2454
    %v2470 = vmul.f32 1.0, %v2469
    %v2471 = vmul.f32 %v2415, %v2456
    %v2472 = vmul.f32 %v2416, %v2458
    %v2473 = vmul.f32 %v2417, %v2460
    %v2474 = vmul.f32 %v2418, %v2462
    %v2475 = vmul.f32 %v2419, %v2464
    %v2476 = vmul.f32 %v2420, %v2466
    %v2477 = vmul.f32 %v2421, %v2468
    %v2478 = vmul.f32 %v2422, %v2470
    %v2479 = vld [vmem:[#allocation2 + $0x178] sm:$0xff]
    %v2480 = vld [vmem:[#allocation2 + $0x180] sm:$0xff]
    %v2481 = vld [vmem:[#allocation2 + $0x188] sm:$0xff]
    %v2482 = vld [vmem:[#allocation2 + $0x190] sm:$0xff]
    %v2483 = vld [vmem:[#allocation2 + $0x198] sm:$0xff]
    %v2484 = vld [vmem:[#allocation2 + $0x1a0] sm:$0xff]
    %v2485 = vld [vmem:[#allocation2 + $0x1a8] sm:$0xff]
    %v2486 = vld [vmem:[#allocation2 + $0x1b0] sm:$0xff]
    %v2488 = vsel %vm464, %v2471, 0
    %v2491 = vsel %vm464, %v2472, 0
    %v2494 = vsel %vm464, %v2473, 0
    %v2497 = vsel %vm464, %v2474, 0
    %v2500 = vsel %vm464, %v2475, 0
    %v2503 = vsel %vm464, %v2476, 0
    %v2506 = vsel %vm464, %v2477, 0
    %v2509 = vsel %vm464, %v2478, 0
    %2511 = vmatprep.subr.mxu0 0.0
    %2512 = vmatpush1.msra.mxu0 0.0
    %2513 = vmatprep.subr.mxu0 0.0
    %2514 = vmatpush1.msra.mxu0 0.0
    %2515 = vmatprep.subr.mxu0 0.0
    %2516 = vmatpush1.msra.mxu0 0.0
    %2517 = vmatprep.subr.mxu0 0.0
    %2518 = vmatpush1.msra.mxu0 0.0
    %2519 = vmatprep.subr.mxu0 0.0
    %2520 = vmatpush1.msra.mxu0 0.0
    %2521 = vmatprep.subr.mxu0 0.0
    %2522 = vmatpush1.msra.mxu0 0.0
    %2523 = vmatprep.subr.mxu0 0.0
    %2524 = vmatpush1.msra.mxu0 0.0
    %2525 = vmatprep.subr.mxu0 0.0
    %2526 = vmatpush1.msra.mxu0 0.0
    %2527 = vmatprep.subr.mxu0 0.0
    %2528 = vmatpush1.msra.mxu0 %v2486
    %2529 = vmatprep.subr.mxu0 0.0
    %2530 = vmatpush1.msra.mxu0 %v2485
    %2531 = vmatprep.subr.mxu0 0.0
    %2532 = vmatpush1.msra.mxu0 %v2484
    %2533 = vmatprep.subr.mxu0 0.0
    %2534 = vmatpush1.msra.mxu0 %v2483
    %2535 = vmatprep.subr.mxu0 0.0
    %2536 = vmatpush1.msra.mxu0 %v2482
    %2537 = vmatprep.subr.mxu0 0.0
    %2538 = vmatpush1.msra.mxu0 %v2481
    %2539 = vmatprep.subr.mxu0 0.0
    %2540 = vmatpush1.msra.mxu0 %v2480
    %2541 = vmatprep.subr.mxu0 0.0
    %2542 = vmatpush1.msra.mxu0 %v2479
    %2543 = vmatprep.subr.mxu0 0.0
    %2544 = vmatpush2.msra.mxu0 0.0
    %2545 = vmatprep.subr.mxu0 0.0
    %2546 = vmatpush2.msra.mxu0 0.0
    %2547 = vmatprep.subr.mxu0 0.0
    %2548 = vmatpush2.msra.mxu0 0.0
    %2549 = vmatprep.subr.mxu0 0.0
    %2550 = vmatpush2.msra.mxu0 0.0
    %2551 = vmatprep.subr.mxu0 0.0
    %2552 = vmatpush2.msra.mxu0 0.0
    %2553 = vmatprep.subr.mxu0 0.0
    %2554 = vmatpush2.msra.mxu0 0.0
    %2555 = vmatprep.subr.mxu0 0.0
    %2556 = vmatpush2.msra.mxu0 0.0
    %2557 = vmatprep.subr.mxu0 0.0
    %2558 = vmatpush2.msra.mxu0 0.0
    %2559 = vmatprep.subr.mxu0 0.0
    %2560 = vmatpush2.msra.mxu0 0.0
    %2561 = vmatprep.subr.mxu0 0.0
    %2562 = vmatpush2.msra.mxu0 0.0
    %2563 = vmatprep.subr.mxu0 0.0
    %2564 = vmatpush2.msra.mxu0 0.0
    %2565 = vmatprep.subr.mxu0 0.0
    %2566 = vmatpush2.msra.mxu0 0.0
    %2567 = vmatprep.subr.mxu0 0.0
    %2568 = vmatpush2.msra.mxu0 0.0
    %2569 = vmatprep.subr.mxu0 0.0
    %2570 = vmatpush2.msra.mxu0 0.0
    %2571 = vmatprep.subr.mxu0 0.0
    %2572 = vmatpush2.msra.mxu0 0.0
    %2573 = vmatprep.subr.mxu0 0.0
    %2574 = vmatpush2.msra.mxu0 0.0
    %2575 = vmatprep.mubr.f32.mxu0 0.0
    %2576 = vmatmul.mubr.f32.gmra.mxu0 %v2488
    %v2577 = vpop.f32.mrf.mxu0
    %v2578 = vadd.f32 0.0, %v2577
    %v2579 = vpop.f32.mrf.mxu0
    %2580 = vmatprep.mubr.f32.mxu0 0.0
    %2581 = vmatmul.mubr.f32.gmra.mxu0 %v2491
    %v2582 = vpop.f32.mrf.mxu0
    %v2583 = vadd.f32 0.0, %v2582
    %v2584 = vpop.f32.mrf.mxu0
    %2585 = vmatprep.mubr.f32.mxu0 0.0
    %2586 = vmatmul.mubr.f32.gmra.mxu0 %v2494
    %v2587 = vpop.f32.mrf.mxu0
    %v2588 = vadd.f32 0.0, %v2587
    %v2589 = vpop.f32.mrf.mxu0
    %2590 = vmatprep.mubr.f32.mxu0 0.0
    %2591 = vmatmul.mubr.f32.gmra.mxu0 %v2497
    %v2592 = vpop.f32.mrf.mxu0
    %v2593 = vadd.f32 0.0, %v2592
    %v2594 = vpop.f32.mrf.mxu0
    %2595 = vmatprep.mubr.f32.mxu0 0.0
    %2596 = vmatmul.mubr.f32.gmra.mxu0 %v2500
    %v2597 = vpop.f32.mrf.mxu0
    %v2598 = vadd.f32 0.0, %v2597
    %v2599 = vpop.f32.mrf.mxu0
    %2600 = vmatprep.mubr.f32.mxu0 0.0
    %2601 = vmatmul.mubr.f32.gmra.mxu0 %v2503
    %v2602 = vpop.f32.mrf.mxu0
    %v2603 = vadd.f32 0.0, %v2602
    %v2604 = vpop.f32.mrf.mxu0
    %2605 = vmatprep.mubr.f32.mxu0 0.0
    %2606 = vmatmul.mubr.f32.gmra.mxu0 %v2506
    %v2607 = vpop.f32.mrf.mxu0
    %v2608 = vadd.f32 0.0, %v2607
    %v2609 = vpop.f32.mrf.mxu0
    %2610 = vmatprep.mubr.f32.mxu0 0.0
    %2611 = vmatmul.mubr.f32.gmra.mxu0 %v2509
    %v2612 = vpop.f32.mrf.mxu0
    %v2613 = vadd.f32 0.0, %v2612
    %v2614 = vpop.f32.mrf.mxu0
    %2615 = vdwg.mxu0
    %v2616 = vld [vmem:[%s2 + $0x12] sm:$0x1]
    %v2617 = vld [vmem:[%s2 + $0x13] sm:$0x1]
    %v2618 = vsel %vm175, %v2578, 0.0
    %v2619 = vsel %vm175, %v2583, 0.0
    %v2620 = vadd.f32 %v2618, %v2619
    %v2621 = vsel %vm175, %v2588, 0.0
    %v2622 = vadd.f32 %v2620, %v2621
    %v2623 = vsel %vm175, %v2593, 0.0
    %v2624 = vadd.f32 %v2622, %v2623
    %v2625 = vsel %vm175, %v2598, 0.0
    %v2626 = vadd.f32 %v2624, %v2625
    %v2627 = vsel %vm175, %v2603, 0.0
    %v2628 = vadd.f32 %v2626, %v2627
    %v2629 = vsel %vm175, %v2608, 0.0
    %v2630 = vadd.f32 %v2628, %v2629
    %v2631 = vsel %vm175, %v2613, 0.0
    %v2632 = vadd.f32 %v2630, %v2631
    %v2633 = vrot.slane %v2632, 4
    %v2634 = vadd.f32 %v2632, %v2633
    %v2635 = vrot.slane %v2634, 2
    %v2636 = vadd.f32 %v2634, %v2635
    %v2637 = vrot.slane %v2636, 1
    %v2638 = vadd.f32 %v2636, %v2637
    %v2639 = vmul.f32 %v2578, %v2578
    %v2640 = vmul.f32 %v2583, %v2583
    %v2641 = vmul.f32 %v2588, %v2588
    %v2642 = vmul.f32 %v2593, %v2593
    %v2643 = vmul.f32 %v2598, %v2598
    %v2644 = vmul.f32 %v2603, %v2603
    %v2645 = vmul.f32 %v2608, %v2608
    %v2646 = vmul.f32 %v2613, %v2613
    %v2647 = vsel %vm175, %v2639, 0.0
    %v2648 = vsel %vm175, %v2640, 0.0
    %v2649 = vadd.f32 %v2647, %v2648
    %v2650 = vsel %vm175, %v2641, 0.0
    %v2651 = vadd.f32 %v2649, %v2650
    %v2652 = vsel %vm175, %v2642, 0.0
    %v2653 = vadd.f32 %v2651, %v2652
    %v2654 = vsel %vm175, %v2643, 0.0
    %v2655 = vadd.f32 %v2653, %v2654
    %v2656 = vsel %vm175, %v2644, 0.0
    %v2657 = vadd.f32 %v2655, %v2656
    %v2658 = vsel %vm175, %v2645, 0.0
    %v2659 = vadd.f32 %v2657, %v2658
    %v2660 = vsel %vm175, %v2646, 0.0
    %v2661 = vadd.f32 %v2659, %v2660
    %v2662 = vrot.slane %v2661, 4
    %v2663 = vadd.f32 %v2661, %v2662
    %v2664 = vrot.slane %v2663, 2
    %v2665 = vadd.f32 %v2663, %v2664
    %v2666 = vrot.slane %v2665, 1
    %v2667 = vadd.f32 %v2665, %v2666
    %v2668 = vmul.f32 %v2638, 0.015625
    %v2669 = vmul.f32 %v2667, 0.015625
    %v2670 = vmul.f32 %v2668, %v2668
    %v2671 = vsub.f32 %v2669, %v2670
    %v2672 = vmax.f32 %v2671, 0.0
    %v2673 = vsub.f32 %v2578, %v2668
    %v2674 = vsub.f32 %v2583, %v2668
    %v2675 = vsub.f32 %v2588, %v2668
    %v2676 = vsub.f32 %v2593, %v2668
    %v2677 = vsub.f32 %v2598, %v2668
    %v2678 = vsub.f32 %v2603, %v2668
    %v2679 = vsub.f32 %v2608, %v2668
    %v2680 = vsub.f32 %v2613, %v2668
    %v2681 = vadd.f32 %v2672, 1e-05
    %v2682 = vrsqrt.pop %v2681
    %v2683 = vmul.f32 %v2673, %v2682
    %v2684 = vmul.f32 %v2674, %v2682
    %v2685 = vmul.f32 %v2675, %v2682
    %v2686 = vmul.f32 %v2676, %v2682
    %v2687 = vmul.f32 %v2677, %v2682
    %v2688 = vmul.f32 %v2678, %v2682
    %v2689 = vmul.f32 %v2679, %v2682
    %v2690 = vmul.f32 %v2680, %v2682
    %v2691 = vlaneseq
    %v2692 = vshrl.u32 %v2691, 7
    %v2693 = vsub.s32 0, %v2692
    %v2694 = vrot.slane %v2616, %v2693
    %v2695 = vmul.f32 %v2683, %v2694
    %v2696 = vmul.f32 %v2684, %v2694
    %v2697 = vmul.f32 %v2685, %v2694
    %v2698 = vmul.f32 %v2686, %v2694
    %v2699 = vmul.f32 %v2687, %v2694
    %v2700 = vmul.f32 %v2688, %v2694
    %v2701 = vmul.f32 %v2689, %v2694
    %v2702 = vmul.f32 %v2690, %v2694
    %v2703 = vlaneseq
    %v2704 = vshrl.u32 %v2703, 7
    %v2705 = vsub.s32 0, %v2704
    %v2706 = vrot.slane %v2617, %v2705
    %v2707 = vadd.f32 %v2695, %v2706
    %v2708 = vadd.f32 %v2696, %v2706
    %v2709 = vadd.f32 %v2697, %v2706
    %v2710 = vadd.f32 %v2698, %v2706
    %v2711 = vadd.f32 %v2699, %v2706
    %v2712 = vadd.f32 %v2700, %v2706
    %v2713 = vadd.f32 %v2701, %v2706
    %v2714 = vadd.f32 %v2702, %v2706
    %v2715 = vxor.u32 %v2707, 2147483648
    %v2716 = vxor.u32 %v2708, 2147483648
    %v2717 = vxor.u32 %v2709, 2147483648
    %v2718 = vxor.u32 %v2710, 2147483648
    %v2719 = vxor.u32 %v2711, 2147483648
    %v2720 = vxor.u32 %v2712, 2147483648
    %v2721 = vxor.u32 %v2713, 2147483648
    %v2722 = vxor.u32 %v2714, 2147483648
    %v2723 = vmul.f32 %v2715, 1.442695
    %v2724 = vpow.pop %v2723
    %v2725 = vmul.f32 %v2716, 1.442695
    %v2726 = vpow.pop %v2725
    %v2727 = vmul.f32 %v2717, 1.442695
    %v2728 = vpow.pop %v2727
    %v2729 = vmul.f32 %v2718, 1.442695
    %v2730 = vpow.pop %v2729
    %v2731 = vmul.f32 %v2719, 1.442695
    %v2732 = vpow.pop %v2731
    %v2733 = vmul.f32 %v2720, 1.442695
    %v2734 = vpow.pop %v2733
    %v2735 = vmul.f32 %v2721, 1.442695
    %v2736 = vpow.pop %v2735
    %v2737 = vmul.f32 %v2722, 1.442695
    %v2738 = vpow.pop %v2737
    %v2739 = vadd.f32 %v2724, 1.0
    %v2740 = vadd.f32 %v2726, 1.0
    %v2741 = vadd.f32 %v2728, 1.0
    %v2742 = vadd.f32 %v2730, 1.0
    %v2743 = vadd.f32 %v2732, 1.0
    %v2744 = vadd.f32 %v2734, 1.0
    %v2745 = vadd.f32 %v2736, 1.0
    %v2746 = vadd.f32 %v2738, 1.0
    %v2747 = vrcp.pop %v2739
    %v2748 = vmul.f32 1.0, %v2747
    %v2749 = vrcp.pop %v2740
    %v2750 = vmul.f32 1.0, %v2749
    %v2751 = vrcp.pop %v2741
    %v2752 = vmul.f32 1.0, %v2751
    %v2753 = vrcp.pop %v2742
    %v2754 = vmul.f32 1.0, %v2753
    %v2755 = vrcp.pop %v2743
    %v2756 = vmul.f32 1.0, %v2755
    %v2757 = vrcp.pop %v2744
    %v2758 = vmul.f32 1.0, %v2757
    %v2759 = vrcp.pop %v2745
    %v2760 = vmul.f32 1.0, %v2759
    %v2761 = vrcp.pop %v2746
    %v2762 = vmul.f32 1.0, %v2761
    %v2763 = vmul.f32 %v2707, %v2748
    %v2764 = vmul.f32 %v2708, %v2750
    %v2765 = vmul.f32 %v2709, %v2752
    %v2766 = vmul.f32 %v2710, %v2754
    %v2767 = vmul.f32 %v2711, %v2756
    %v2768 = vmul.f32 %v2712, %v2758
    %v2769 = vmul.f32 %v2713, %v2760
    %v2770 = vmul.f32 %v2714, %v2762
    %2779 = vrot.lane.b32.xlu0 %v2286, 32
    %v2780 = vpop.permute.xlu0 %2779
    %2781 = vrot.lane.b32.xlu0 %v2291, 32
    %v2782 = vpop.permute.xlu0 %2781
    %2783 = vrot.lane.b32.xlu0 %v2296, 32
    %v2784 = vpop.permute.xlu0 %2783
    %2785 = vrot.lane.b32.xlu0 %v2301, 32
    %v2786 = vpop.permute.xlu0 %2785
    %2787 = vrot.lane.b32.xlu0 %v2306, 32
    %v2788 = vpop.permute.xlu0 %2787
    %2789 = vrot.lane.b32.xlu0 %v2311, 32
    %v2790 = vpop.permute.xlu0 %2789
    %2791 = vrot.lane.b32.xlu0 %v2316, 32
    %v2792 = vpop.permute.xlu0 %2791
    %2793 = vrot.lane.b32.xlu0 %v2321, 32
    %v2794 = vpop.permute.xlu0 %2793
    %v2803 = vsel %vm175, %v2763, %v2780
    %v2804 = vsel %vm175, %v2764, %v2782
    %v2805 = vsel %vm175, %v2765, %v2784
    %v2806 = vsel %vm175, %v2766, %v2786
    %v2807 = vsel %vm175, %v2767, %v2788
    %v2808 = vsel %vm175, %v2768, %v2790
    %v2809 = vsel %vm175, %v2769, %v2792
    %v2810 = vsel %vm175, %v2770, %v2794
    %v2811 = vld [vmem:[#allocation2 + $0x1b8] sm:$0xff]
    %v2812 = vld [vmem:[#allocation2 + $0x1c0] sm:$0xff]
    %v2813 = vld [vmem:[#allocation2 + $0x1c8] sm:$0xff]
    %v2814 = vld [vmem:[#allocation2 + $0x1d0] sm:$0xff]
    %v2815 = vld [vmem:[#allocation2 + $0x1d8] sm:$0xff]
    %v2816 = vld [vmem:[#allocation2 + $0x1e0] sm:$0xff]
    %v2817 = vld [vmem:[#allocation2 + $0x1e8] sm:$0xff]
    %v2818 = vld [vmem:[#allocation2 + $0x1f0] sm:$0xff]
    %v2819 = vld [vmem:[#allocation2 + $0x1f8] sm:$0xff]
    %v2820 = vld [vmem:[#allocation2 + $0x200] sm:$0xff]
    %v2821 = vld [vmem:[#allocation2 + $0x208] sm:$0xff]
    %v2822 = vld [vmem:[#allocation2 + $0x210] sm:$0xff]
    %v2823 = vld [vmem:[%s2 + $0x14] sm:$0x1]
    %v2824 = vlaneseq
    %v2825 = vshrl.u32 %v2824, 7
    %v2826 = vsub.s32 0, %v2825
    %v2827 = vrot.slane %v2823, %v2826
    %v2829 = vsel %vm675, %v2803, 0
    %v2832 = vsel %vm675, %v2804, 0
    %v2835 = vsel %vm675, %v2805, 0
    %v2838 = vsel %vm675, %v2806, 0
    %v2841 = vsel %vm675, %v2807, 0
    %v2844 = vsel %vm675, %v2808, 0
    %v2847 = vsel %vm675, %v2809, 0
    %v2850 = vsel %vm675, %v2810, 0
    %2852 = vmatprep.subr.mxu0 0.0
    %2853 = vmatpush1.msra.mxu0 0.0
    %2854 = vmatprep.subr.mxu0 0.0
    %2855 = vmatpush1.msra.mxu0 0.0
    %2856 = vmatprep.subr.mxu0 0.0
    %2857 = vmatpush1.msra.mxu0 0.0
    %2858 = vmatprep.subr.mxu0 0.0
    %2859 = vmatpush1.msra.mxu0 0.0
    %2860 = vmatprep.subr.mxu0 0.0
    %2861 = vmatpush1.msra.mxu0 %v2822
    %2862 = vmatprep.subr.mxu0 0.0
    %2863 = vmatpush1.msra.mxu0 %v2821
    %2864 = vmatprep.subr.mxu0 0.0
    %2865 = vmatpush1.msra.mxu0 %v2820
    %2866 = vmatprep.subr.mxu0 0.0
    %2867 = vmatpush1.msra.mxu0 %v2819
    %2868 = vmatprep.subr.mxu0 0.0
    %2869 = vmatpush1.msra.mxu0 %v2818
    %2870 = vmatprep.subr.mxu0 0.0
    %2871 = vmatpush1.msra.mxu0 %v2817
    %2872 = vmatprep.subr.mxu0 0.0
    %2873 = vmatpush1.msra.mxu0 %v2816
    %2874 = vmatprep.subr.mxu0 0.0
    %2875 = vmatpush1.msra.mxu0 %v2815
    %2876 = vmatprep.subr.mxu0 0.0
    %2877 = vmatpush1.msra.mxu0 %v2814
    %2878 = vmatprep.subr.mxu0 0.0
    %2879 = vmatpush1.msra.mxu0 %v2813
    %2880 = vmatprep.subr.mxu0 0.0
    %2881 = vmatpush1.msra.mxu0 %v2812
    %2882 = vmatprep.subr.mxu0 0.0
    %2883 = vmatpush1.msra.mxu0 %v2811
    %2884 = vmatprep.subr.mxu0 0.0
    %2885 = vmatpush2.msra.mxu0 0.0
    %2886 = vmatprep.subr.mxu0 0.0
    %2887 = vmatpush2.msra.mxu0 0.0
    %2888 = vmatprep.subr.mxu0 0.0
    %2889 = vmatpush2.msra.mxu0 0.0
    %2890 = vmatprep.subr.mxu0 0.0
    %2891 = vmatpush2.msra.mxu0 0.0
    %2892 = vmatprep.subr.mxu0 0.0
    %2893 = vmatpush2.msra.mxu0 0.0
    %2894 = vmatprep.subr.mxu0 0.0
    %2895 = vmatpush2.msra.mxu0 0.0
    %2896 = vmatprep.subr.mxu0 0.0
    %2897 = vmatpush2.msra.mxu0 0.0
    %2898 = vmatprep.subr.mxu0 0.0
    %2899 = vmatpush2.msra.mxu0 0.0
    %2900 = vmatprep.subr.mxu0 0.0
    %2901 = vmatpush2.msra.mxu0 0.0
    %2902 = vmatprep.subr.mxu0 0.0
    %2903 = vmatpush2.msra.mxu0 0.0
    %2904 = vmatprep.subr.mxu0 0.0
    %2905 = vmatpush2.msra.mxu0 0.0
    %2906 = vmatprep.subr.mxu0 0.0
    %2907 = vmatpush2.msra.mxu0 0.0
    %2908 = vmatprep.subr.mxu0 0.0
    %2909 = vmatpush2.msra.mxu0 0.0
    %2910 = vmatprep.subr.mxu0 0.0
    %2911 = vmatpush2.msra.mxu0 0.0
    %2912 = vmatprep.subr.mxu0 0.0
    %2913 = vmatpush2.msra.mxu0 0.0
    %2914 = vmatprep.subr.mxu0 0.0
    %2915 = vmatpush2.msra.mxu0 0.0
    %2916 = vmatprep.mubr.f32.mxu0 0.0
    %2917 = vmatmul.mubr.f32.gmra.mxu0 %v2829
    %v2918 = vpop.f32.mrf.mxu0
    %v2919 = vadd.f32 %v2827, %v2918
    %v2920 = vpop.f32.mrf.mxu0
    %2921 = vmatprep.mubr.f32.mxu0 0.0
    %2922 = vmatmul.mubr.f32.gmra.mxu0 %v2832
    %v2923 = vpop.f32.mrf.mxu0
    %v2924 = vadd.f32 %v2827, %v2923
    %v2925 = vpop.f32.mrf.mxu0
    %2926 = vmatprep.mubr.f32.mxu0 0.0
    %2927 = vmatmul.mubr.f32.gmra.mxu0 %v2835
    %v2928 = vpop.f32.mrf.mxu0
    %v2929 = vadd.f32 %v2827, %v2928
    %v2930 = vpop.f32.mrf.mxu0
    %2931 = vmatprep.mubr.f32.mxu0 0.0
    %2932 = vmatmul.mubr.f32.gmra.mxu0 %v2838
    %v2933 = vpop.f32.mrf.mxu0
    %v2934 = vadd.f32 %v2827, %v2933
    %v2935 = vpop.f32.mrf.mxu0
    %2936 = vmatprep.mubr.f32.mxu0 0.0
    %2937 = vmatmul.mubr.f32.gmra.mxu0 %v2841
    %v2938 = vpop.f32.mrf.mxu0
    %v2939 = vadd.f32 %v2827, %v2938
    %v2940 = vpop.f32.mrf.mxu0
    %2941 = vmatprep.mubr.f32.mxu0 0.0
    %2942 = vmatmul.mubr.f32.gmra.mxu0 %v2844
    %v2943 = vpop.f32.mrf.mxu0
    %v2944 = vadd.f32 %v2827, %v2943
    %v2945 = vpop.f32.mrf.mxu0
    %2946 = vmatprep.mubr.f32.mxu0 0.0
    %2947 = vmatmul.mubr.f32.gmra.mxu0 %v2847
    %v2948 = vpop.f32.mrf.mxu0
    %v2949 = vadd.f32 %v2827, %v2948
    %v2950 = vpop.f32.mrf.mxu0
    %2951 = vmatprep.mubr.f32.mxu0 0.0
    %2952 = vmatmul.mubr.f32.gmra.mxu0 %v2850
    %v2953 = vpop.f32.mrf.mxu0
    %v2954 = vadd.f32 %v2827, %v2953
    %v2955 = vpop.f32.mrf.mxu0
    %2956 = vdwg.mxu0
    %v2957 = vld [vmem:[%s2 + $0x15] sm:$0x1]
    %v2958 = vld [vmem:[%s2 + $0x16] sm:$0x1]
    %v2959 = vsel %vm175, %v2919, 0.0
    %v2960 = vsel %vm175, %v2924, 0.0
    %v2961 = vadd.f32 %v2959, %v2960
    %v2962 = vsel %vm175, %v2929, 0.0
    %v2963 = vadd.f32 %v2961, %v2962
    %v2964 = vsel %vm175, %v2934, 0.0
    %v2965 = vadd.f32 %v2963, %v2964
    %v2966 = vsel %vm175, %v2939, 0.0
    %v2967 = vadd.f32 %v2965, %v2966
    %v2968 = vsel %vm175, %v2944, 0.0
    %v2969 = vadd.f32 %v2967, %v2968
    %v2970 = vsel %vm175, %v2949, 0.0
    %v2971 = vadd.f32 %v2969, %v2970
    %v2972 = vsel %vm175, %v2954, 0.0
    %v2973 = vadd.f32 %v2971, %v2972
    %v2974 = vrot.slane %v2973, 4
    %v2975 = vadd.f32 %v2973, %v2974
    %v2976 = vrot.slane %v2975, 2
    %v2977 = vadd.f32 %v2975, %v2976
    %v2978 = vrot.slane %v2977, 1
    %v2979 = vadd.f32 %v2977, %v2978
    %v2980 = vmul.f32 %v2919, %v2919
    %v2981 = vmul.f32 %v2924, %v2924
    %v2982 = vmul.f32 %v2929, %v2929
    %v2983 = vmul.f32 %v2934, %v2934
    %v2984 = vmul.f32 %v2939, %v2939
    %v2985 = vmul.f32 %v2944, %v2944
    %v2986 = vmul.f32 %v2949, %v2949
    %v2987 = vmul.f32 %v2954, %v2954
    %v2988 = vsel %vm175, %v2980, 0.0
    %v2989 = vsel %vm175, %v2981, 0.0
    %v2990 = vadd.f32 %v2988, %v2989
    %v2991 = vsel %vm175, %v2982, 0.0
    %v2992 = vadd.f32 %v2990, %v2991
    %v2993 = vsel %vm175, %v2983, 0.0
    %v2994 = vadd.f32 %v2992, %v2993
    %v2995 = vsel %vm175, %v2984, 0.0
    %v2996 = vadd.f32 %v2994, %v2995
    %v2997 = vsel %vm175, %v2985, 0.0
    %v2998 = vadd.f32 %v2996, %v2997
    %v2999 = vsel %vm175, %v2986, 0.0
    %v3000 = vadd.f32 %v2998, %v2999
    %v3001 = vsel %vm175, %v2987, 0.0
    %v3002 = vadd.f32 %v3000, %v3001
    %v3003 = vrot.slane %v3002, 4
    %v3004 = vadd.f32 %v3002, %v3003
    %v3005 = vrot.slane %v3004, 2
    %v3006 = vadd.f32 %v3004, %v3005
    %v3007 = vrot.slane %v3006, 1
    %v3008 = vadd.f32 %v3006, %v3007
    %v3009 = vmul.f32 %v2979, 0.015625
    %v3010 = vmul.f32 %v3008, 0.015625
    %v3011 = vmul.f32 %v3009, %v3009
    %v3012 = vsub.f32 %v3010, %v3011
    %v3013 = vmax.f32 %v3012, 0.0
    %v3014 = vsub.f32 %v2919, %v3009
    %v3015 = vsub.f32 %v2924, %v3009
    %v3016 = vsub.f32 %v2929, %v3009
    %v3017 = vsub.f32 %v2934, %v3009
    %v3018 = vsub.f32 %v2939, %v3009
    %v3019 = vsub.f32 %v2944, %v3009
    %v3020 = vsub.f32 %v2949, %v3009
    %v3021 = vsub.f32 %v2954, %v3009
    %v3022 = vadd.f32 %v3013, 1e-05
    %v3023 = vrsqrt.pop %v3022
    %v3024 = vmul.f32 %v3014, %v3023
    %v3025 = vmul.f32 %v3015, %v3023
    %v3026 = vmul.f32 %v3016, %v3023
    %v3027 = vmul.f32 %v3017, %v3023
    %v3028 = vmul.f32 %v3018, %v3023
    %v3029 = vmul.f32 %v3019, %v3023
    %v3030 = vmul.f32 %v3020, %v3023
    %v3031 = vmul.f32 %v3021, %v3023
    %v3032 = vlaneseq
    %v3033 = vshrl.u32 %v3032, 7
    %v3034 = vsub.s32 0, %v3033
    %v3035 = vrot.slane %v2957, %v3034
    %v3036 = vmul.f32 %v3024, %v3035
    %v3037 = vmul.f32 %v3025, %v3035
    %v3038 = vmul.f32 %v3026, %v3035
    %v3039 = vmul.f32 %v3027, %v3035
    %v3040 = vmul.f32 %v3028, %v3035
    %v3041 = vmul.f32 %v3029, %v3035
    %v3042 = vmul.f32 %v3030, %v3035
    %v3043 = vmul.f32 %v3031, %v3035
    %v3044 = vlaneseq
    %v3045 = vshrl.u32 %v3044, 7
    %v3046 = vsub.s32 0, %v3045
    %v3047 = vrot.slane %v2958, %v3046
    %v3048 = vadd.f32 %v3036, %v3047
    %v3049 = vadd.f32 %v3037, %v3047
    %v3050 = vadd.f32 %v3038, %v3047
    %v3051 = vadd.f32 %v3039, %v3047
    %v3052 = vadd.f32 %v3040, %v3047
    %v3053 = vadd.f32 %v3041, %v3047
    %v3054 = vadd.f32 %v3042, %v3047
    %v3055 = vadd.f32 %v3043, %v3047
    %v3056 = vxor.u32 %v3048, 2147483648
    %v3057 = vxor.u32 %v3049, 2147483648
    %v3058 = vxor.u32 %v3050, 2147483648
    %v3059 = vxor.u32 %v3051, 2147483648
    %v3060 = vxor.u32 %v3052, 2147483648
    %v3061 = vxor.u32 %v3053, 2147483648
    %v3062 = vxor.u32 %v3054, 2147483648
    %v3063 = vxor.u32 %v3055, 2147483648
    %v3064 = vmul.f32 %v3056, 1.442695
    %v3065 = vpow.pop %v3064
    %v3066 = vmul.f32 %v3057, 1.442695
    %v3067 = vpow.pop %v3066
    %v3068 = vmul.f32 %v3058, 1.442695
    %v3069 = vpow.pop %v3068
    %v3070 = vmul.f32 %v3059, 1.442695
    %v3071 = vpow.pop %v3070
    %v3072 = vmul.f32 %v3060, 1.442695
    %v3073 = vpow.pop %v3072
    %v3074 = vmul.f32 %v3061, 1.442695
    %v3075 = vpow.pop %v3074
    %v3076 = vmul.f32 %v3062, 1.442695
    %v3077 = vpow.pop %v3076
    %v3078 = vmul.f32 %v3063, 1.442695
    %v3079 = vpow.pop %v3078
    %v3080 = vadd.f32 %v3065, 1.0
    %v3081 = vadd.f32 %v3067, 1.0
    %v3082 = vadd.f32 %v3069, 1.0
    %v3083 = vadd.f32 %v3071, 1.0
    %v3084 = vadd.f32 %v3073, 1.0
    %v3085 = vadd.f32 %v3075, 1.0
    %v3086 = vadd.f32 %v3077, 1.0
    %v3087 = vadd.f32 %v3079, 1.0
    %v3088 = vrcp.pop %v3080
    %v3089 = vmul.f32 1.0, %v3088
    %v3090 = vrcp.pop %v3081
    %v3091 = vmul.f32 1.0, %v3090
    %v3092 = vrcp.pop %v3082
    %v3093 = vmul.f32 1.0, %v3092
    %v3094 = vrcp.pop %v3083
    %v3095 = vmul.f32 1.0, %v3094
    %v3096 = vrcp.pop %v3084
    %v3097 = vmul.f32 1.0, %v3096
    %v3098 = vrcp.pop %v3085
    %v3099 = vmul.f32 1.0, %v3098
    %v3100 = vrcp.pop %v3086
    %v3101 = vmul.f32 1.0, %v3100
    %v3102 = vrcp.pop %v3087
    %v3103 = vmul.f32 1.0, %v3102
    %v3104 = vmul.f32 %v3048, %v3089
    %v3105 = vmul.f32 %v3049, %v3091
    %v3106 = vmul.f32 %v3050, %v3093
    %v3107 = vmul.f32 %v3051, %v3095
    %v3108 = vmul.f32 %v3052, %v3097
    %v3109 = vmul.f32 %v3053, %v3099
    %v3110 = vmul.f32 %v3054, %v3101
    %v3111 = vmul.f32 %v3055, %v3103
    %v3112 = vld [vmem:[#allocation2 + $0x218] sm:$0xff]
    %v3113 = vld [vmem:[#allocation2 + $0x220] sm:$0xff]
    %v3114 = vld [vmem:[#allocation2 + $0x228] sm:$0xff]
    %v3115 = vld [vmem:[#allocation2 + $0x230] sm:$0xff]
    %v3117 = vsel %vm175, %v3104, 0
    %v3120 = vsel %vm175, %v3105, 0
    %v3123 = vsel %vm175, %v3106, 0
    %v3126 = vsel %vm175, %v3107, 0
    %v3129 = vsel %vm175, %v3108, 0
    %v3132 = vsel %vm175, %v3109, 0
    %v3135 = vsel %vm175, %v3110, 0
    %v3138 = vsel %vm175, %v3111, 0
    %3140 = vmatprep.subr.mxu0 0.0
    %3141 = vmatpush1.msra.mxu0 0.0
    %3142 = vmatprep.subr.mxu0 0.0
    %3143 = vmatpush1.msra.mxu0 0.0
    %3144 = vmatprep.subr.mxu0 0.0
    %3145 = vmatpush1.msra.mxu0 0.0
    %3146 = vmatprep.subr.mxu0 0.0
    %3147 = vmatpush1.msra.mxu0 0.0
    %3148 = vmatprep.subr.mxu0 0.0
    %3149 = vmatpush1.msra.mxu0 0.0
    %3150 = vmatprep.subr.mxu0 0.0
    %3151 = vmatpush1.msra.mxu0 0.0
    %3152 = vmatprep.subr.mxu0 0.0
    %3153 = vmatpush1.msra.mxu0 0.0
    %3154 = vmatprep.subr.mxu0 0.0
    %3155 = vmatpush1.msra.mxu0 0.0
    %3156 = vmatprep.subr.mxu0 0.0
    %3157 = vmatpush1.msra.mxu0 0.0
    %3158 = vmatprep.subr.mxu0 0.0
    %3159 = vmatpush1.msra.mxu0 0.0
    %3160 = vmatprep.subr.mxu0 0.0
    %3161 = vmatpush1.msra.mxu0 0.0
    %3162 = vmatprep.subr.mxu0 0.0
    %3163 = vmatpush1.msra.mxu0 0.0
    %3164 = vmatprep.subr.mxu0 0.0
    %3165 = vmatpush1.msra.mxu0 %v3115
    %3166 = vmatprep.subr.mxu0 0.0
    %3167 = vmatpush1.msra.mxu0 %v3114
    %3168 = vmatprep.subr.mxu0 0.0
    %3169 = vmatpush1.msra.mxu0 %v3113
    %3170 = vmatprep.subr.mxu0 0.0
    %3171 = vmatpush1.msra.mxu0 %v3112
    %3172 = vmatprep.subr.mxu0 0.0
    %3173 = vmatpush2.msra.mxu0 0.0
    %3174 = vmatprep.subr.mxu0 0.0
    %3175 = vmatpush2.msra.mxu0 0.0
    %3176 = vmatprep.subr.mxu0 0.0
    %3177 = vmatpush2.msra.mxu0 0.0
    %3178 = vmatprep.subr.mxu0 0.0
    %3179 = vmatpush2.msra.mxu0 0.0
    %3180 = vmatprep.subr.mxu0 0.0
    %3181 = vmatpush2.msra.mxu0 0.0
    %3182 = vmatprep.subr.mxu0 0.0
    %3183 = vmatpush2.msra.mxu0 0.0
    %3184 = vmatprep.subr.mxu0 0.0
    %3185 = vmatpush2.msra.mxu0 0.0
    %3186 = vmatprep.subr.mxu0 0.0
    %3187 = vmatpush2.msra.mxu0 0.0
    %3188 = vmatprep.subr.mxu0 0.0
    %3189 = vmatpush2.msra.mxu0 0.0
    %3190 = vmatprep.subr.mxu0 0.0
    %3191 = vmatpush2.msra.mxu0 0.0
    %3192 = vmatprep.subr.mxu0 0.0
    %3193 = vmatpush2.msra.mxu0 0.0
    %3194 = vmatprep.subr.mxu0 0.0
    %3195 = vmatpush2.msra.mxu0 0.0
    %3196 = vmatprep.subr.mxu0 0.0
    %3197 = vmatpush2.msra.mxu0 0.0
    %3198 = vmatprep.subr.mxu0 0.0
    %3199 = vmatpush2.msra.mxu0 0.0
    %3200 = vmatprep.subr.mxu0 0.0
    %3201 = vmatpush2.msra.mxu0 0.0
    %3202 = vmatprep.subr.mxu0 0.0
    %3203 = vmatpush2.msra.mxu0 0.0
    %3204 = vmatprep.mubr.f32.mxu0 0.0
    %3205 = vmatmul.mubr.f32.gmra.mxu0 %v3117
    %v3206 = vpop.f32.mrf.mxu0
    %v3207 = vadd.f32 0.0, %v3206
    %v3208 = vpop.f32.mrf.mxu0
    %3209 = vmatprep.mubr.f32.mxu0 0.0
    %3210 = vmatmul.mubr.f32.gmra.mxu0 %v3120
    %v3211 = vpop.f32.mrf.mxu0
    %v3212 = vadd.f32 0.0, %v3211
    %v3213 = vpop.f32.mrf.mxu0
    %3214 = vmatprep.mubr.f32.mxu0 0.0
    %3215 = vmatmul.mubr.f32.gmra.mxu0 %v3123
    %v3216 = vpop.f32.mrf.mxu0
    %v3217 = vadd.f32 0.0, %v3216
    %v3218 = vpop.f32.mrf.mxu0
    %3219 = vmatprep.mubr.f32.mxu0 0.0
    %3220 = vmatmul.mubr.f32.gmra.mxu0 %v3126
    %v3221 = vpop.f32.mrf.mxu0
    %v3222 = vadd.f32 0.0, %v3221
    %v3223 = vpop.f32.mrf.mxu0
    %3224 = vmatprep.mubr.f32.mxu0 0.0
    %3225 = vmatmul.mubr.f32.gmra.mxu0 %v3129
    %v3226 = vpop.f32.mrf.mxu0
    %v3227 = vadd.f32 0.0, %v3226
    %v3228 = vpop.f32.mrf.mxu0
    %3229 = vmatprep.mubr.f32.mxu0 0.0
    %3230 = vmatmul.mubr.f32.gmra.mxu0 %v3132
    %v3231 = vpop.f32.mrf.mxu0
    %v3232 = vadd.f32 0.0, %v3231
    %v3233 = vpop.f32.mrf.mxu0
    %3234 = vmatprep.mubr.f32.mxu0 0.0
    %3235 = vmatmul.mubr.f32.gmra.mxu0 %v3135
    %v3236 = vpop.f32.mrf.mxu0
    %v3237 = vadd.f32 0.0, %v3236
    %v3238 = vpop.f32.mrf.mxu0
    %3239 = vmatprep.mubr.f32.mxu0 0.0
    %3240 = vmatmul.mubr.f32.gmra.mxu0 %v3138
    %v3241 = vpop.f32.mrf.mxu0
    %v3242 = vadd.f32 0.0, %v3241
    %v3243 = vpop.f32.mrf.mxu0
    %3244 = vdwg.mxu0
    %v3245 = vld [vmem:[%s2 + $0x17] sm:$0x1]
    %v3246 = vld [vmem:[%s2 + $0x18] sm:$0x1]
    %v3247 = vsel %vm175, %v3207, 0.0
    %v3248 = vsel %vm175, %v3212, 0.0
    %v3249 = vadd.f32 %v3247, %v3248
    %v3250 = vsel %vm175, %v3217, 0.0
    %v3251 = vadd.f32 %v3249, %v3250
    %v3252 = vsel %vm175, %v3222, 0.0
    %v3253 = vadd.f32 %v3251, %v3252
    %v3254 = vsel %vm175, %v3227, 0.0
    %v3255 = vadd.f32 %v3253, %v3254
    %v3256 = vsel %vm175, %v3232, 0.0
    %v3257 = vadd.f32 %v3255, %v3256
    %v3258 = vsel %vm175, %v3237, 0.0
    %v3259 = vadd.f32 %v3257, %v3258
    %v3260 = vsel %vm175, %v3242, 0.0
    %v3261 = vadd.f32 %v3259, %v3260
    %v3262 = vrot.slane %v3261, 4
    %v3263 = vadd.f32 %v3261, %v3262
    %v3264 = vrot.slane %v3263, 2
    %v3265 = vadd.f32 %v3263, %v3264
    %v3266 = vrot.slane %v3265, 1
    %v3267 = vadd.f32 %v3265, %v3266
    %v3268 = vmul.f32 %v3207, %v3207
    %v3269 = vmul.f32 %v3212, %v3212
    %v3270 = vmul.f32 %v3217, %v3217
    %v3271 = vmul.f32 %v3222, %v3222
    %v3272 = vmul.f32 %v3227, %v3227
    %v3273 = vmul.f32 %v3232, %v3232
    %v3274 = vmul.f32 %v3237, %v3237
    %v3275 = vmul.f32 %v3242, %v3242
    %v3276 = vsel %vm175, %v3268, 0.0
    %v3277 = vsel %vm175, %v3269, 0.0
    %v3278 = vadd.f32 %v3276, %v3277
    %v3279 = vsel %vm175, %v3270, 0.0
    %v3280 = vadd.f32 %v3278, %v3279
    %v3281 = vsel %vm175, %v3271, 0.0
    %v3282 = vadd.f32 %v3280, %v3281
    %v3283 = vsel %vm175, %v3272, 0.0
    %v3284 = vadd.f32 %v3282, %v3283
    %v3285 = vsel %vm175, %v3273, 0.0
    %v3286 = vadd.f32 %v3284, %v3285
    %v3287 = vsel %vm175, %v3274, 0.0
    %v3288 = vadd.f32 %v3286, %v3287
    %v3289 = vsel %vm175, %v3275, 0.0
    %v3290 = vadd.f32 %v3288, %v3289
    %v3291 = vrot.slane %v3290, 4
    %v3292 = vadd.f32 %v3290, %v3291
    %v3293 = vrot.slane %v3292, 2
    %v3294 = vadd.f32 %v3292, %v3293
    %v3295 = vrot.slane %v3294, 1
    %v3296 = vadd.f32 %v3294, %v3295
    %v3297 = vmul.f32 %v3267, 0.015625
    %v3298 = vmul.f32 %v3296, 0.015625
    %v3299 = vmul.f32 %v3297, %v3297
    %v3300 = vsub.f32 %v3298, %v3299
    %v3301 = vmax.f32 %v3300, 0.0
    %v3302 = vsub.f32 %v3207, %v3297
    %v3303 = vsub.f32 %v3212, %v3297
    %v3304 = vsub.f32 %v3217, %v3297
    %v3305 = vsub.f32 %v3222, %v3297
    %v3306 = vsub.f32 %v3227, %v3297
    %v3307 = vsub.f32 %v3232, %v3297
    %v3308 = vsub.f32 %v3237, %v3297
    %v3309 = vsub.f32 %v3242, %v3297
    %v3310 = vadd.f32 %v3301, 1e-05
    %v3311 = vrsqrt.pop %v3310
    %v3312 = vmul.f32 %v3302, %v3311
    %v3313 = vmul.f32 %v3303, %v3311
    %v3314 = vmul.f32 %v3304, %v3311
    %v3315 = vmul.f32 %v3305, %v3311
    %v3316 = vmul.f32 %v3306, %v3311
    %v3317 = vmul.f32 %v3307, %v3311
    %v3318 = vmul.f32 %v3308, %v3311
    %v3319 = vmul.f32 %v3309, %v3311
    %v3320 = vlaneseq
    %v3321 = vshrl.u32 %v3320, 7
    %v3322 = vsub.s32 0, %v3321
    %v3323 = vrot.slane %v3245, %v3322
    %v3324 = vmul.f32 %v3312, %v3323
    %v3325 = vmul.f32 %v3313, %v3323
    %v3326 = vmul.f32 %v3314, %v3323
    %v3327 = vmul.f32 %v3315, %v3323
    %v3328 = vmul.f32 %v3316, %v3323
    %v3329 = vmul.f32 %v3317, %v3323
    %v3330 = vmul.f32 %v3318, %v3323
    %v3331 = vmul.f32 %v3319, %v3323
    %v3332 = vlaneseq
    %v3333 = vshrl.u32 %v3332, 7
    %v3334 = vsub.s32 0, %v3333
    %v3335 = vrot.slane %v3246, %v3334
    %v3336 = vadd.f32 %v3324, %v3335
    %v3337 = vadd.f32 %v3325, %v3335
    %v3338 = vadd.f32 %v3326, %v3335
    %v3339 = vadd.f32 %v3327, %v3335
    %v3340 = vadd.f32 %v3328, %v3335
    %v3341 = vadd.f32 %v3329, %v3335
    %v3342 = vadd.f32 %v3330, %v3335
    %v3343 = vadd.f32 %v3331, %v3335
    %v3344 = vxor.u32 %v3336, 2147483648
    %v3345 = vxor.u32 %v3337, 2147483648
    %v3346 = vxor.u32 %v3338, 2147483648
    %v3347 = vxor.u32 %v3339, 2147483648
    %v3348 = vxor.u32 %v3340, 2147483648
    %v3349 = vxor.u32 %v3341, 2147483648
    %v3350 = vxor.u32 %v3342, 2147483648
    %v3351 = vxor.u32 %v3343, 2147483648
    %v3352 = vmul.f32 %v3344, 1.442695
    %v3353 = vpow.pop %v3352
    %v3354 = vmul.f32 %v3345, 1.442695
    %v3355 = vpow.pop %v3354
    %v3356 = vmul.f32 %v3346, 1.442695
    %v3357 = vpow.pop %v3356
    %v3358 = vmul.f32 %v3347, 1.442695
    %v3359 = vpow.pop %v3358
    %v3360 = vmul.f32 %v3348, 1.442695
    %v3361 = vpow.pop %v3360
    %v3362 = vmul.f32 %v3349, 1.442695
    %v3363 = vpow.pop %v3362
    %v3364 = vmul.f32 %v3350, 1.442695
    %v3365 = vpow.pop %v3364
    %v3366 = vmul.f32 %v3351, 1.442695
    %v3367 = vpow.pop %v3366
    %v3368 = vadd.f32 %v3353, 1.0
    %v3369 = vadd.f32 %v3355, 1.0
    %v3370 = vadd.f32 %v3357, 1.0
    %v3371 = vadd.f32 %v3359, 1.0
    %v3372 = vadd.f32 %v3361, 1.0
    %v3373 = vadd.f32 %v3363, 1.0
    %v3374 = vadd.f32 %v3365, 1.0
    %v3375 = vadd.f32 %v3367, 1.0
    %v3376 = vrcp.pop %v3368
    %v3377 = vmul.f32 1.0, %v3376
    %v3378 = vrcp.pop %v3369
    %v3379 = vmul.f32 1.0, %v3378
    %v3380 = vrcp.pop %v3370
    %v3381 = vmul.f32 1.0, %v3380
    %v3382 = vrcp.pop %v3371
    %v3383 = vmul.f32 1.0, %v3382
    %v3384 = vrcp.pop %v3372
    %v3385 = vmul.f32 1.0, %v3384
    %v3386 = vrcp.pop %v3373
    %v3387 = vmul.f32 1.0, %v3386
    %v3388 = vrcp.pop %v3374
    %v3389 = vmul.f32 1.0, %v3388
    %v3390 = vrcp.pop %v3375
    %v3391 = vmul.f32 1.0, %v3390
    %v3392 = vmul.f32 %v3336, %v3377
    %v3393 = vmul.f32 %v3337, %v3379
    %v3394 = vmul.f32 %v3338, %v3381
    %v3395 = vmul.f32 %v3339, %v3383
    %v3396 = vmul.f32 %v3340, %v3385
    %v3397 = vmul.f32 %v3341, %v3387
    %v3398 = vmul.f32 %v3342, %v3389
    %v3399 = vmul.f32 %v3343, %v3391
    %v3400 = vld [vmem:[#allocation2 + $0x238] sm:$0xff]
    %v3401 = vld [vmem:[#allocation2 + $0x240] sm:$0xff]
    %v3402 = vld [vmem:[#allocation2 + $0x248] sm:$0xff]
    %v3403 = vld [vmem:[#allocation2 + $0x250] sm:$0xff]
    %v3405 = vsel %vm175, %v3392, 0
    %v3408 = vsel %vm175, %v3393, 0
    %v3411 = vsel %vm175, %v3394, 0
    %v3414 = vsel %vm175, %v3395, 0
    %v3417 = vsel %vm175, %v3396, 0
    %v3420 = vsel %vm175, %v3397, 0
    %v3423 = vsel %vm175, %v3398, 0
    %v3426 = vsel %vm175, %v3399, 0
    %3428 = vmatprep.subr.mxu0 0.0
    %3429 = vmatpush1.msra.mxu0 0.0
    %3430 = vmatprep.subr.mxu0 0.0
    %3431 = vmatpush1.msra.mxu0 0.0
    %3432 = vmatprep.subr.mxu0 0.0
    %3433 = vmatpush1.msra.mxu0 0.0
    %3434 = vmatprep.subr.mxu0 0.0
    %3435 = vmatpush1.msra.mxu0 0.0
    %3436 = vmatprep.subr.mxu0 0.0
    %3437 = vmatpush1.msra.mxu0 0.0
    %3438 = vmatprep.subr.mxu0 0.0
    %3439 = vmatpush1.msra.mxu0 0.0
    %3440 = vmatprep.subr.mxu0 0.0
    %3441 = vmatpush1.msra.mxu0 0.0
    %3442 = vmatprep.subr.mxu0 0.0
    %3443 = vmatpush1.msra.mxu0 0.0
    %3444 = vmatprep.subr.mxu0 0.0
    %3445 = vmatpush1.msra.mxu0 0.0
    %3446 = vmatprep.subr.mxu0 0.0
    %3447 = vmatpush1.msra.mxu0 0.0
    %3448 = vmatprep.subr.mxu0 0.0
    %3449 = vmatpush1.msra.mxu0 0.0
    %3450 = vmatprep.subr.mxu0 0.0
    %3451 = vmatpush1.msra.mxu0 0.0
    %3452 = vmatprep.subr.mxu0 0.0
    %3453 = vmatpush1.msra.mxu0 %v3403
    %3454 = vmatprep.subr.mxu0 0.0
    %3455 = vmatpush1.msra.mxu0 %v3402
    %3456 = vmatprep.subr.mxu0 0.0
    %3457 = vmatpush1.msra.mxu0 %v3401
    %3458 = vmatprep.subr.mxu0 0.0
    %3459 = vmatpush1.msra.mxu0 %v3400
    %3460 = vmatprep.subr.mxu0 0.0
    %3461 = vmatpush2.msra.mxu0 0.0
    %3462 = vmatprep.subr.mxu0 0.0
    %3463 = vmatpush2.msra.mxu0 0.0
    %3464 = vmatprep.subr.mxu0 0.0
    %3465 = vmatpush2.msra.mxu0 0.0
    %3466 = vmatprep.subr.mxu0 0.0
    %3467 = vmatpush2.msra.mxu0 0.0
    %3468 = vmatprep.subr.mxu0 0.0
    %3469 = vmatpush2.msra.mxu0 0.0
    %3470 = vmatprep.subr.mxu0 0.0
    %3471 = vmatpush2.msra.mxu0 0.0
    %3472 = vmatprep.subr.mxu0 0.0
    %3473 = vmatpush2.msra.mxu0 0.0
    %3474 = vmatprep.subr.mxu0 0.0
    %3475 = vmatpush2.msra.mxu0 0.0
    %3476 = vmatprep.subr.mxu0 0.0
    %3477 = vmatpush2.msra.mxu0 0.0
    %3478 = vmatprep.subr.mxu0 0.0
    %3479 = vmatpush2.msra.mxu0 0.0
    %3480 = vmatprep.subr.mxu0 0.0
    %3481 = vmatpush2.msra.mxu0 0.0
    %3482 = vmatprep.subr.mxu0 0.0
    %3483 = vmatpush2.msra.mxu0 0.0
    %3484 = vmatprep.subr.mxu0 0.0
    %3485 = vmatpush2.msra.mxu0 0.0
    %3486 = vmatprep.subr.mxu0 0.0
    %3487 = vmatpush2.msra.mxu0 0.0
    %3488 = vmatprep.subr.mxu0 0.0
    %3489 = vmatpush2.msra.mxu0 0.0
    %3490 = vmatprep.subr.mxu0 0.0
    %3491 = vmatpush2.msra.mxu0 0.0
    %3492 = vmatprep.mubr.f32.mxu0 0.0
    %3493 = vmatmul.mubr.f32.gmra.mxu0 %v3405
    %v3494 = vpop.f32.mrf.mxu0
    %v3495 = vadd.f32 0.0, %v3494
    %v3496 = vpop.f32.mrf.mxu0
    %3497 = vmatprep.mubr.f32.mxu0 0.0
    %3498 = vmatmul.mubr.f32.gmra.mxu0 %v3408
    %v3499 = vpop.f32.mrf.mxu0
    %v3500 = vadd.f32 0.0, %v3499
    %v3501 = vpop.f32.mrf.mxu0
    %3502 = vmatprep.mubr.f32.mxu0 0.0
    %3503 = vmatmul.mubr.f32.gmra.mxu0 %v3411
    %v3504 = vpop.f32.mrf.mxu0
    %v3505 = vadd.f32 0.0, %v3504
    %v3506 = vpop.f32.mrf.mxu0
    %3507 = vmatprep.mubr.f32.mxu0 0.0
    %3508 = vmatmul.mubr.f32.gmra.mxu0 %v3414
    %v3509 = vpop.f32.mrf.mxu0
    %v3510 = vadd.f32 0.0, %v3509
    %v3511 = vpop.f32.mrf.mxu0
    %3512 = vmatprep.mubr.f32.mxu0 0.0
    %3513 = vmatmul.mubr.f32.gmra.mxu0 %v3417
    %v3514 = vpop.f32.mrf.mxu0
    %v3515 = vadd.f32 0.0, %v3514
    %v3516 = vpop.f32.mrf.mxu0
    %3517 = vmatprep.mubr.f32.mxu0 0.0
    %3518 = vmatmul.mubr.f32.gmra.mxu0 %v3420
    %v3519 = vpop.f32.mrf.mxu0
    %v3520 = vadd.f32 0.0, %v3519
    %v3521 = vpop.f32.mrf.mxu0
    %3522 = vmatprep.mubr.f32.mxu0 0.0
    %3523 = vmatmul.mubr.f32.gmra.mxu0 %v3423
    %v3524 = vpop.f32.mrf.mxu0
    %v3525 = vadd.f32 0.0, %v3524
    %v3526 = vpop.f32.mrf.mxu0
    %3527 = vmatprep.mubr.f32.mxu0 0.0
    %3528 = vmatmul.mubr.f32.gmra.mxu0 %v3426
    %v3529 = vpop.f32.mrf.mxu0
    %v3530 = vadd.f32 0.0, %v3529
    %v3531 = vpop.f32.mrf.mxu0
    %3532 = vdwg.mxu0
    %v3533 = vadd.f32 %v2919, %v3495
    %v3534 = vadd.f32 %v2924, %v3500
    %v3535 = vadd.f32 %v2929, %v3505
    %v3536 = vadd.f32 %v2934, %v3510
    %v3537 = vadd.f32 %v2939, %v3515
    %v3538 = vadd.f32 %v2944, %v3520
    %v3539 = vadd.f32 %v2949, %v3525
    %v3540 = vadd.f32 %v2954, %v3530
    %v3541 = vld [vmem:[%s2 + $0x19] sm:$0x1]
    %v3542 = vlaneseq
    %v3543 = vshrl.u32 %v3542, 7
    %v3544 = vsub.s32 0, %v3543
    %v3545 = vrot.slane %v3541, %v3544
    %v3546 = vadd.f32 %v3533, %v3545
    %v3547 = vadd.f32 %v3534, %v3545
    %v3548 = vadd.f32 %v3535, %v3545
    %v3549 = vadd.f32 %v3536, %v3545
    %v3550 = vadd.f32 %v3537, %v3545
    %v3551 = vadd.f32 %v3538, %v3545
    %v3552 = vadd.f32 %v3539, %v3545
    %v3553 = vadd.f32 %v3540, %v3545
    %v3554 = vld [vmem:[%s2 + $0x1a] sm:$0x1]
    %v3555 = vld [vmem:[%s2 + $0x1b] sm:$0x1]
    %v3556 = vsel %vm175, %v3546, 0.0
    %v3557 = vsel %vm175, %v3547, 0.0
    %v3558 = vadd.f32 %v3556, %v3557
    %v3559 = vsel %vm175, %v3548, 0.0
    %v3560 = vadd.f32 %v3558, %v3559
    %v3561 = vsel %vm175, %v3549, 0.0
    %v3562 = vadd.f32 %v3560, %v3561
    %v3563 = vsel %vm175, %v3550, 0.0
    %v3564 = vadd.f32 %v3562, %v3563
    %v3565 = vsel %vm175, %v3551, 0.0
    %v3566 = vadd.f32 %v3564, %v3565
    %v3567 = vsel %vm175, %v3552, 0.0
    %v3568 = vadd.f32 %v3566, %v3567
    %v3569 = vsel %vm175, %v3553, 0.0
    %v3570 = vadd.f32 %v3568, %v3569
    %v3571 = vrot.slane %v3570, 4
    %v3572 = vadd.f32 %v3570, %v3571
    %v3573 = vrot.slane %v3572, 2
    %v3574 = vadd.f32 %v3572, %v3573
    %v3575 = vrot.slane %v3574, 1
    %v3576 = vadd.f32 %v3574, %v3575
    %v3577 = vmul.f32 %v3546, %v3546
    %v3578 = vmul.f32 %v3547, %v3547
    %v3579 = vmul.f32 %v3548, %v3548
    %v3580 = vmul.f32 %v3549, %v3549
    %v3581 = vmul.f32 %v3550, %v3550
    %v3582 = vmul.f32 %v3551, %v3551
    %v3583 = vmul.f32 %v3552, %v3552
    %v3584 = vmul.f32 %v3553, %v3553
    %v3585 = vsel %vm175, %v3577, 0.0
    %v3586 = vsel %vm175, %v3578, 0.0
    %v3587 = vadd.f32 %v3585, %v3586
    %v3588 = vsel %vm175, %v3579, 0.0
    %v3589 = vadd.f32 %v3587, %v3588
    %v3590 = vsel %vm175, %v3580, 0.0
    %v3591 = vadd.f32 %v3589, %v3590
    %v3592 = vsel %vm175, %v3581, 0.0
    %v3593 = vadd.f32 %v3591, %v3592
    %v3594 = vsel %vm175, %v3582, 0.0
    %v3595 = vadd.f32 %v3593, %v3594
    %v3596 = vsel %vm175, %v3583, 0.0
    %v3597 = vadd.f32 %v3595, %v3596
    %v3598 = vsel %vm175, %v3584, 0.0
    %v3599 = vadd.f32 %v3597, %v3598
    %v3600 = vrot.slane %v3599, 4
    %v3601 = vadd.f32 %v3599, %v3600
    %v3602 = vrot.slane %v3601, 2
    %v3603 = vadd.f32 %v3601, %v3602
    %v3604 = vrot.slane %v3603, 1
    %v3605 = vadd.f32 %v3603, %v3604
    %v3606 = vmul.f32 %v3576, 0.015625
    %v3607 = vmul.f32 %v3605, 0.015625
    %v3608 = vmul.f32 %v3606, %v3606
    %v3609 = vsub.f32 %v3607, %v3608
    %v3610 = vmax.f32 %v3609, 0.0
    %v3611 = vsub.f32 %v3546, %v3606
    %v3612 = vsub.f32 %v3547, %v3606
    %v3613 = vsub.f32 %v3548, %v3606
    %v3614 = vsub.f32 %v3549, %v3606
    %v3615 = vsub.f32 %v3550, %v3606
    %v3616 = vsub.f32 %v3551, %v3606
    %v3617 = vsub.f32 %v3552, %v3606
    %v3618 = vsub.f32 %v3553, %v3606
    %v3619 = vadd.f32 %v3610, 1e-05
    %v3620 = vrsqrt.pop %v3619
    %v3621 = vmul.f32 %v3611, %v3620
    %v3622 = vmul.f32 %v3612, %v3620
    %v3623 = vmul.f32 %v3613, %v3620
    %v3624 = vmul.f32 %v3614, %v3620
    %v3625 = vmul.f32 %v3615, %v3620
    %v3626 = vmul.f32 %v3616, %v3620
    %v3627 = vmul.f32 %v3617, %v3620
    %v3628 = vmul.f32 %v3618, %v3620
    %v3629 = vlaneseq
    %v3630 = vshrl.u32 %v3629, 7
    %v3631 = vsub.s32 0, %v3630
    %v3632 = vrot.slane %v3554, %v3631
    %v3633 = vmul.f32 %v3621, %v3632
    %v3634 = vmul.f32 %v3622, %v3632
    %v3635 = vmul.f32 %v3623, %v3632
    %v3636 = vmul.f32 %v3624, %v3632
    %v3637 = vmul.f32 %v3625, %v3632
    %v3638 = vmul.f32 %v3626, %v3632
    %v3639 = vmul.f32 %v3627, %v3632
    %v3640 = vmul.f32 %v3628, %v3632
    %v3641 = vlaneseq
    %v3642 = vshrl.u32 %v3641, 7
    %v3643 = vsub.s32 0, %v3642
    %v3644 = vrot.slane %v3555, %v3643
    %v3645 = vadd.f32 %v3633, %v3644
    %v3646 = vadd.f32 %v3634, %v3644
    %v3647 = vadd.f32 %v3635, %v3644
    %v3648 = vadd.f32 %v3636, %v3644
    %v3649 = vadd.f32 %v3637, %v3644
    %v3650 = vadd.f32 %v3638, %v3644
    %v3651 = vadd.f32 %v3639, %v3644
    %v3652 = vadd.f32 %v3640, %v3644
    %v3653 = vxor.u32 %v3645, 2147483648
    %v3654 = vxor.u32 %v3646, 2147483648
    %v3655 = vxor.u32 %v3647, 2147483648
    %v3656 = vxor.u32 %v3648, 2147483648
    %v3657 = vxor.u32 %v3649, 2147483648
    %v3658 = vxor.u32 %v3650, 2147483648
    %v3659 = vxor.u32 %v3651, 2147483648
    %v3660 = vxor.u32 %v3652, 2147483648
    %v3661 = vmul.f32 %v3653, 1.442695
    %v3662 = vpow.pop %v3661
    %v3663 = vmul.f32 %v3654, 1.442695
    %v3664 = vpow.pop %v3663
    %v3665 = vmul.f32 %v3655, 1.442695
    %v3666 = vpow.pop %v3665
    %v3667 = vmul.f32 %v3656, 1.442695
    %v3668 = vpow.pop %v3667
    %v3669 = vmul.f32 %v3657, 1.442695
    %v3670 = vpow.pop %v3669
    %v3671 = vmul.f32 %v3658, 1.442695
    %v3672 = vpow.pop %v3671
    %v3673 = vmul.f32 %v3659, 1.442695
    %v3674 = vpow.pop %v3673
    %v3675 = vmul.f32 %v3660, 1.442695
    %v3676 = vpow.pop %v3675
    %v3677 = vadd.f32 %v3662, 1.0
    %v3678 = vadd.f32 %v3664, 1.0
    %v3679 = vadd.f32 %v3666, 1.0
    %v3680 = vadd.f32 %v3668, 1.0
    %v3681 = vadd.f32 %v3670, 1.0
    %v3682 = vadd.f32 %v3672, 1.0
    %v3683 = vadd.f32 %v3674, 1.0
    %v3684 = vadd.f32 %v3676, 1.0
    %v3685 = vrcp.pop %v3677
    %v3686 = vmul.f32 1.0, %v3685
    %v3687 = vrcp.pop %v3678
    %v3688 = vmul.f32 1.0, %v3687
    %v3689 = vrcp.pop %v3679
    %v3690 = vmul.f32 1.0, %v3689
    %v3691 = vrcp.pop %v3680
    %v3692 = vmul.f32 1.0, %v3691
    %v3693 = vrcp.pop %v3681
    %v3694 = vmul.f32 1.0, %v3693
    %v3695 = vrcp.pop %v3682
    %v3696 = vmul.f32 1.0, %v3695
    %v3697 = vrcp.pop %v3683
    %v3698 = vmul.f32 1.0, %v3697
    %v3699 = vrcp.pop %v3684
    %v3700 = vmul.f32 1.0, %v3699
    %v3701 = vmul.f32 %v3645, %v3686
    %v3702 = vmul.f32 %v3646, %v3688
    %v3703 = vmul.f32 %v3647, %v3690
    %v3704 = vmul.f32 %v3648, %v3692
    %v3705 = vmul.f32 %v3649, %v3694
    %v3706 = vmul.f32 %v3650, %v3696
    %v3707 = vmul.f32 %v3651, %v3698
    %v3708 = vmul.f32 %v3652, %v3700
    %v3709 = vld [vmem:[#allocation2 + $0x258] sm:$0xff]
    %v3710 = vld [vmem:[#allocation2 + $0x260] sm:$0xff]
    %v3711 = vld [vmem:[#allocation2 + $0x268] sm:$0xff]
    %v3712 = vld [vmem:[#allocation2 + $0x270] sm:$0xff]
    %v3714 = vsel %vm175, %v3701, 0
    %v3717 = vsel %vm175, %v3702, 0
    %v3720 = vsel %vm175, %v3703, 0
    %v3723 = vsel %vm175, %v3704, 0
    %v3726 = vsel %vm175, %v3705, 0
    %v3729 = vsel %vm175, %v3706, 0
    %v3732 = vsel %vm175, %v3707, 0
    %v3735 = vsel %vm175, %v3708, 0
    %3737 = vmatprep.subr.mxu0 0.0
    %3738 = vmatpush1.msra.mxu0 0.0
    %3739 = vmatprep.subr.mxu0 0.0
    %3740 = vmatpush1.msra.mxu0 0.0
    %3741 = vmatprep.subr.mxu0 0.0
    %3742 = vmatpush1.msra.mxu0 0.0
    %3743 = vmatprep.subr.mxu0 0.0
    %3744 = vmatpush1.msra.mxu0 0.0
    %3745 = vmatprep.subr.mxu0 0.0
    %3746 = vmatpush1.msra.mxu0 0.0
    %3747 = vmatprep.subr.mxu0 0.0
    %3748 = vmatpush1.msra.mxu0 0.0
    %3749 = vmatprep.subr.mxu0 0.0
    %3750 = vmatpush1.msra.mxu0 0.0
    %3751 = vmatprep.subr.mxu0 0.0
    %3752 = vmatpush1.msra.mxu0 0.0
    %3753 = vmatprep.subr.mxu0 0.0
    %3754 = vmatpush1.msra.mxu0 0.0
    %3755 = vmatprep.subr.mxu0 0.0
    %3756 = vmatpush1.msra.mxu0 0.0
    %3757 = vmatprep.subr.mxu0 0.0
    %3758 = vmatpush1.msra.mxu0 0.0
    %3759 = vmatprep.subr.mxu0 0.0
    %3760 = vmatpush1.msra.mxu0 0.0
    %3761 = vmatprep.subr.mxu0 0.0
    %3762 = vmatpush1.msra.mxu0 %v3712
    %3763 = vmatprep.subr.mxu0 0.0
    %3764 = vmatpush1.msra.mxu0 %v3711
    %3765 = vmatprep.subr.mxu0 0.0
    %3766 = vmatpush1.msra.mxu0 %v3710
    %3767 = vmatprep.subr.mxu0 0.0
    %3768 = vmatpush1.msra.mxu0 %v3709
    %3769 = vmatprep.subr.mxu0 0.0
    %3770 = vmatpush2.msra.mxu0 0.0
    %3771 = vmatprep.subr.mxu0 0.0
    %3772 = vmatpush2.msra.mxu0 0.0
    %3773 = vmatprep.subr.mxu0 0.0
    %3774 = vmatpush2.msra.mxu0 0.0
    %3775 = vmatprep.subr.mxu0 0.0
    %3776 = vmatpush2.msra.mxu0 0.0
    %3777 = vmatprep.subr.mxu0 0.0
    %3778 = vmatpush2.msra.mxu0 0.0
    %3779 = vmatprep.subr.mxu0 0.0
    %3780 = vmatpush2.msra.mxu0 0.0
    %3781 = vmatprep.subr.mxu0 0.0
    %3782 = vmatpush2.msra.mxu0 0.0
    %3783 = vmatprep.subr.mxu0 0.0
    %3784 = vmatpush2.msra.mxu0 0.0
    %3785 = vmatprep.subr.mxu0 0.0
    %3786 = vmatpush2.msra.mxu0 0.0
    %3787 = vmatprep.subr.mxu0 0.0
    %3788 = vmatpush2.msra.mxu0 0.0
    %3789 = vmatprep.subr.mxu0 0.0
    %3790 = vmatpush2.msra.mxu0 0.0
    %3791 = vmatprep.subr.mxu0 0.0
    %3792 = vmatpush2.msra.mxu0 0.0
    %3793 = vmatprep.subr.mxu0 0.0
    %3794 = vmatpush2.msra.mxu0 0.0
    %3795 = vmatprep.subr.mxu0 0.0
    %3796 = vmatpush2.msra.mxu0 0.0
    %3797 = vmatprep.subr.mxu0 0.0
    %3798 = vmatpush2.msra.mxu0 0.0
    %3799 = vmatprep.subr.mxu0 0.0
    %3800 = vmatpush2.msra.mxu0 0.0
    %3801 = vmatprep.mubr.f32.mxu0 0.0
    %3802 = vmatmul.mubr.f32.gmra.mxu0 %v3714
    %v3803 = vpop.f32.mrf.mxu0
    %v3804 = vadd.f32 0.0, %v3803
    %v3805 = vpop.f32.mrf.mxu0
    %3806 = vmatprep.mubr.f32.mxu0 0.0
    %3807 = vmatmul.mubr.f32.gmra.mxu0 %v3717
    %v3808 = vpop.f32.mrf.mxu0
    %v3809 = vadd.f32 0.0, %v3808
    %v3810 = vpop.f32.mrf.mxu0
    %3811 = vmatprep.mubr.f32.mxu0 0.0
    %3812 = vmatmul.mubr.f32.gmra.mxu0 %v3720
    %v3813 = vpop.f32.mrf.mxu0
    %v3814 = vadd.f32 0.0, %v3813
    %v3815 = vpop.f32.mrf.mxu0
    %3816 = vmatprep.mubr.f32.mxu0 0.0
    %3817 = vmatmul.mubr.f32.gmra.mxu0 %v3723
    %v3818 = vpop.f32.mrf.mxu0
    %v3819 = vadd.f32 0.0, %v3818
    %v3820 = vpop.f32.mrf.mxu0
    %3821 = vmatprep.mubr.f32.mxu0 0.0
    %3822 = vmatmul.mubr.f32.gmra.mxu0 %v3726
    %v3823 = vpop.f32.mrf.mxu0
    %v3824 = vadd.f32 0.0, %v3823
    %v3825 = vpop.f32.mrf.mxu0
    %3826 = vmatprep.mubr.f32.mxu0 0.0
    %3827 = vmatmul.mubr.f32.gmra.mxu0 %v3729
    %v3828 = vpop.f32.mrf.mxu0
    %v3829 = vadd.f32 0.0, %v3828
    %v3830 = vpop.f32.mrf.mxu0
    %3831 = vmatprep.mubr.f32.mxu0 0.0
    %3832 = vmatmul.mubr.f32.gmra.mxu0 %v3732
    %v3833 = vpop.f32.mrf.mxu0
    %v3834 = vadd.f32 0.0, %v3833
    %v3835 = vpop.f32.mrf.mxu0
    %3836 = vmatprep.mubr.f32.mxu0 0.0
    %3837 = vmatmul.mubr.f32.gmra.mxu0 %v3735
    %v3838 = vpop.f32.mrf.mxu0
    %v3839 = vadd.f32 0.0, %v3838
    %v3840 = vpop.f32.mrf.mxu0
    %3841 = vdwg.mxu0
    %v3842 = vld [vmem:[%s2 + $0x1c] sm:$0x1]
    %v3843 = vld [vmem:[%s2 + $0x1d] sm:$0x1]
    %v3844 = vsel %vm175, %v3804, 0.0
    %v3845 = vsel %vm175, %v3809, 0.0
    %v3846 = vadd.f32 %v3844, %v3845
    %v3847 = vsel %vm175, %v3814, 0.0
    %v3848 = vadd.f32 %v3846, %v3847
    %v3849 = vsel %vm175, %v3819, 0.0
    %v3850 = vadd.f32 %v3848, %v3849
    %v3851 = vsel %vm175, %v3824, 0.0
    %v3852 = vadd.f32 %v3850, %v3851
    %v3853 = vsel %vm175, %v3829, 0.0
    %v3854 = vadd.f32 %v3852, %v3853
    %v3855 = vsel %vm175, %v3834, 0.0
    %v3856 = vadd.f32 %v3854, %v3855
    %v3857 = vsel %vm175, %v3839, 0.0
    %v3858 = vadd.f32 %v3856, %v3857
    %v3859 = vrot.slane %v3858, 4
    %v3860 = vadd.f32 %v3858, %v3859
    %v3861 = vrot.slane %v3860, 2
    %v3862 = vadd.f32 %v3860, %v3861
    %v3863 = vrot.slane %v3862, 1
    %v3864 = vadd.f32 %v3862, %v3863
    %v3865 = vmul.f32 %v3804, %v3804
    %v3866 = vmul.f32 %v3809, %v3809
    %v3867 = vmul.f32 %v3814, %v3814
    %v3868 = vmul.f32 %v3819, %v3819
    %v3869 = vmul.f32 %v3824, %v3824
    %v3870 = vmul.f32 %v3829, %v3829
    %v3871 = vmul.f32 %v3834, %v3834
    %v3872 = vmul.f32 %v3839, %v3839
    %v3873 = vsel %vm175, %v3865, 0.0
    %v3874 = vsel %vm175, %v3866, 0.0
    %v3875 = vadd.f32 %v3873, %v3874
    %v3876 = vsel %vm175, %v3867, 0.0
    %v3877 = vadd.f32 %v3875, %v3876
    %v3878 = vsel %vm175, %v3868, 0.0
    %v3879 = vadd.f32 %v3877, %v3878
    %v3880 = vsel %vm175, %v3869, 0.0
    %v3881 = vadd.f32 %v3879, %v3880
    %v3882 = vsel %vm175, %v3870, 0.0
    %v3883 = vadd.f32 %v3881, %v3882
    %v3884 = vsel %vm175, %v3871, 0.0
    %v3885 = vadd.f32 %v3883, %v3884
    %v3886 = vsel %vm175, %v3872, 0.0
    %v3887 = vadd.f32 %v3885, %v3886
    %v3888 = vrot.slane %v3887, 4
    %v3889 = vadd.f32 %v3887, %v3888
    %v3890 = vrot.slane %v3889, 2
    %v3891 = vadd.f32 %v3889, %v3890
    %v3892 = vrot.slane %v3891, 1
    %v3893 = vadd.f32 %v3891, %v3892
    %v3894 = vmul.f32 %v3864, 0.015625
    %v3895 = vmul.f32 %v3893, 0.015625
    %v3896 = vmul.f32 %v3894, %v3894
    %v3897 = vsub.f32 %v3895, %v3896
    %v3898 = vmax.f32 %v3897, 0.0
    %v3899 = vsub.f32 %v3804, %v3894
    %v3900 = vsub.f32 %v3809, %v3894
    %v3901 = vsub.f32 %v3814, %v3894
    %v3902 = vsub.f32 %v3819, %v3894
    %v3903 = vsub.f32 %v3824, %v3894
    %v3904 = vsub.f32 %v3829, %v3894
    %v3905 = vsub.f32 %v3834, %v3894
    %v3906 = vsub.f32 %v3839, %v3894
    %v3907 = vadd.f32 %v3898, 1e-05
    %v3908 = vrsqrt.pop %v3907
    %v3909 = vmul.f32 %v3899, %v3908
    %v3910 = vmul.f32 %v3900, %v3908
    %v3911 = vmul.f32 %v3901, %v3908
    %v3912 = vmul.f32 %v3902, %v3908
    %v3913 = vmul.f32 %v3903, %v3908
    %v3914 = vmul.f32 %v3904, %v3908
    %v3915 = vmul.f32 %v3905, %v3908
    %v3916 = vmul.f32 %v3906, %v3908
    %v3917 = vlaneseq
    %v3918 = vshrl.u32 %v3917, 7
    %v3919 = vsub.s32 0, %v3918
    %v3920 = vrot.slane %v3842, %v3919
    %v3921 = vmul.f32 %v3909, %v3920
    %v3922 = vmul.f32 %v3910, %v3920
    %v3923 = vmul.f32 %v3911, %v3920
    %v3924 = vmul.f32 %v3912, %v3920
    %v3925 = vmul.f32 %v3913, %v3920
    %v3926 = vmul.f32 %v3914, %v3920
    %v3927 = vmul.f32 %v3915, %v3920
    %v3928 = vmul.f32 %v3916, %v3920
    %v3929 = vlaneseq
    %v3930 = vshrl.u32 %v3929, 7
    %v3931 = vsub.s32 0, %v3930
    %v3932 = vrot.slane %v3843, %v3931
    %v3933 = vadd.f32 %v3921, %v3932
    %v3934 = vadd.f32 %v3922, %v3932
    %v3935 = vadd.f32 %v3923, %v3932
    %v3936 = vadd.f32 %v3924, %v3932
    %v3937 = vadd.f32 %v3925, %v3932
    %v3938 = vadd.f32 %v3926, %v3932
    %v3939 = vadd.f32 %v3927, %v3932
    %v3940 = vadd.f32 %v3928, %v3932
    %v3941 = vxor.u32 %v3933, 2147483648
    %v3942 = vxor.u32 %v3934, 2147483648
    %v3943 = vxor.u32 %v3935, 2147483648
    %v3944 = vxor.u32 %v3936, 2147483648
    %v3945 = vxor.u32 %v3937, 2147483648
    %v3946 = vxor.u32 %v3938, 2147483648
    %v3947 = vxor.u32 %v3939, 2147483648
    %v3948 = vxor.u32 %v3940, 2147483648
    %v3949 = vmul.f32 %v3941, 1.442695
    %v3950 = vpow.pop %v3949
    %v3951 = vmul.f32 %v3942, 1.442695
    %v3952 = vpow.pop %v3951
    %v3953 = vmul.f32 %v3943, 1.442695
    %v3954 = vpow.pop %v3953
    %v3955 = vmul.f32 %v3944, 1.442695
    %v3956 = vpow.pop %v3955
    %v3957 = vmul.f32 %v3945, 1.442695
    %v3958 = vpow.pop %v3957
    %v3959 = vmul.f32 %v3946, 1.442695
    %v3960 = vpow.pop %v3959
    %v3961 = vmul.f32 %v3947, 1.442695
    %v3962 = vpow.pop %v3961
    %v3963 = vmul.f32 %v3948, 1.442695
    %v3964 = vpow.pop %v3963
    %v3965 = vadd.f32 %v3950, 1.0
    %v3966 = vadd.f32 %v3952, 1.0
    %v3967 = vadd.f32 %v3954, 1.0
    %v3968 = vadd.f32 %v3956, 1.0
    %v3969 = vadd.f32 %v3958, 1.0
    %v3970 = vadd.f32 %v3960, 1.0
    %v3971 = vadd.f32 %v3962, 1.0
    %v3972 = vadd.f32 %v3964, 1.0
    %v3973 = vrcp.pop %v3965
    %v3974 = vmul.f32 1.0, %v3973
    %v3975 = vrcp.pop %v3966
    %v3976 = vmul.f32 1.0, %v3975
    %v3977 = vrcp.pop %v3967
    %v3978 = vmul.f32 1.0, %v3977
    %v3979 = vrcp.pop %v3968
    %v3980 = vmul.f32 1.0, %v3979
    %v3981 = vrcp.pop %v3969
    %v3982 = vmul.f32 1.0, %v3981
    %v3983 = vrcp.pop %v3970
    %v3984 = vmul.f32 1.0, %v3983
    %v3985 = vrcp.pop %v3971
    %v3986 = vmul.f32 1.0, %v3985
    %v3987 = vrcp.pop %v3972
    %v3988 = vmul.f32 1.0, %v3987
    %v3989 = vmul.f32 %v3933, %v3974
    %v3990 = vmul.f32 %v3934, %v3976
    %v3991 = vmul.f32 %v3935, %v3978
    %v3992 = vmul.f32 %v3936, %v3980
    %v3993 = vmul.f32 %v3937, %v3982
    %v3994 = vmul.f32 %v3938, %v3984
    %v3995 = vmul.f32 %v3939, %v3986
    %v3996 = vmul.f32 %v3940, %v3988
    %v3997 = vld [vmem:[#allocation2 + $0x278] sm:$0xff]
    %v3998 = vld [vmem:[#allocation2 + $0x280] sm:$0xff]
    %v3999 = vld [vmem:[#allocation2 + $0x288] sm:$0xff]
    %v4000 = vld [vmem:[#allocation2 + $0x290] sm:$0xff]
    %v4002 = vsel %vm175, %v3989, 0
    %v4005 = vsel %vm175, %v3990, 0
    %v4008 = vsel %vm175, %v3991, 0
    %v4011 = vsel %vm175, %v3992, 0
    %v4014 = vsel %vm175, %v3993, 0
    %v4017 = vsel %vm175, %v3994, 0
    %v4020 = vsel %vm175, %v3995, 0
    %v4023 = vsel %vm175, %v3996, 0
    %4025 = vmatprep.subr.mxu0 0.0
    %4026 = vmatpush1.msra.mxu0 0.0
    %4027 = vmatprep.subr.mxu0 0.0
    %4028 = vmatpush1.msra.mxu0 0.0
    %4029 = vmatprep.subr.mxu0 0.0
    %4030 = vmatpush1.msra.mxu0 0.0
    %4031 = vmatprep.subr.mxu0 0.0
    %4032 = vmatpush1.msra.mxu0 0.0
    %4033 = vmatprep.subr.mxu0 0.0
    %4034 = vmatpush1.msra.mxu0 0.0
    %4035 = vmatprep.subr.mxu0 0.0
    %4036 = vmatpush1.msra.mxu0 0.0
    %4037 = vmatprep.subr.mxu0 0.0
    %4038 = vmatpush1.msra.mxu0 0.0
    %4039 = vmatprep.subr.mxu0 0.0
    %4040 = vmatpush1.msra.mxu0 0.0
    %4041 = vmatprep.subr.mxu0 0.0
    %4042 = vmatpush1.msra.mxu0 0.0
    %4043 = vmatprep.subr.mxu0 0.0
    %4044 = vmatpush1.msra.mxu0 0.0
    %4045 = vmatprep.subr.mxu0 0.0
    %4046 = vmatpush1.msra.mxu0 0.0
    %4047 = vmatprep.subr.mxu0 0.0
    %4048 = vmatpush1.msra.mxu0 0.0
    %4049 = vmatprep.subr.mxu0 0.0
    %4050 = vmatpush1.msra.mxu0 %v4000
    %4051 = vmatprep.subr.mxu0 0.0
    %4052 = vmatpush1.msra.mxu0 %v3999
    %4053 = vmatprep.subr.mxu0 0.0
    %4054 = vmatpush1.msra.mxu0 %v3998
    %4055 = vmatprep.subr.mxu0 0.0
    %4056 = vmatpush1.msra.mxu0 %v3997
    %4057 = vmatprep.subr.mxu0 0.0
    %4058 = vmatpush2.msra.mxu0 0.0
    %4059 = vmatprep.subr.mxu0 0.0
    %4060 = vmatpush2.msra.mxu0 0.0
    %4061 = vmatprep.subr.mxu0 0.0
    %4062 = vmatpush2.msra.mxu0 0.0
    %4063 = vmatprep.subr.mxu0 0.0
    %4064 = vmatpush2.msra.mxu0 0.0
    %4065 = vmatprep.subr.mxu0 0.0
    %4066 = vmatpush2.msra.mxu0 0.0
    %4067 = vmatprep.subr.mxu0 0.0
    %4068 = vmatpush2.msra.mxu0 0.0
    %4069 = vmatprep.subr.mxu0 0.0
    %4070 = vmatpush2.msra.mxu0 0.0
    %4071 = vmatprep.subr.mxu0 0.0
    %4072 = vmatpush2.msra.mxu0 0.0
    %4073 = vmatprep.subr.mxu0 0.0
    %4074 = vmatpush2.msra.mxu0 0.0
    %4075 = vmatprep.subr.mxu0 0.0
    %4076 = vmatpush2.msra.mxu0 0.0
    %4077 = vmatprep.subr.mxu0 0.0
    %4078 = vmatpush2.msra.mxu0 0.0
    %4079 = vmatprep.subr.mxu0 0.0
    %4080 = vmatpush2.msra.mxu0 0.0
    %4081 = vmatprep.subr.mxu0 0.0
    %4082 = vmatpush2.msra.mxu0 0.0
    %4083 = vmatprep.subr.mxu0 0.0
    %4084 = vmatpush2.msra.mxu0 0.0
    %4085 = vmatprep.subr.mxu0 0.0
    %4086 = vmatpush2.msra.mxu0 0.0
    %4087 = vmatprep.subr.mxu0 0.0
    %4088 = vmatpush2.msra.mxu0 0.0
    %4089 = vmatprep.mubr.f32.mxu0 0.0
    %4090 = vmatmul.mubr.f32.gmra.mxu0 %v4002
    %v4091 = vpop.f32.mrf.mxu0
    %v4092 = vadd.f32 0.0, %v4091
    %v4093 = vpop.f32.mrf.mxu0
    %4094 = vmatprep.mubr.f32.mxu0 0.0
    %4095 = vmatmul.mubr.f32.gmra.mxu0 %v4005
    %v4096 = vpop.f32.mrf.mxu0
    %v4097 = vadd.f32 0.0, %v4096
    %v4098 = vpop.f32.mrf.mxu0
    %4099 = vmatprep.mubr.f32.mxu0 0.0
    %4100 = vmatmul.mubr.f32.gmra.mxu0 %v4008
    %v4101 = vpop.f32.mrf.mxu0
    %v4102 = vadd.f32 0.0, %v4101
    %v4103 = vpop.f32.mrf.mxu0
    %4104 = vmatprep.mubr.f32.mxu0 0.0
    %4105 = vmatmul.mubr.f32.gmra.mxu0 %v4011
    %v4106 = vpop.f32.mrf.mxu0
    %v4107 = vadd.f32 0.0, %v4106
    %v4108 = vpop.f32.mrf.mxu0
    %4109 = vmatprep.mubr.f32.mxu0 0.0
    %4110 = vmatmul.mubr.f32.gmra.mxu0 %v4014
    %v4111 = vpop.f32.mrf.mxu0
    %v4112 = vadd.f32 0.0, %v4111
    %v4113 = vpop.f32.mrf.mxu0
    %4114 = vmatprep.mubr.f32.mxu0 0.0
    %4115 = vmatmul.mubr.f32.gmra.mxu0 %v4017
    %v4116 = vpop.f32.mrf.mxu0
    %v4117 = vadd.f32 0.0, %v4116
    %v4118 = vpop.f32.mrf.mxu0
    %4119 = vmatprep.mubr.f32.mxu0 0.0
    %4120 = vmatmul.mubr.f32.gmra.mxu0 %v4020
    %v4121 = vpop.f32.mrf.mxu0
    %v4122 = vadd.f32 0.0, %v4121
    %v4123 = vpop.f32.mrf.mxu0
    %4124 = vmatprep.mubr.f32.mxu0 0.0
    %4125 = vmatmul.mubr.f32.gmra.mxu0 %v4023
    %v4126 = vpop.f32.mrf.mxu0
    %v4127 = vadd.f32 0.0, %v4126
    %v4128 = vpop.f32.mrf.mxu0
    %4129 = vdwg.mxu0
    %v4130 = vadd.f32 %v3546, %v4092
    %v4131 = vadd.f32 %v3547, %v4097
    %v4132 = vadd.f32 %v3548, %v4102
    %v4133 = vadd.f32 %v3549, %v4107
    %v4134 = vadd.f32 %v3550, %v4112
    %v4135 = vadd.f32 %v3551, %v4117
    %v4136 = vadd.f32 %v3552, %v4122
    %v4137 = vadd.f32 %v3553, %v4127
    %v4138 = vld [vmem:[%s2 + $0x1e] sm:$0x1]
    %v4139 = vlaneseq
    %v4140 = vshrl.u32 %v4139, 7
    %v4141 = vsub.s32 0, %v4140
    %v4142 = vrot.slane %v4138, %v4141
    %v4143 = vadd.f32 %v4130, %v4142
    %v4144 = vadd.f32 %v4131, %v4142
    %v4145 = vadd.f32 %v4132, %v4142
    %v4146 = vadd.f32 %v4133, %v4142
    %v4147 = vadd.f32 %v4134, %v4142
    %v4148 = vadd.f32 %v4135, %v4142
    %v4149 = vadd.f32 %v4136, %v4142
    %v4150 = vadd.f32 %v4137, %v4142
    %v4151 = vld [vmem:[%s2 + $0x1f] sm:$0x1]
    %v4152 = vld [vmem:[%s2 + $0x20] sm:$0x1]
    %v4153 = vsel %vm175, %v4143, 0.0
    %v4154 = vsel %vm175, %v4144, 0.0
    %v4155 = vadd.f32 %v4153, %v4154
    %v4156 = vsel %vm175, %v4145, 0.0
    %v4157 = vadd.f32 %v4155, %v4156
    %v4158 = vsel %vm175, %v4146, 0.0
    %v4159 = vadd.f32 %v4157, %v4158
    %v4160 = vsel %vm175, %v4147, 0.0
    %v4161 = vadd.f32 %v4159, %v4160
    %v4162 = vsel %vm175, %v4148, 0.0
    %v4163 = vadd.f32 %v4161, %v4162
    %v4164 = vsel %vm175, %v4149, 0.0
    %v4165 = vadd.f32 %v4163, %v4164
    %v4166 = vsel %vm175, %v4150, 0.0
    %v4167 = vadd.f32 %v4165, %v4166
    %v4168 = vrot.slane %v4167, 4
    %v4169 = vadd.f32 %v4167, %v4168
    %v4170 = vrot.slane %v4169, 2
    %v4171 = vadd.f32 %v4169, %v4170
    %v4172 = vrot.slane %v4171, 1
    %v4173 = vadd.f32 %v4171, %v4172
    %v4174 = vmul.f32 %v4143, %v4143
    %v4175 = vmul.f32 %v4144, %v4144
    %v4176 = vmul.f32 %v4145, %v4145
    %v4177 = vmul.f32 %v4146, %v4146
    %v4178 = vmul.f32 %v4147, %v4147
    %v4179 = vmul.f32 %v4148, %v4148
    %v4180 = vmul.f32 %v4149, %v4149
    %v4181 = vmul.f32 %v4150, %v4150
    %v4182 = vsel %vm175, %v4174, 0.0
    %v4183 = vsel %vm175, %v4175, 0.0
    %v4184 = vadd.f32 %v4182, %v4183
    %v4185 = vsel %vm175, %v4176, 0.0
    %v4186 = vadd.f32 %v4184, %v4185
    %v4187 = vsel %vm175, %v4177, 0.0
    %v4188 = vadd.f32 %v4186, %v4187
    %v4189 = vsel %vm175, %v4178, 0.0
    %v4190 = vadd.f32 %v4188, %v4189
    %v4191 = vsel %vm175, %v4179, 0.0
    %v4192 = vadd.f32 %v4190, %v4191
    %v4193 = vsel %vm175, %v4180, 0.0
    %v4194 = vadd.f32 %v4192, %v4193
    %v4195 = vsel %vm175, %v4181, 0.0
    %v4196 = vadd.f32 %v4194, %v4195
    %v4197 = vrot.slane %v4196, 4
    %v4198 = vadd.f32 %v4196, %v4197
    %v4199 = vrot.slane %v4198, 2
    %v4200 = vadd.f32 %v4198, %v4199
    %v4201 = vrot.slane %v4200, 1
    %v4202 = vadd.f32 %v4200, %v4201
    %v4203 = vmul.f32 %v4173, 0.015625
    %v4204 = vmul.f32 %v4202, 0.015625
    %v4205 = vmul.f32 %v4203, %v4203
    %v4206 = vsub.f32 %v4204, %v4205
    %v4207 = vmax.f32 %v4206, 0.0
    %v4208 = vsub.f32 %v4143, %v4203
    %v4209 = vsub.f32 %v4144, %v4203
    %v4210 = vsub.f32 %v4145, %v4203
    %v4211 = vsub.f32 %v4146, %v4203
    %v4212 = vsub.f32 %v4147, %v4203
    %v4213 = vsub.f32 %v4148, %v4203
    %v4214 = vsub.f32 %v4149, %v4203
    %v4215 = vsub.f32 %v4150, %v4203
    %v4216 = vadd.f32 %v4207, 1e-05
    %v4217 = vrsqrt.pop %v4216
    %v4218 = vmul.f32 %v4208, %v4217
    %v4219 = vmul.f32 %v4209, %v4217
    %v4220 = vmul.f32 %v4210, %v4217
    %v4221 = vmul.f32 %v4211, %v4217
    %v4222 = vmul.f32 %v4212, %v4217
    %v4223 = vmul.f32 %v4213, %v4217
    %v4224 = vmul.f32 %v4214, %v4217
    %v4225 = vmul.f32 %v4215, %v4217
    %v4226 = vlaneseq
    %v4227 = vshrl.u32 %v4226, 7
    %v4228 = vsub.s32 0, %v4227
    %v4229 = vrot.slane %v4151, %v4228
    %v4230 = vmul.f32 %v4218, %v4229
    %v4231 = vmul.f32 %v4219, %v4229
    %v4232 = vmul.f32 %v4220, %v4229
    %v4233 = vmul.f32 %v4221, %v4229
    %v4234 = vmul.f32 %v4222, %v4229
    %v4235 = vmul.f32 %v4223, %v4229
    %v4236 = vmul.f32 %v4224, %v4229
    %v4237 = vmul.f32 %v4225, %v4229
    %v4238 = vlaneseq
    %v4239 = vshrl.u32 %v4238, 7
    %v4240 = vsub.s32 0, %v4239
    %v4241 = vrot.slane %v4152, %v4240
    %v4242 = vadd.f32 %v4230, %v4241
    %v4243 = vadd.f32 %v4231, %v4241
    %v4244 = vadd.f32 %v4232, %v4241
    %v4245 = vadd.f32 %v4233, %v4241
    %v4246 = vadd.f32 %v4234, %v4241
    %v4247 = vadd.f32 %v4235, %v4241
    %v4248 = vadd.f32 %v4236, %v4241
    %v4249 = vadd.f32 %v4237, %v4241
    %v4250 = vxor.u32 %v4242, 2147483648
    %v4251 = vxor.u32 %v4243, 2147483648
    %v4252 = vxor.u32 %v4244, 2147483648
    %v4253 = vxor.u32 %v4245, 2147483648
    %v4254 = vxor.u32 %v4246, 2147483648
    %v4255 = vxor.u32 %v4247, 2147483648
    %v4256 = vxor.u32 %v4248, 2147483648
    %v4257 = vxor.u32 %v4249, 2147483648
    %v4258 = vmul.f32 %v4250, 1.442695
    %v4259 = vpow.pop %v4258
    %v4260 = vmul.f32 %v4251, 1.442695
    %v4261 = vpow.pop %v4260
    %v4262 = vmul.f32 %v4252, 1.442695
    %v4263 = vpow.pop %v4262
    %v4264 = vmul.f32 %v4253, 1.442695
    %v4265 = vpow.pop %v4264
    %v4266 = vmul.f32 %v4254, 1.442695
    %v4267 = vpow.pop %v4266
    %v4268 = vmul.f32 %v4255, 1.442695
    %v4269 = vpow.pop %v4268
    %v4270 = vmul.f32 %v4256, 1.442695
    %v4271 = vpow.pop %v4270
    %v4272 = vmul.f32 %v4257, 1.442695
    %v4273 = vpow.pop %v4272
    %v4274 = vadd.f32 %v4259, 1.0
    %v4275 = vadd.f32 %v4261, 1.0
    %v4276 = vadd.f32 %v4263, 1.0
    %v4277 = vadd.f32 %v4265, 1.0
    %v4278 = vadd.f32 %v4267, 1.0
    %v4279 = vadd.f32 %v4269, 1.0
    %v4280 = vadd.f32 %v4271, 1.0
    %v4281 = vadd.f32 %v4273, 1.0
    %v4282 = vrcp.pop %v4274
    %v4283 = vmul.f32 1.0, %v4282
    %v4284 = vrcp.pop %v4275
    %v4285 = vmul.f32 1.0, %v4284
    %v4286 = vrcp.pop %v4276
    %v4287 = vmul.f32 1.0, %v4286
    %v4288 = vrcp.pop %v4277
    %v4289 = vmul.f32 1.0, %v4288
    %v4290 = vrcp.pop %v4278
    %v4291 = vmul.f32 1.0, %v4290
    %v4292 = vrcp.pop %v4279
    %v4293 = vmul.f32 1.0, %v4292
    %v4294 = vrcp.pop %v4280
    %v4295 = vmul.f32 1.0, %v4294
    %v4296 = vrcp.pop %v4281
    %v4297 = vmul.f32 1.0, %v4296
    %v4298 = vmul.f32 %v4242, %v4283
    %v4299 = vmul.f32 %v4243, %v4285
    %v4300 = vmul.f32 %v4244, %v4287
    %v4301 = vmul.f32 %v4245, %v4289
    %v4302 = vmul.f32 %v4246, %v4291
    %v4303 = vmul.f32 %v4247, %v4293
    %v4304 = vmul.f32 %v4248, %v4295
    %v4305 = vmul.f32 %v4249, %v4297
    %v4306 = vld [vmem:[#allocation2 + $0x298] sm:$0xff]
    %v4307 = vld [vmem:[#allocation2 + $0x2a0] sm:$0xff]
    %v4308 = vld [vmem:[#allocation2 + $0x2a8] sm:$0xff]
    %v4309 = vld [vmem:[#allocation2 + $0x2b0] sm:$0xff]
    %v4310 = vld [vmem:[%s2 + $0x21] sm:$0x1]
    %v4311 = vlaneseq
    %v4312 = vshrl.u32 %v4311, 7
    %v4313 = vsub.s32 0, %v4312
    %v4314 = vrot.slane %v4310, %v4313
    %v4316 = vsel %vm175, %v4298, 0
    %v4319 = vsel %vm175, %v4299, 0
    %v4322 = vsel %vm175, %v4300, 0
    %v4325 = vsel %vm175, %v4301, 0
    %v4328 = vsel %vm175, %v4302, 0
    %v4331 = vsel %vm175, %v4303, 0
    %v4334 = vsel %vm175, %v4304, 0
    %v4337 = vsel %vm175, %v4305, 0
    %4339 = vmatprep.subr.mxu0 0.0
    %4340 = vmatpush1.msra.mxu0 0.0
    %4341 = vmatprep.subr.mxu0 0.0
    %4342 = vmatpush1.msra.mxu0 0.0
    %4343 = vmatprep.subr.mxu0 0.0
    %4344 = vmatpush1.msra.mxu0 0.0
    %4345 = vmatprep.subr.mxu0 0.0
    %4346 = vmatpush1.msra.mxu0 0.0
    %4347 = vmatprep.subr.mxu0 0.0
    %4348 = vmatpush1.msra.mxu0 0.0
    %4349 = vmatprep.subr.mxu0 0.0
    %4350 = vmatpush1.msra.mxu0 0.0
    %4351 = vmatprep.subr.mxu0 0.0
    %4352 = vmatpush1.msra.mxu0 0.0
    %4353 = vmatprep.subr.mxu0 0.0
    %4354 = vmatpush1.msra.mxu0 0.0
    %4355 = vmatprep.subr.mxu0 0.0
    %4356 = vmatpush1.msra.mxu0 0.0
    %4357 = vmatprep.subr.mxu0 0.0
    %4358 = vmatpush1.msra.mxu0 0.0
    %4359 = vmatprep.subr.mxu0 0.0
    %4360 = vmatpush1.msra.mxu0 0.0
    %4361 = vmatprep.subr.mxu0 0.0
    %4362 = vmatpush1.msra.mxu0 0.0
    %4363 = vmatprep.subr.mxu0 0.0
    %4364 = vmatpush1.msra.mxu0 %v4309
    %4365 = vmatprep.subr.mxu0 0.0
    %4366 = vmatpush1.msra.mxu0 %v4308
    %4367 = vmatprep.subr.mxu0 0.0
    %4368 = vmatpush1.msra.mxu0 %v4307
    %4369 = vmatprep.subr.mxu0 0.0
    %4370 = vmatpush1.msra.mxu0 %v4306
    %4371 = vmatprep.subr.mxu0 0.0
    %4372 = vmatpush2.msra.mxu0 0.0
    %4373 = vmatprep.subr.mxu0 0.0
    %4374 = vmatpush2.msra.mxu0 0.0
    %4375 = vmatprep.subr.mxu0 0.0
    %4376 = vmatpush2.msra.mxu0 0.0
    %4377 = vmatprep.subr.mxu0 0.0
    %4378 = vmatpush2.msra.mxu0 0.0
    %4379 = vmatprep.subr.mxu0 0.0
    %4380 = vmatpush2.msra.mxu0 0.0
    %4381 = vmatprep.subr.mxu0 0.0
    %4382 = vmatpush2.msra.mxu0 0.0
    %4383 = vmatprep.subr.mxu0 0.0
    %4384 = vmatpush2.msra.mxu0 0.0
    %4385 = vmatprep.subr.mxu0 0.0
    %4386 = vmatpush2.msra.mxu0 0.0
    %4387 = vmatprep.subr.mxu0 0.0
    %4388 = vmatpush2.msra.mxu0 0.0
    %4389 = vmatprep.subr.mxu0 0.0
    %4390 = vmatpush2.msra.mxu0 0.0
    %4391 = vmatprep.subr.mxu0 0.0
    %4392 = vmatpush2.msra.mxu0 0.0
    %4393 = vmatprep.subr.mxu0 0.0
    %4394 = vmatpush2.msra.mxu0 0.0
    %4395 = vmatprep.subr.mxu0 0.0
    %4396 = vmatpush2.msra.mxu0 0.0
    %4397 = vmatprep.subr.mxu0 0.0
    %4398 = vmatpush2.msra.mxu0 0.0
    %4399 = vmatprep.subr.mxu0 0.0
    %4400 = vmatpush2.msra.mxu0 0.0
    %4401 = vmatprep.subr.mxu0 0.0
    %4402 = vmatpush2.msra.mxu0 0.0
    %4403 = vmatprep.mubr.f32.mxu0 0.0
    %4404 = vmatmul.mubr.f32.gmra.mxu0 %v4316
    %v4405 = vpop.f32.mrf.mxu0
    %v4406 = vadd.f32 %v4314, %v4405
    %v4407 = vpop.f32.mrf.mxu0
    %4408 = vmatprep.mubr.f32.mxu0 0.0
    %4409 = vmatmul.mubr.f32.gmra.mxu0 %v4319
    %v4410 = vpop.f32.mrf.mxu0
    %v4411 = vadd.f32 %v4314, %v4410
    %v4412 = vpop.f32.mrf.mxu0
    %4413 = vmatprep.mubr.f32.mxu0 0.0
    %4414 = vmatmul.mubr.f32.gmra.mxu0 %v4322
    %v4415 = vpop.f32.mrf.mxu0
    %v4416 = vadd.f32 %v4314, %v4415
    %v4417 = vpop.f32.mrf.mxu0
    %4418 = vmatprep.mubr.f32.mxu0 0.0
    %4419 = vmatmul.mubr.f32.gmra.mxu0 %v4325
    %v4420 = vpop.f32.mrf.mxu0
    %v4421 = vadd.f32 %v4314, %v4420
    %v4422 = vpop.f32.mrf.mxu0
    %4423 = vmatprep.mubr.f32.mxu0 0.0
    %4424 = vmatmul.mubr.f32.gmra.mxu0 %v4328
    %v4425 = vpop.f32.mrf.mxu0
    %v4426 = vadd.f32 %v4314, %v4425
    %v4427 = vpop.f32.mrf.mxu0
    %4428 = vmatprep.mubr.f32.mxu0 0.0
    %4429 = vmatmul.mubr.f32.gmra.mxu0 %v4331
    %v4430 = vpop.f32.mrf.mxu0
    %v4431 = vadd.f32 %v4314, %v4430
    %v4432 = vpop.f32.mrf.mxu0
    %4433 = vmatprep.mubr.f32.mxu0 0.0
    %4434 = vmatmul.mubr.f32.gmra.mxu0 %v4334
    %v4435 = vpop.f32.mrf.mxu0
    %v4436 = vadd.f32 %v4314, %v4435
    %v4437 = vpop.f32.mrf.mxu0
    %4438 = vmatprep.mubr.f32.mxu0 0.0
    %4439 = vmatmul.mubr.f32.gmra.mxu0 %v4337
    %v4440 = vpop.f32.mrf.mxu0
    %v4441 = vadd.f32 %v4314, %v4440
    %v4442 = vpop.f32.mrf.mxu0
    %4443 = vdwg.mxu0
    %4444 = vst.msk [vmem:[%s3] sm:$0xff] %vm43, %v4406
    %4445 = vst.msk [vmem:[%s3 + $0x8] sm:$0xff] %vm43, %v4411
    %4446 = vst.msk [vmem:[%s3 + $0x10] sm:$0xff] %vm43, %v4416
    %4447 = vst.msk [vmem:[%s3 + $0x18] sm:$0xff] %vm43, %v4421
    %4448 = vst.msk [vmem:[%s3 + $0x20] sm:$0xff] %vm43, %v4426
    %4449 = vst.msk [vmem:[%s3 + $0x28] sm:$0xff] %vm43, %v4431
    %4450 = vst.msk [vmem:[%s3 + $0x30] sm:$0xff] %vm43, %v4436
    %4451 = vst.msk [vmem:[%s3 + $0x38] sm:$0xff] %vm43, %v4441
    // Predicated region
    $region18: #{tpu_custom_call.1} parent=1 // pred_check
      _
    $region19: #{tpu_custom_call.1} parent=1 // pred_check_branch
      %4453 = sbr.rel (0) target = $region21
    $region20: #{tpu_custom_call.1} parent=1 // pred_region
      _
    $region21: #{tpu_custom_call.1} parent=1 // pred_fallthru
      _
    // Predicated region
    $region22: #{tpu_custom_call.1} parent=1 // pred_check
      _
    $region23: #{tpu_custom_call.1} parent=1 // pred_check_branch
      %4455 = sbr.rel (0) target = $region25
    $region24: #{tpu_custom_call.1} parent=1 // pred_region
      _
    $region25: #{tpu_custom_call.1} parent=1 // pred_fallthru
      _
    %4456 = vsyncpa [#allocation3], 1

</llo_original>
